<compile_context>
chip_gen: v6e
topology: v6e:2x2x1
jax: 0.10.0
libtpu: 0.0.40
codegen_flags: <defaults>
</compile_context>

<pallas_src>
import functools

import jax
import jax.numpy as jnp
from jax.experimental import pallas as pl
from jax.experimental.pallas import tpu as pltpu

ALPHA = 2.0
BETA = 0.5


def _addmm_kernel_f32(bias_ref, a_ref, b_ref, o_ref, *, alpha, beta):
    """f32 output: accumulate directly into the resident output tile."""
    k = pl.program_id(2)

    @pl.when(k == 0)
    def _init():
        o_ref[...] = jnp.zeros_like(o_ref)

    # Pure MXU work inside the K loop; alpha/beta epilogue deferred to finalize.
    o_ref[...] += jnp.dot(
        a_ref[...], b_ref[...], preferred_element_type=jnp.float32
    )

    @pl.when(k == pl.num_programs(2) - 1)
    def _finalize():
        o_ref[...] = beta * bias_ref[...] + alpha * o_ref[...]


def _addmm_kernel_acc(bias_ref, a_ref, b_ref, o_ref, acc_ref, *, alpha, beta):
    """Sub-f32 output: keep an f32 VMEM accumulator, cast once at the end."""
    k = pl.program_id(2)

    @pl.when(k == 0)
    def _init():
        acc_ref[...] = jnp.zeros_like(acc_ref)

    acc_ref[...] += jnp.dot(
        a_ref[...], b_ref[...], preferred_element_type=jnp.float32
    )

    @pl.when(k == pl.num_programs(2) - 1)
    def _finalize():
        o_ref[...] = (
            beta * bias_ref[...].astype(jnp.float32) + alpha * acc_ref[...]
        ).astype(o_ref.dtype)


def _pick_tile(n, candidates, min_blocks=1):
    """Largest candidate that divides n and leaves at least min_blocks blocks.

    n is always a multiple of 128 (wrapper pads), so 128 is a guaranteed hit
    whenever min_blocks <= n // 128.
    """
    for c in candidates:
        if n % c == 0 and n // c >= min_blocks:
            return c
    return 128


def addmm(x, alpha=ALPHA, beta=BETA):
    """out = beta * x + alpha * (x @ x)   (torch.addmm(x, x, x, alpha, beta))."""
    n, m = x.shape
    assert n == m, "addmm(x, x, x) requires a square matrix"

    # Pad up to a multiple of 128 so tiles stay MXU/lane-native for any n.
    # Zero padding is exact for addmm; the result is sliced back below.
    pad = (-n) % 128
    pn = n + pad
    x_p = jnp.pad(x, ((0, pad), (0, pad))) if pad else x

    # Output tiles: prefer 512/384-class for bandwidth (128 FLOP/byte at 512),
    # but keep >= 2 blocks per output axis once padded n >= 512 so the i/j
    # "parallel" axes can be sharded across v7x's two TensorCores.
    min_blocks = 2 if pn >= 512 else 1
    tm = _pick_tile(pn, (512, 384, 256, 128), min_blocks)
    tn = _pick_tile(pn, (512, 384, 256, 128), min_blocks)
    # Reduction tile: as close to full-K as fits; fewer k steps = fewer
    # grid-iteration overheads and bias/output revisits.
    tk = _pick_tile(pn, (1024, 768, 512, 384, 256, 128), 1)

    grid = (pn // tm, pn // tn, pn // tk)

    is_f32 = x.dtype == jnp.float32
    if is_f32:
        kernel = functools.partial(_addmm_kernel_f32, alpha=alpha, beta=beta)
        scratch_shapes = []
    else:
        kernel = functools.partial(_addmm_kernel_acc, alpha=alpha, beta=beta)
        scratch_shapes = [pltpu.VMEM((tm, tn), jnp.float32)]

    out = pl.pallas_call(
        kernel,
        out_shape=jax.ShapeDtypeStruct((pn, pn), x.dtype),
        grid=grid,
        in_specs=[
            # bias tile (i, j): k-invariant index_map -> not re-fetched over K
            pl.BlockSpec((tm, tn), lambda i, j, k: (i, j)),
            # LHS tile (i, k)
            pl.BlockSpec((tm, tk), lambda i, j, k: (i, k)),
            # RHS tile (k, j)
            pl.BlockSpec((tk, tn), lambda i, j, k: (k, j)),
        ],
        out_specs=pl.BlockSpec((tm, tn), lambda i, j, k: (i, j)),
        scratch_shapes=scratch_shapes,
        compiler_params=pltpu.CompilerParams(
            # i, j independent (megacore-shardable on v7x); k is the reduction.
            dimension_semantics=("parallel", "parallel", "arbitrary"),
            # <= ~48 MiB: safe on v7x (64 MiB physical), ample headroom on
            # v5e/v6e (128 MiB).  Largest tiling here uses ~13 MiB.
            vmem_limit_bytes=48 * 1024 * 1024,
        ),
    )(x_p, x_p, x_p)

    if pad:
        out = out[:n, :n]
    return out


if __name__ == "__main__":
    key = jax.random.PRNGKey(0)
    # 768x768: picks tm=tn=384, tk=768 -> grid (2, 2, 1) = 4 steps, exercising
    # the init / accumulate / finalize path and the 2-block parallel i/j axes.
    n = 768
    x = jax.random.normal(key, (n, n), dtype=jnp.float32)

    out = jax.block_until_ready(addmm(x))

    # Reference check in plain JAX.
    ref = BETA * x + ALPHA * jnp.dot(x, x, preferred_element_type=jnp.float32)
    assert out.shape == ref.shape
    assert jnp.allclose(out, ref, atol=2e-3, rtol=2e-3), "mismatch vs reference"

    print("KERNEL_OK")
</pallas_src>

<mosaic_0001>
module attributes {stable_mosaic.version = 11 : i64} {
  func.func @_addmm_kernel_f32(%arg0: i32, %arg1: i32, %arg2: i32, %arg3: memref<384x384xf32, #tpu.memory_space<vmem>>, %arg4: memref<384x768xf32, #tpu.memory_space<vmem>>, %arg5: memref<768x384xf32, #tpu.memory_space<vmem>>, %arg6: memref<384x384xf32, #tpu.memory_space<vmem>>) attributes {dimension_semantics = [#tpu.dimension_semantics<parallel>, #tpu.dimension_semantics<parallel>, #tpu.dimension_semantics<arbitrary>], iteration_bounds = array<i64: 2, 2, 1>, scalar_prefetch = 0 : i64, scratch_operands = 0 : i64, tpu.core_type = #tpu.core_type<tc>, window_params = [{transform_indices = @transform_0, window_bounds = array<i64: 384, 384>}, {transform_indices = @transform_1, window_bounds = array<i64: 384, 768>}, {transform_indices = @transform_2, window_bounds = array<i64: 768, 384>}, {transform_indices = @transform_3, window_bounds = array<i64: 384, 384>}]} {
    %c0_i32 = arith.constant 0 : i32
    %0 = arith.cmpi eq, %arg2, %c0_i32 : i32
    %1 = arith.extui %0 : i1 to i32
    %c0_i32_0 = arith.constant 0 : i32
    %2 = arith.cmpi ne, %1, %c0_i32_0 : i32
    scf.if %2 {
      %cst_10 = arith.constant 0.000000e+00 : f32
      %12 = vector.broadcast %cst_10 : f32 to vector<384x384xf32>
      %c0_11 = arith.constant 0 : index
      %c0_12 = arith.constant 0 : index
      %13 = vector.load %arg6[%c0_11, %c0_12] : memref<384x384xf32, #tpu.memory_space<vmem>>, vector<384x384xf32>
      tpu.vector_store %arg6[%c0_11, %c0_12], %12 {strides = array<i32>} : memref<384x384xf32, #tpu.memory_space<vmem>>, vector<384x384xf32>,
    } else {
    }
    %c0 = arith.constant 0 : index
    %c0_1 = arith.constant 0 : index
    %3 = vector.load %arg6[%c0, %c0_1] : memref<384x384xf32, #tpu.memory_space<vmem>>, vector<384x384xf32>
    %c0_2 = arith.constant 0 : index
    %c0_3 = arith.constant 0 : index
    %4 = vector.load %arg4[%c0_2, %c0_3] : memref<384x768xf32, #tpu.memory_space<vmem>>, vector<384x768xf32>
    %c0_4 = arith.constant 0 : index
    %c0_5 = arith.constant 0 : index
    %5 = vector.load %arg5[%c0_4, %c0_5] : memref<768x384xf32, #tpu.memory_space<vmem>>, vector<768x384xf32>
    %cst = arith.constant dense<0.000000e+00> : vector<384x384xf32>
    %6 = tpu.matmul %4, %5, %cst {dimension_numbers = #tpu.dot_dimension_numbers<[1], [0], [0], [1], [0, 0, 1, 1], [], []>} : vector<384x768xf32>, vector<768x384xf32>, vector<384x384xf32> -> vector<384x384xf32>
    %7 = arith.addf %3, %6 : vector<384x384xf32>
    %c0_6 = arith.constant 0 : index
    %c0_7 = arith.constant 0 : index
    %8 = vector.load %arg6[%c0_6, %c0_7] : memref<384x384xf32, #tpu.memory_space<vmem>>, vector<384x384xf32>
    tpu.vector_store %arg6[%c0_6, %c0_7], %7 {strides = array<i32>} : memref<384x384xf32, #tpu.memory_space<vmem>>, vector<384x384xf32>,
    %c0_i32_8 = arith.constant 0 : i32
    %9 = arith.cmpi eq, %arg2, %c0_i32_8 : i32
    %10 = arith.extui %9 : i1 to i32
    %c0_i32_9 = arith.constant 0 : i32
    %11 = arith.cmpi ne, %10, %c0_i32_9 : i32
    scf.if %11 {
      %c0_10 = arith.constant 0 : index
      %c0_11 = arith.constant 0 : index
      %12 = vector.load %arg3[%c0_10, %c0_11] : memref<384x384xf32, #tpu.memory_space<vmem>>, vector<384x384xf32>
      %cst_12 = arith.constant 5.000000e-01 : f32
      %13 = vector.broadcast %cst_12 : f32 to vector<384x384xf32>
      %14 = arith.mulf %13, %12 : vector<384x384xf32>
      %c0_13 = arith.constant 0 : index
      %c0_14 = arith.constant 0 : index
      %15 = vector.load %arg6[%c0_13, %c0_14] : memref<384x384xf32, #tpu.memory_space<vmem>>, vector<384x384xf32>
      %cst_15 = arith.constant 2.000000e+00 : f32
      %16 = vector.broadcast %cst_15 : f32 to vector<384x384xf32>
      %17 = arith.mulf %16, %15 : vector<384x384xf32>
      %18 = arith.addf %14, %17 : vector<384x384xf32>
      %c0_16 = arith.constant 0 : index
      %c0_17 = arith.constant 0 : index
      %19 = vector.load %arg6[%c0_16, %c0_17] : memref<384x384xf32, #tpu.memory_space<vmem>>, vector<384x384xf32>
      tpu.vector_store %arg6[%c0_16, %c0_17], %18 {strides = array<i32>} : memref<384x384xf32, #tpu.memory_space<vmem>>, vector<384x384xf32>,
    } else {
    }
    return
  }
  func.func @transform_0(%arg0: i32, %arg1: i32, %arg2: i32) -> (i32, i32) {
    %c0_i32 = arith.constant 0 : i32
    return %arg0, %arg1 : i32, i32
  }
  func.func @transform_1(%arg0: i32, %arg1: i32, %arg2: i32) -> (i32, i32) {
    %c0_i32 = arith.constant 0 : i32
    return %arg0, %arg2 : i32, i32
  }
  func.func @transform_2(%arg0: i32, %arg1: i32, %arg2: i32) -> (i32, i32) {
    %c0_i32 = arith.constant 0 : i32
    return %arg2, %arg1 : i32, i32
  }
  func.func @transform_3(%arg0: i32, %arg1: i32, %arg2: i32) -> (i32, i32) {
    %c0_i32 = arith.constant 0 : i32
    return %arg0, %arg1 : i32, i32
  }
}

</mosaic_0001>

<llo_original>
// kernel: tpu_custom_call.1
$region0: #{tpu_custom_call.1}
  #allocation0 [shape = 'u32[]', space=smem, size = 0x4, offset = 0x4, fixed_abs, tag = 'smem constant byte address 0x4 - core index']
  #allocation1 [shape = 'u32[144,128]{1,0:T(1,128)}', space=vmem, size = 0x12000, scoped, tag = 'internal scratch']
  %s0 = inlined_call_operand.hbm [shape: f32[768,768], index: 0, kind: input, shape index: {}]
  %s1 = inlined_call_operand.hbm [shape: f32[768,768], index: 1, kind: input, shape index: {}]
  %s2 = inlined_call_operand.hbm [shape: f32[768,768], index: 2, kind: input, shape index: {}]
  %s3 = inlined_call_operand.hbm [shape: f32[768,768], index: 3, kind: output, shape index: {}]
  %s4 = sld [smem:[#allocation0]]
  $region65: #{tpu_custom_call.1} parent=0
    _
  %s6 = ssub.s32 1, %s4
  %s7 = scalar_select 0, %s6, %s4
  $region1: #{tpu_custom_call.1} parent=0
    #allocation2 [shape = 'u8[1179648]{0}', space=vmem, size = 0x120000, scoped, tag = 'input window, operand 0']
    #allocation3 [shape = 's32[2]{0}', space=sflag, size = 0x8, scoped, tag = 'scoped memory for tpu_custom_call.1']
    #allocation4 [shape = 's32[2]{0}', space=sflag, size = 0x8, scoped, tag = 'scoped memory for tpu_custom_call.1']
    #allocation5 [shape = 'u8[2359296]{0}', space=vmem, size = 0x240000, scoped, tag = 'input window, operand 1']
    #allocation6 [shape = 's32[2]{0}', space=sflag, size = 0x8, scoped, tag = 'scoped memory for tpu_custom_call.1']
    #allocation7 [shape = 'u8[2359296]{0}', space=vmem, size = 0x240000, scoped, tag = 'input window, operand 2']
    #allocation8 [shape = 'u8[1179648]{0}', space=vmem, size = 0x120000, scoped, tag = 'output window, operand 0']
    %8 = vsyncpa [#allocation3], 0
    %s9 = scalar_lea.sflag [#allocation3], 1
    %10 = vsyncpa %s9, 0
    %11 = vsyncpa [#allocation6], 0
    %s12 = scalar_lea.sflag [#allocation6], 1
    %13 = vsyncpa %s12, 0
    %14 = vsyncpa [#allocation4], 0
    %s15 = scalar_lea.sflag [#allocation4], 1
    %16 = vsyncpa %s15, 0
    loop: start=0, step=1, limit=6
    $region2: #{tpu_custom_call.1} parent=1 // loop_pre_header
      _
    $region3: #{tpu_custom_call.1} parent=1 // loop_header
      %s18 = sphi 0, %s22
      %p19 = scmp.ge.s32.totalorder %s18, 6
      %s25 = sphi 0, %s44
      %s26 = sphi 0, %s40
      %s27 = sphi 0, %s36
      %s28 = sphi 0, %s25
      %s29 = sphi 0, %s26
      %s30 = sphi 0, %s27
      %s31 = sphi 0, %s28
      %s32 = sphi 0, %s29
      %s33 = sphi 0, %s30
      %s49 = sphi 0, %s51
      %s52 = sphi 0, %s49
      %s53 = sphi 0, %s52
      %s69 = sphi 0, %s53
      %s77 = sphi 0, %s79
      %s80 = sphi 0, %s77
      %s81 = sphi 0, %s80
      %s97 = sphi 0, %s81
      %s105 = sphi 0, %s107
      %s108 = sphi 0, %s105
      %s109 = sphi 0, %s108
      %s125 = sphi 0, %s109
      %s133 = sphi 0, %s135
      %s136 = sphi 0, %s133
      %s137 = sphi 0, %s136
      %s153 = sphi 0, %s137
    $region4: #{tpu_custom_call.1} parent=1 // loop_header_branch
      %21 = sbr.rel (%p19) target = $region8
    $region5: #{tpu_custom_call.1} parent=1 // loop_body
      %s23 = ssub.s32 %s18, 1
      %s24 = ssub.s32 %s18, 2
      %s34 = sadd.s32 1, %s27
      %p35 = scmp.ge.s32.totalorder %s34, 1
      %s36 = scalar_select %p35, 0, %s34
      %s37 = sadd.s32 1, %s26
      %s38 = scalar_select %p35, %s37, %s26
      %p39 = scmp.ge.s32.totalorder %s38, 2
      %s40 = scalar_select %p39, 0, %s38
      %s41 = sadd.s32 1, %s25
      %s42 = scalar_select %p39, %s41, %s25
      %p43 = scmp.ge.s32.totalorder %s42, 2
      %s44 = scalar_select %p43, 0, %s42
      %s45 = ssub.s32 %s25, %s44
      %s46 = ssub.s32 %s26, %s40
      %s47 = sor.u32 %s45, %s46
      %p48 = scmp.eq.s32.totalorder %s47, 0
      %s50 = sadd.s32 %s49, 1
      %s51 = scalar_select %p48, %s49, %s50
      %p54 = pneg %p48
      %p55 = scmp.eq.s32.totalorder %s18, 3
      %p56 = por %p54, %p55
      %p57 = scmp.ne.s32.totalorder %s49, %s52
      %p58 = scmp.eq.s32.totalorder %s18, 0
      %p59 = por %p57, %p58
      %p60 = scmp.ne.s32.totalorder %s49, %s52
      %p61 = scmp.eq.s32.totalorder %s23, 3
      %p62 = por %p60, %p61
      %p63 = scmp.ne.s32.totalorder %s52, %s53
      %p64 = scmp.eq.s32.totalorder %s23, 0
      %p65 = por %p63, %p64
      %p66 = scmp.ne.s32.totalorder %s52, %s53
      %p67 = scmp.eq.s32.totalorder %s24, 3
      %p68 = por %p66, %p67
      %p70 = scmp.ne.s32.totalorder %s53, %s69
      %p71 = scmp.eq.s32.totalorder %s24, 0
      %p72 = por %p70, %p71
      %s73 = ssub.s32 %s25, %s44
      %s74 = ssub.s32 %s27, %s36
      %s75 = sor.u32 %s73, %s74
      %p76 = scmp.eq.s32.totalorder %s75, 0
      %s78 = sadd.s32 %s77, 1
      %s79 = scalar_select %p76, %s77, %s78
      %p82 = pneg %p76
      %p83 = scmp.eq.s32.totalorder %s18, 3
      %p84 = por %p82, %p83
      %p85 = scmp.ne.s32.totalorder %s77, %s80
      %p86 = scmp.eq.s32.totalorder %s18, 0
      %p87 = por %p85, %p86
      %p88 = scmp.ne.s32.totalorder %s77, %s80
      %p89 = scmp.eq.s32.totalorder %s23, 3
      %p90 = por %p88, %p89
      %p91 = scmp.ne.s32.totalorder %s80, %s81
      %p92 = scmp.eq.s32.totalorder %s23, 0
      %p93 = por %p91, %p92
      %p94 = scmp.ne.s32.totalorder %s80, %s81
      %p95 = scmp.eq.s32.totalorder %s24, 3
      %p96 = por %p94, %p95
      %p98 = scmp.ne.s32.totalorder %s81, %s97
      %p99 = scmp.eq.s32.totalorder %s24, 0
      %p100 = por %p98, %p99
      %s101 = ssub.s32 %s27, %s36
      %s102 = ssub.s32 %s26, %s40
      %s103 = sor.u32 %s101, %s102
      %p104 = scmp.eq.s32.totalorder %s103, 0
      %s106 = sadd.s32 %s105, 1
      %s107 = scalar_select %p104, %s105, %s106
      %p110 = pneg %p104
      %p111 = scmp.eq.s32.totalorder %s18, 3
      %p112 = por %p110, %p111
      %p113 = scmp.ne.s32.totalorder %s105, %s108
      %p114 = scmp.eq.s32.totalorder %s18, 0
      %p115 = por %p113, %p114
      %p116 = scmp.ne.s32.totalorder %s105, %s108
      %p117 = scmp.eq.s32.totalorder %s23, 3
      %p118 = por %p116, %p117
      %p119 = scmp.ne.s32.totalorder %s108, %s109
      %p120 = scmp.eq.s32.totalorder %s23, 0
      %p121 = por %p119, %p120
      %p122 = scmp.ne.s32.totalorder %s108, %s109
      %p123 = scmp.eq.s32.totalorder %s24, 3
      %p124 = por %p122, %p123
      %p126 = scmp.ne.s32.totalorder %s109, %s125
      %p127 = scmp.eq.s32.totalorder %s24, 0
      %p128 = por %p126, %p127
      %s129 = ssub.s32 %s25, %s44
      %s130 = ssub.s32 %s26, %s40
      %s131 = sor.u32 %s129, %s130
      %p132 = scmp.eq.s32.totalorder %s131, 0
      %s134 = sadd.s32 %s133, 1
      %s135 = scalar_select %p132, %s133, %s134
      %p138 = pneg %p132
      %p139 = scmp.eq.s32.totalorder %s18, 3
      %p140 = por %p138, %p139
      %p141 = scmp.ne.s32.totalorder %s133, %s136
      %p142 = scmp.eq.s32.totalorder %s18, 0
      %p143 = por %p141, %p142
      %p144 = scmp.ne.s32.totalorder %s133, %s136
      %p145 = scmp.eq.s32.totalorder %s23, 3
      %p146 = por %p144, %p145
      %p147 = scmp.ne.s32.totalorder %s136, %s137
      %p148 = scmp.eq.s32.totalorder %s23, 0
      %p149 = por %p147, %p148
      %p150 = scmp.ne.s32.totalorder %s136, %s137
      %p151 = scmp.eq.s32.totalorder %s24, 3
      %p152 = por %p150, %p151
      %p154 = scmp.ne.s32.totalorder %s137, %s153
      %p155 = scmp.eq.s32.totalorder %s24, 0
      %p156 = por %p154, %p155
      %p157 = scmp.le.s32.totalorder 1, %s18
      %p158 = scmp.lt.s32.totalorder %s18, 5
      %p159 = pnand %p157, %p158
      %p160 = pneg %p159
      // Predicated region
      $region9: #{tpu_custom_call.1} parent=5 // pred_check
        _
      $region10: #{tpu_custom_call.1} parent=5 // pred_check_branch
        %162 = sbr.rel (%p159) target = $region12
      $region11: #{tpu_custom_call.1} parent=5 // pred_region
        %s163 = ssub.s32 %s18, 1
      $region12: #{tpu_custom_call.1} parent=5 // pred_fallthru
        _
      %p164 = scmp.lt.s32.totalorder %s18, 4
      // Predicated region
      $region13: #{tpu_custom_call.1} parent=5 // pred_check
        %p165 = pneg %p164
      $region14: #{tpu_custom_call.1} parent=5 // pred_check_branch
        %167 = sbr.rel (%p165) target = $region16
      $region15: #{tpu_custom_call.1} parent=5 // pred_region
        // Predicated region
        $region17: #{tpu_custom_call.1} parent=15 // pred_check
          %p168 = pneg %p59
        $region18: #{tpu_custom_call.1} parent=15 // pred_check_branch
          %170 = sbr.rel (%p168) target = $region20
        $region19: #{tpu_custom_call.1} parent=15 // pred_region
          %s171 = sand.u32 %s49, 1
          %s172 = scalar_lea.sflag [#allocation3], %s171
          %s173 = sand.u32 %s49, 1
          %s174 = smul.addr %s173, 1152
          %s175 = scalar_lea.vmem [#allocation2], %s174
          %s176 = smul.u32 48, %s25
          %s177 = smul.u32 3, %s26
          %s179 = ssub.s32 18432, 18432
          %180 = vsyncadd %s172, %s179
          %s181 = smul.addr %s176, 6
          %s182 = sadd.s32 %s177, %s181
          %s183 = smul.addr %s182, 128
          %s184 = scalar_lea.hbm %s0, %s183
          %s185 = sshll.u32 %s175, 4
          %s186 = int_to_ptr.vmem [resolvable:$true] %s185
          %191 = dma.hbm_to_vmem [thread:$0]  %s184, 18432, %s186, %s172, 768, 384, 24
        $region20: #{tpu_custom_call.1} parent=15 // pred_fallthru
          _
        // Predicated region
        $region21: #{tpu_custom_call.1} parent=15 // pred_check
          %p192 = pneg %p87
        $region22: #{tpu_custom_call.1} parent=15 // pred_check_branch
          %194 = sbr.rel (%p192) target = $region24
        $region23: #{tpu_custom_call.1} parent=15 // pred_region
          %s195 = sand.u32 %s18, 1
          %s196 = scalar_lea.sflag [#allocation6], %s195
          %s197 = sand.u32 %s77, 1
          %s198 = smul.addr %s197, 2304
          %s199 = scalar_lea.vmem [#allocation5], %s198
          %s200 = smul.u32 48, %s25
          %s201 = smul.u32 6, %s27
          %s203 = ssub.s32 36864, 36864
          %204 = vsyncadd %s196, %s203
          %s205 = smul.addr %s200, 6
          %s206 = sadd.s32 %s201, %s205
          %s207 = smul.addr %s206, 128
          %s208 = scalar_lea.hbm %s1, %s207
          %s209 = sshll.u32 %s199, 4
          %s210 = int_to_ptr.vmem [resolvable:$true] %s209
          %215 = dma.hbm_to_vmem [thread:$0]  %s208, 36864, %s210, %s196, 768, 768, 48
        $region24: #{tpu_custom_call.1} parent=15 // pred_fallthru
          _
        // Predicated region
        $region25: #{tpu_custom_call.1} parent=15 // pred_check
          %p216 = pneg %p115
        $region26: #{tpu_custom_call.1} parent=15 // pred_check_branch
          %218 = sbr.rel (%p216) target = $region28
        $region27: #{tpu_custom_call.1} parent=15 // pred_region
          %s219 = sand.u32 %s18, 1
          %s220 = scalar_lea.sflag [#allocation6], %s219
          %s221 = sand.u32 %s105, 1
          %s222 = smul.addr %s221, 2304
          %s223 = scalar_lea.vmem [#allocation7], %s222
          %s224 = smul.u32 96, %s27
          %s225 = smul.u32 3, %s26
          %s227 = ssub.s32 36864, 36864
          %228 = vsyncadd %s220, %s227
          %s229 = smul.addr %s224, 6
          %s230 = sadd.s32 %s225, %s229
          %s231 = smul.addr %s230, 128
          %s232 = scalar_lea.hbm %s2, %s231
          %s233 = sshll.u32 %s223, 4
          %s234 = int_to_ptr.vmem [resolvable:$true] %s233
          %239 = dma.hbm_to_vmem [thread:$0]  %s232, 36864, %s234, %s220, 768, 384, 24
        $region28: #{tpu_custom_call.1} parent=15 // pred_fallthru
          _
      $region16: #{tpu_custom_call.1} parent=5 // pred_fallthru
        _
      %p240 = scmp.le.s32.totalorder 1, %s18
      %p241 = scmp.lt.s32.totalorder %s18, 5
      %p242 = pnand %p240, %p241
      %p243 = pneg %p242
      // Predicated region
      $region29: #{tpu_custom_call.1} parent=5 // pred_check
        _
      $region30: #{tpu_custom_call.1} parent=5 // pred_check_branch
        %245 = sbr.rel (%p242) target = $region32
      $region31: #{tpu_custom_call.1} parent=5 // pred_region
        %s246 = ssub.s32 %s18, 1
        %s247 = sand.u32 %s52, 1
        %s248 = scalar_lea.sflag [#allocation3], %s247
        %s249 = sand.u32 %s52, 1
        %s250 = smul.addr %s249, 1152
        %s251 = scalar_lea.vmem [#allocation2], %s250
        // Predicated region
        $region33: #{tpu_custom_call.1} parent=31 // pred_check
          %p252 = pneg %p65
        $region34: #{tpu_custom_call.1} parent=31 // pred_check_branch
          %254 = sbr.rel (%p252) target = $region36
        $region35: #{tpu_custom_call.1} parent=31 // pred_region
          %255 = dma.done %s248, 18432
        $region36: #{tpu_custom_call.1} parent=31 // pred_fallthru
          _
        %s256 = sand.u32 %s23, 1
        %s257 = scalar_lea.sflag [#allocation6], %s256
        %s258 = sand.u32 %s80, 1
        %s259 = smul.addr %s258, 2304
        %s260 = scalar_lea.vmem [#allocation5], %s259
        // Predicated region
        $region37: #{tpu_custom_call.1} parent=31 // pred_check
          %p261 = pneg %p93
        $region38: #{tpu_custom_call.1} parent=31 // pred_check_branch
          %263 = sbr.rel (%p261) target = $region40
        $region39: #{tpu_custom_call.1} parent=31 // pred_region
          %264 = dma.done %s257, 36864
        $region40: #{tpu_custom_call.1} parent=31 // pred_fallthru
          _
        %s265 = sand.u32 %s23, 1
        %s266 = scalar_lea.sflag [#allocation6], %s265
        %s267 = sand.u32 %s108, 1
        %s268 = smul.addr %s267, 2304
        %s269 = scalar_lea.vmem [#allocation7], %s268
        // Predicated region
        $region41: #{tpu_custom_call.1} parent=31 // pred_check
          %p270 = pneg %p121
        $region42: #{tpu_custom_call.1} parent=31 // pred_check_branch
          %272 = sbr.rel (%p270) target = $region44
        $region43: #{tpu_custom_call.1} parent=31 // pred_region
          %273 = dma.done %s266, 36864
        $region44: #{tpu_custom_call.1} parent=31 // pred_fallthru
          _
        %s274 = sand.u32 %s52, 1
        %s275 = scalar_lea.sflag [#allocation3], %s274
        %s276 = sand.u32 %s52, 1
        %s277 = smul.addr %s276, 1152
        %s278 = scalar_lea.vmem [#allocation2], %s277
        %p279 = pneg %p65
        %p280 = pneg %p62
        %s281 = sand.u32 %s23, 1
        %s282 = scalar_lea.sflag [#allocation6], %s281
        %s283 = sand.u32 %s80, 1
        %s284 = smul.addr %s283, 2304
        %s285 = scalar_lea.vmem [#allocation5], %s284
        %p286 = pneg %p93
        %p287 = pneg %p90
        %s288 = sand.u32 %s23, 1
        %s289 = scalar_lea.sflag [#allocation6], %s288
        %s290 = sand.u32 %s108, 1
        %s291 = smul.addr %s290, 2304
        %s292 = scalar_lea.vmem [#allocation7], %s291
        %p293 = pneg %p121
        %p294 = pneg %p118
        %p295 = pneg %p149
        %p296 = pneg %p146
        %s297 = sand.u32 %s136, 1
        %s298 = scalar_lea.sflag [#allocation4], %s297
        %s299 = sand.u32 %s136, 1
        %s300 = smul.addr %s299, 1152
        %s301 = scalar_lea.vmem [#allocation8], %s300
        %s302 = smul.u32 48, %s28
        %s303 = smul.u32 3, %s29
        %s304 = smul.u32 48, %s28
        %s305 = smul.u32 6, %s30
        %s306 = smul.u32 96, %s30
        %s307 = smul.u32 3, %s29
        %s308 = smul.u32 48, %s28
        %s309 = smul.u32 3, %s29
        %p310 = scmp.eq.s32.totalorder %s30, 0
        // Predicated region
        $region45: #{tpu_custom_call.1} parent=31 // pred_check
          %p311 = pneg %p310
        $region46: #{tpu_custom_call.1} parent=31 // pred_check_branch
          %313 = sbr.rel (%p311) target = $region48
        $region47: #{tpu_custom_call.1} parent=31 // pred_region
          %314 = vst [vmem:[%s301] sm:$0xff] 0.0
          %315 = vst [vmem:[%s301 + $0x8] sm:$0xff] 0.0
          %316 = vst [vmem:[%s301 + $0x10] sm:$0xff] 0.0
          %317 = vst [vmem:[%s301 + $0x18] sm:$0xff] 0.0
          %318 = vst [vmem:[%s301 + $0x20] sm:$0xff] 0.0
          %319 = vst [vmem:[%s301 + $0x28] sm:$0xff] 0.0
          %320 = vst [vmem:[%s301 + $0x30] sm:$0xff] 0.0
          %321 = vst [vmem:[%s301 + $0x38] sm:$0xff] 0.0
          %322 = vst [vmem:[%s301 + $0x40] sm:$0xff] 0.0
          %323 = vst [vmem:[%s301 + $0x48] sm:$0xff] 0.0
          %324 = vst [vmem:[%s301 + $0x50] sm:$0xff] 0.0
          %325 = vst [vmem:[%s301 + $0x58] sm:$0xff] 0.0
          %326 = vst [vmem:[%s301 + $0x60] sm:$0xff] 0.0
          %327 = vst [vmem:[%s301 + $0x68] sm:$0xff] 0.0
          %328 = vst [vmem:[%s301 + $0x70] sm:$0xff] 0.0
          %329 = vst [vmem:[%s301 + $0x78] sm:$0xff] 0.0
          %330 = vst [vmem:[%s301 + $0x80] sm:$0xff] 0.0
          %331 = vst [vmem:[%s301 + $0x88] sm:$0xff] 0.0
          %332 = vst [vmem:[%s301 + $0x90] sm:$0xff] 0.0
          %333 = vst [vmem:[%s301 + $0x98] sm:$0xff] 0.0
          %334 = vst [vmem:[%s301 + $0xa0] sm:$0xff] 0.0
          %335 = vst [vmem:[%s301 + $0xa8] sm:$0xff] 0.0
          %336 = vst [vmem:[%s301 + $0xb0] sm:$0xff] 0.0
          %337 = vst [vmem:[%s301 + $0xb8] sm:$0xff] 0.0
          %338 = vst [vmem:[%s301 + $0xc0] sm:$0xff] 0.0
          %339 = vst [vmem:[%s301 + $0xc8] sm:$0xff] 0.0
          %340 = vst [vmem:[%s301 + $0xd0] sm:$0xff] 0.0
          %341 = vst [vmem:[%s301 + $0xd8] sm:$0xff] 0.0
          %342 = vst [vmem:[%s301 + $0xe0] sm:$0xff] 0.0
          %343 = vst [vmem:[%s301 + $0xe8] sm:$0xff] 0.0
          %344 = vst [vmem:[%s301 + $0xf0] sm:$0xff] 0.0
          %345 = vst [vmem:[%s301 + $0xf8] sm:$0xff] 0.0
          %346 = vst [vmem:[%s301 + $0x100] sm:$0xff] 0.0
          %347 = vst [vmem:[%s301 + $0x108] sm:$0xff] 0.0
          %348 = vst [vmem:[%s301 + $0x110] sm:$0xff] 0.0
          %349 = vst [vmem:[%s301 + $0x118] sm:$0xff] 0.0
          %350 = vst [vmem:[%s301 + $0x120] sm:$0xff] 0.0
          %351 = vst [vmem:[%s301 + $0x128] sm:$0xff] 0.0
          %352 = vst [vmem:[%s301 + $0x130] sm:$0xff] 0.0
          %353 = vst [vmem:[%s301 + $0x138] sm:$0xff] 0.0
          %354 = vst [vmem:[%s301 + $0x140] sm:$0xff] 0.0
          %355 = vst [vmem:[%s301 + $0x148] sm:$0xff] 0.0
          %356 = vst [vmem:[%s301 + $0x150] sm:$0xff] 0.0
          %357 = vst [vmem:[%s301 + $0x158] sm:$0xff] 0.0
          %358 = vst [vmem:[%s301 + $0x160] sm:$0xff] 0.0
          %359 = vst [vmem:[%s301 + $0x168] sm:$0xff] 0.0
          %360 = vst [vmem:[%s301 + $0x170] sm:$0xff] 0.0
          %361 = vst [vmem:[%s301 + $0x178] sm:$0xff] 0.0
          %362 = vst [vmem:[%s301 + $0x180] sm:$0xff] 0.0
          %363 = vst [vmem:[%s301 + $0x188] sm:$0xff] 0.0
          %364 = vst [vmem:[%s301 + $0x190] sm:$0xff] 0.0
          %365 = vst [vmem:[%s301 + $0x198] sm:$0xff] 0.0
          %366 = vst [vmem:[%s301 + $0x1a0] sm:$0xff] 0.0
          %367 = vst [vmem:[%s301 + $0x1a8] sm:$0xff] 0.0
          %368 = vst [vmem:[%s301 + $0x1b0] sm:$0xff] 0.0
          %369 = vst [vmem:[%s301 + $0x1b8] sm:$0xff] 0.0
          %370 = vst [vmem:[%s301 + $0x1c0] sm:$0xff] 0.0
          %371 = vst [vmem:[%s301 + $0x1c8] sm:$0xff] 0.0
          %372 = vst [vmem:[%s301 + $0x1d0] sm:$0xff] 0.0
          %373 = vst [vmem:[%s301 + $0x1d8] sm:$0xff] 0.0
          %374 = vst [vmem:[%s301 + $0x1e0] sm:$0xff] 0.0
          %375 = vst [vmem:[%s301 + $0x1e8] sm:$0xff] 0.0
          %376 = vst [vmem:[%s301 + $0x1f0] sm:$0xff] 0.0
          %377 = vst [vmem:[%s301 + $0x1f8] sm:$0xff] 0.0
          %378 = vst [vmem:[%s301 + $0x200] sm:$0xff] 0.0
          %379 = vst [vmem:[%s301 + $0x208] sm:$0xff] 0.0
          %380 = vst [vmem:[%s301 + $0x210] sm:$0xff] 0.0
          %381 = vst [vmem:[%s301 + $0x218] sm:$0xff] 0.0
          %382 = vst [vmem:[%s301 + $0x220] sm:$0xff] 0.0
          %383 = vst [vmem:[%s301 + $0x228] sm:$0xff] 0.0
          %384 = vst [vmem:[%s301 + $0x230] sm:$0xff] 0.0
          %385 = vst [vmem:[%s301 + $0x238] sm:$0xff] 0.0
          %386 = vst [vmem:[%s301 + $0x240] sm:$0xff] 0.0
          %387 = vst [vmem:[%s301 + $0x248] sm:$0xff] 0.0
          %388 = vst [vmem:[%s301 + $0x250] sm:$0xff] 0.0
          %389 = vst [vmem:[%s301 + $0x258] sm:$0xff] 0.0
          %390 = vst [vmem:[%s301 + $0x260] sm:$0xff] 0.0
          %391 = vst [vmem:[%s301 + $0x268] sm:$0xff] 0.0
          %392 = vst [vmem:[%s301 + $0x270] sm:$0xff] 0.0
          %393 = vst [vmem:[%s301 + $0x278] sm:$0xff] 0.0
          %394 = vst [vmem:[%s301 + $0x280] sm:$0xff] 0.0
          %395 = vst [vmem:[%s301 + $0x288] sm:$0xff] 0.0
          %396 = vst [vmem:[%s301 + $0x290] sm:$0xff] 0.0
          %397 = vst [vmem:[%s301 + $0x298] sm:$0xff] 0.0
          %398 = vst [vmem:[%s301 + $0x2a0] sm:$0xff] 0.0
          %399 = vst [vmem:[%s301 + $0x2a8] sm:$0xff] 0.0
          %400 = vst [vmem:[%s301 + $0x2b0] sm:$0xff] 0.0
          %401 = vst [vmem:[%s301 + $0x2b8] sm:$0xff] 0.0
          %402 = vst [vmem:[%s301 + $0x2c0] sm:$0xff] 0.0
          %403 = vst [vmem:[%s301 + $0x2c8] sm:$0xff] 0.0
          %404 = vst [vmem:[%s301 + $0x2d0] sm:$0xff] 0.0
          %405 = vst [vmem:[%s301 + $0x2d8] sm:$0xff] 0.0
          %406 = vst [vmem:[%s301 + $0x2e0] sm:$0xff] 0.0
          %407 = vst [vmem:[%s301 + $0x2e8] sm:$0xff] 0.0
          %408 = vst [vmem:[%s301 + $0x2f0] sm:$0xff] 0.0
          %409 = vst [vmem:[%s301 + $0x2f8] sm:$0xff] 0.0
          %410 = vst [vmem:[%s301 + $0x300] sm:$0xff] 0.0
          %411 = vst [vmem:[%s301 + $0x308] sm:$0xff] 0.0
          %412 = vst [vmem:[%s301 + $0x310] sm:$0xff] 0.0
          %413 = vst [vmem:[%s301 + $0x318] sm:$0xff] 0.0
          %414 = vst [vmem:[%s301 + $0x320] sm:$0xff] 0.0
          %415 = vst [vmem:[%s301 + $0x328] sm:$0xff] 0.0
          %416 = vst [vmem:[%s301 + $0x330] sm:$0xff] 0.0
          %417 = vst [vmem:[%s301 + $0x338] sm:$0xff] 0.0
          %418 = vst [vmem:[%s301 + $0x340] sm:$0xff] 0.0
          %419 = vst [vmem:[%s301 + $0x348] sm:$0xff] 0.0
          %420 = vst [vmem:[%s301 + $0x350] sm:$0xff] 0.0
          %421 = vst [vmem:[%s301 + $0x358] sm:$0xff] 0.0
          %422 = vst [vmem:[%s301 + $0x360] sm:$0xff] 0.0
          %423 = vst [vmem:[%s301 + $0x368] sm:$0xff] 0.0
          %424 = vst [vmem:[%s301 + $0x370] sm:$0xff] 0.0
          %425 = vst [vmem:[%s301 + $0x378] sm:$0xff] 0.0
          %426 = vst [vmem:[%s301 + $0x380] sm:$0xff] 0.0
          %427 = vst [vmem:[%s301 + $0x388] sm:$0xff] 0.0
          %428 = vst [vmem:[%s301 + $0x390] sm:$0xff] 0.0
          %429 = vst [vmem:[%s301 + $0x398] sm:$0xff] 0.0
          %430 = vst [vmem:[%s301 + $0x3a0] sm:$0xff] 0.0
          %431 = vst [vmem:[%s301 + $0x3a8] sm:$0xff] 0.0
          %432 = vst [vmem:[%s301 + $0x3b0] sm:$0xff] 0.0
          %433 = vst [vmem:[%s301 + $0x3b8] sm:$0xff] 0.0
          %434 = vst [vmem:[%s301 + $0x3c0] sm:$0xff] 0.0
          %435 = vst [vmem:[%s301 + $0x3c8] sm:$0xff] 0.0
          %436 = vst [vmem:[%s301 + $0x3d0] sm:$0xff] 0.0
          %437 = vst [vmem:[%s301 + $0x3d8] sm:$0xff] 0.0
          %438 = vst [vmem:[%s301 + $0x3e0] sm:$0xff] 0.0
          %439 = vst [vmem:[%s301 + $0x3e8] sm:$0xff] 0.0
          %440 = vst [vmem:[%s301 + $0x3f0] sm:$0xff] 0.0
          %441 = vst [vmem:[%s301 + $0x3f8] sm:$0xff] 0.0
          %442 = vst [vmem:[%s301 + $0x400] sm:$0xff] 0.0
          %443 = vst [vmem:[%s301 + $0x408] sm:$0xff] 0.0
          %444 = vst [vmem:[%s301 + $0x410] sm:$0xff] 0.0
          %445 = vst [vmem:[%s301 + $0x418] sm:$0xff] 0.0
          %446 = vst [vmem:[%s301 + $0x420] sm:$0xff] 0.0
          %447 = vst [vmem:[%s301 + $0x428] sm:$0xff] 0.0
          %448 = vst [vmem:[%s301 + $0x430] sm:$0xff] 0.0
          %449 = vst [vmem:[%s301 + $0x438] sm:$0xff] 0.0
          %450 = vst [vmem:[%s301 + $0x440] sm:$0xff] 0.0
          %451 = vst [vmem:[%s301 + $0x448] sm:$0xff] 0.0
          %452 = vst [vmem:[%s301 + $0x450] sm:$0xff] 0.0
          %453 = vst [vmem:[%s301 + $0x458] sm:$0xff] 0.0
          %454 = vst [vmem:[%s301 + $0x460] sm:$0xff] 0.0
          %455 = vst [vmem:[%s301 + $0x468] sm:$0xff] 0.0
          %456 = vst [vmem:[%s301 + $0x470] sm:$0xff] 0.0
          %457 = vst [vmem:[%s301 + $0x478] sm:$0xff] 0.0
        $region48: #{tpu_custom_call.1} parent=31 // pred_fallthru
          _
        %v458 = vld [vmem:[%s301] sm:$0xff]
        %v459 = vld [vmem:[%s301 + $0x8] sm:$0xff]
        %v460 = vld [vmem:[%s301 + $0x10] sm:$0xff]
        %v461 = vld [vmem:[%s301 + $0x18] sm:$0xff]
        %v462 = vld [vmem:[%s301 + $0x20] sm:$0xff]
        %v463 = vld [vmem:[%s301 + $0x28] sm:$0xff]
        %v464 = vld [vmem:[%s301 + $0x30] sm:$0xff]
        %v465 = vld [vmem:[%s301 + $0x38] sm:$0xff]
        %v466 = vld [vmem:[%s301 + $0x40] sm:$0xff]
        %v467 = vld [vmem:[%s301 + $0x48] sm:$0xff]
        %v468 = vld [vmem:[%s301 + $0x50] sm:$0xff]
        %v469 = vld [vmem:[%s301 + $0x58] sm:$0xff]
        %v470 = vld [vmem:[%s301 + $0x60] sm:$0xff]
        %v471 = vld [vmem:[%s301 + $0x68] sm:$0xff]
        %v472 = vld [vmem:[%s301 + $0x70] sm:$0xff]
        %v473 = vld [vmem:[%s301 + $0x78] sm:$0xff]
        %v474 = vld [vmem:[%s301 + $0x80] sm:$0xff]
        %v475 = vld [vmem:[%s301 + $0x88] sm:$0xff]
        %v476 = vld [vmem:[%s301 + $0x90] sm:$0xff]
        %v477 = vld [vmem:[%s301 + $0x98] sm:$0xff]
        %v478 = vld [vmem:[%s301 + $0xa0] sm:$0xff]
        %v479 = vld [vmem:[%s301 + $0xa8] sm:$0xff]
        %v480 = vld [vmem:[%s301 + $0xb0] sm:$0xff]
        %v481 = vld [vmem:[%s301 + $0xb8] sm:$0xff]
        %v482 = vld [vmem:[%s301 + $0xc0] sm:$0xff]
        %v483 = vld [vmem:[%s301 + $0xc8] sm:$0xff]
        %v484 = vld [vmem:[%s301 + $0xd0] sm:$0xff]
        %v485 = vld [vmem:[%s301 + $0xd8] sm:$0xff]
        %v486 = vld [vmem:[%s301 + $0xe0] sm:$0xff]
        %v487 = vld [vmem:[%s301 + $0xe8] sm:$0xff]
        %v488 = vld [vmem:[%s301 + $0xf0] sm:$0xff]
        %v489 = vld [vmem:[%s301 + $0xf8] sm:$0xff]
        %v490 = vld [vmem:[%s301 + $0x100] sm:$0xff]
        %v491 = vld [vmem:[%s301 + $0x108] sm:$0xff]
        %v492 = vld [vmem:[%s301 + $0x110] sm:$0xff]
        %v493 = vld [vmem:[%s301 + $0x118] sm:$0xff]
        %v494 = vld [vmem:[%s301 + $0x120] sm:$0xff]
        %v495 = vld [vmem:[%s301 + $0x128] sm:$0xff]
        %v496 = vld [vmem:[%s301 + $0x130] sm:$0xff]
        %v497 = vld [vmem:[%s301 + $0x138] sm:$0xff]
        %v498 = vld [vmem:[%s301 + $0x140] sm:$0xff]
        %v499 = vld [vmem:[%s301 + $0x148] sm:$0xff]
        %v500 = vld [vmem:[%s301 + $0x150] sm:$0xff]
        %v501 = vld [vmem:[%s301 + $0x158] sm:$0xff]
        %v502 = vld [vmem:[%s301 + $0x160] sm:$0xff]
        %v503 = vld [vmem:[%s301 + $0x168] sm:$0xff]
        %v504 = vld [vmem:[%s301 + $0x170] sm:$0xff]
        %v505 = vld [vmem:[%s301 + $0x178] sm:$0xff]
        %v506 = vld [vmem:[%s301 + $0x180] sm:$0xff]
        %v507 = vld [vmem:[%s301 + $0x188] sm:$0xff]
        %v508 = vld [vmem:[%s301 + $0x190] sm:$0xff]
        %v509 = vld [vmem:[%s301 + $0x198] sm:$0xff]
        %v510 = vld [vmem:[%s301 + $0x1a0] sm:$0xff]
        %v511 = vld [vmem:[%s301 + $0x1a8] sm:$0xff]
        %v512 = vld [vmem:[%s301 + $0x1b0] sm:$0xff]
        %v513 = vld [vmem:[%s301 + $0x1b8] sm:$0xff]
        %v514 = vld [vmem:[%s301 + $0x1c0] sm:$0xff]
        %v515 = vld [vmem:[%s301 + $0x1c8] sm:$0xff]
        %v516 = vld [vmem:[%s301 + $0x1d0] sm:$0xff]
        %v517 = vld [vmem:[%s301 + $0x1d8] sm:$0xff]
        %v518 = vld [vmem:[%s301 + $0x1e0] sm:$0xff]
        %v519 = vld [vmem:[%s301 + $0x1e8] sm:$0xff]
        %v520 = vld [vmem:[%s301 + $0x1f0] sm:$0xff]
        %v521 = vld [vmem:[%s301 + $0x1f8] sm:$0xff]
        %v522 = vld [vmem:[%s301 + $0x200] sm:$0xff]
        %v523 = vld [vmem:[%s301 + $0x208] sm:$0xff]
        %v524 = vld [vmem:[%s301 + $0x210] sm:$0xff]
        %v525 = vld [vmem:[%s301 + $0x218] sm:$0xff]
        %v526 = vld [vmem:[%s301 + $0x220] sm:$0xff]
        %v527 = vld [vmem:[%s301 + $0x228] sm:$0xff]
        %v528 = vld [vmem:[%s301 + $0x230] sm:$0xff]
        %v529 = vld [vmem:[%s301 + $0x238] sm:$0xff]
        %v530 = vld [vmem:[%s301 + $0x240] sm:$0xff]
        %v531 = vld [vmem:[%s301 + $0x248] sm:$0xff]
        %v532 = vld [vmem:[%s301 + $0x250] sm:$0xff]
        %v533 = vld [vmem:[%s301 + $0x258] sm:$0xff]
        %v534 = vld [vmem:[%s301 + $0x260] sm:$0xff]
        %v535 = vld [vmem:[%s301 + $0x268] sm:$0xff]
        %v536 = vld [vmem:[%s301 + $0x270] sm:$0xff]
        %v537 = vld [vmem:[%s301 + $0x278] sm:$0xff]
        %v538 = vld [vmem:[%s301 + $0x280] sm:$0xff]
        %v539 = vld [vmem:[%s301 + $0x288] sm:$0xff]
        %v540 = vld [vmem:[%s301 + $0x290] sm:$0xff]
        %v541 = vld [vmem:[%s301 + $0x298] sm:$0xff]
        %v542 = vld [vmem:[%s301 + $0x2a0] sm:$0xff]
        %v543 = vld [vmem:[%s301 + $0x2a8] sm:$0xff]
        %v544 = vld [vmem:[%s301 + $0x2b0] sm:$0xff]
        %v545 = vld [vmem:[%s301 + $0x2b8] sm:$0xff]
        %v546 = vld [vmem:[%s301 + $0x2c0] sm:$0xff]
        %v547 = vld [vmem:[%s301 + $0x2c8] sm:$0xff]
        %v548 = vld [vmem:[%s301 + $0x2d0] sm:$0xff]
        %v549 = vld [vmem:[%s301 + $0x2d8] sm:$0xff]
        %v550 = vld [vmem:[%s301 + $0x2e0] sm:$0xff]
        %v551 = vld [vmem:[%s301 + $0x2e8] sm:$0xff]
        %v552 = vld [vmem:[%s301 + $0x2f0] sm:$0xff]
        %v553 = vld [vmem:[%s301 + $0x2f8] sm:$0xff]
        %v554 = vld [vmem:[%s301 + $0x300] sm:$0xff]
        %v555 = vld [vmem:[%s301 + $0x308] sm:$0xff]
        %v556 = vld [vmem:[%s301 + $0x310] sm:$0xff]
        %v557 = vld [vmem:[%s301 + $0x318] sm:$0xff]
        %v558 = vld [vmem:[%s301 + $0x320] sm:$0xff]
        %v559 = vld [vmem:[%s301 + $0x328] sm:$0xff]
        %v560 = vld [vmem:[%s301 + $0x330] sm:$0xff]
        %v561 = vld [vmem:[%s301 + $0x338] sm:$0xff]
        %v562 = vld [vmem:[%s301 + $0x340] sm:$0xff]
        %v563 = vld [vmem:[%s301 + $0x348] sm:$0xff]
        %v564 = vld [vmem:[%s301 + $0x350] sm:$0xff]
        %v565 = vld [vmem:[%s301 + $0x358] sm:$0xff]
        %v566 = vld [vmem:[%s301 + $0x360] sm:$0xff]
        %v567 = vld [vmem:[%s301 + $0x368] sm:$0xff]
        %v568 = vld [vmem:[%s301 + $0x370] sm:$0xff]
        %v569 = vld [vmem:[%s301 + $0x378] sm:$0xff]
        %v570 = vld [vmem:[%s301 + $0x380] sm:$0xff]
        %v571 = vld [vmem:[%s301 + $0x388] sm:$0xff]
        %v572 = vld [vmem:[%s301 + $0x390] sm:$0xff]
        %v573 = vld [vmem:[%s301 + $0x398] sm:$0xff]
        %v574 = vld [vmem:[%s301 + $0x3a0] sm:$0xff]
        %v575 = vld [vmem:[%s301 + $0x3a8] sm:$0xff]
        %v576 = vld [vmem:[%s301 + $0x3b0] sm:$0xff]
        %v577 = vld [vmem:[%s301 + $0x3b8] sm:$0xff]
        %v578 = vld [vmem:[%s301 + $0x3c0] sm:$0xff]
        %v579 = vld [vmem:[%s301 + $0x3c8] sm:$0xff]
        %v580 = vld [vmem:[%s301 + $0x3d0] sm:$0xff]
        %v581 = vld [vmem:[%s301 + $0x3d8] sm:$0xff]
        %v582 = vld [vmem:[%s301 + $0x3e0] sm:$0xff]
        %v583 = vld [vmem:[%s301 + $0x3e8] sm:$0xff]
        %v584 = vld [vmem:[%s301 + $0x3f0] sm:$0xff]
        %v585 = vld [vmem:[%s301 + $0x3f8] sm:$0xff]
        %v586 = vld [vmem:[%s301 + $0x400] sm:$0xff]
        %v587 = vld [vmem:[%s301 + $0x408] sm:$0xff]
        %v588 = vld [vmem:[%s301 + $0x410] sm:$0xff]
        %v589 = vld [vmem:[%s301 + $0x418] sm:$0xff]
        %v590 = vld [vmem:[%s301 + $0x420] sm:$0xff]
        %v591 = vld [vmem:[%s301 + $0x428] sm:$0xff]
        %v592 = vld [vmem:[%s301 + $0x430] sm:$0xff]
        %v593 = vld [vmem:[%s301 + $0x438] sm:$0xff]
        %v594 = vld [vmem:[%s301 + $0x440] sm:$0xff]
        %v595 = vld [vmem:[%s301 + $0x448] sm:$0xff]
        %v596 = vld [vmem:[%s301 + $0x450] sm:$0xff]
        %v597 = vld [vmem:[%s301 + $0x458] sm:$0xff]
        %v598 = vld [vmem:[%s301 + $0x460] sm:$0xff]
        %v599 = vld [vmem:[%s301 + $0x468] sm:$0xff]
        %v600 = vld [vmem:[%s301 + $0x470] sm:$0xff]
        %v601 = vld [vmem:[%s301 + $0x478] sm:$0xff]
        %v602 = vld [vmem:[%s260] sm:$0xff]
        %v603 = vld [vmem:[%s260 + $0x8] sm:$0xff]
        %v604 = vld [vmem:[%s260 + $0x10] sm:$0xff]
        %v605 = vld [vmem:[%s260 + $0x18] sm:$0xff]
        %v606 = vld [vmem:[%s260 + $0x20] sm:$0xff]
        %v607 = vld [vmem:[%s260 + $0x28] sm:$0xff]
        %v608 = vld [vmem:[%s260 + $0x30] sm:$0xff]
        %v609 = vld [vmem:[%s260 + $0x38] sm:$0xff]
        %v610 = vld [vmem:[%s260 + $0x40] sm:$0xff]
        %v611 = vld [vmem:[%s260 + $0x48] sm:$0xff]
        %v612 = vld [vmem:[%s260 + $0x50] sm:$0xff]
        %v613 = vld [vmem:[%s260 + $0x58] sm:$0xff]
        %v614 = vld [vmem:[%s260 + $0x60] sm:$0xff]
        %v615 = vld [vmem:[%s260 + $0x68] sm:$0xff]
        %v616 = vld [vmem:[%s260 + $0x70] sm:$0xff]
        %v617 = vld [vmem:[%s260 + $0x78] sm:$0xff]
        %v618 = vld [vmem:[%s260 + $0x80] sm:$0xff]
        %v619 = vld [vmem:[%s260 + $0x88] sm:$0xff]
        %v620 = vld [vmem:[%s260 + $0x90] sm:$0xff]
        %v621 = vld [vmem:[%s260 + $0x98] sm:$0xff]
        %v622 = vld [vmem:[%s260 + $0xa0] sm:$0xff]
        %v623 = vld [vmem:[%s260 + $0xa8] sm:$0xff]
        %v624 = vld [vmem:[%s260 + $0xb0] sm:$0xff]
        %v625 = vld [vmem:[%s260 + $0xb8] sm:$0xff]
        %v626 = vld [vmem:[%s260 + $0xc0] sm:$0xff]
        %v627 = vld [vmem:[%s260 + $0xc8] sm:$0xff]
        %v628 = vld [vmem:[%s260 + $0xd0] sm:$0xff]
        %v629 = vld [vmem:[%s260 + $0xd8] sm:$0xff]
        %v630 = vld [vmem:[%s260 + $0xe0] sm:$0xff]
        %v631 = vld [vmem:[%s260 + $0xe8] sm:$0xff]
        %v632 = vld [vmem:[%s260 + $0xf0] sm:$0xff]
        %v633 = vld [vmem:[%s260 + $0xf8] sm:$0xff]
        %v634 = vld [vmem:[%s260 + $0x100] sm:$0xff]
        %v635 = vld [vmem:[%s260 + $0x108] sm:$0xff]
        %v636 = vld [vmem:[%s260 + $0x110] sm:$0xff]
        %v637 = vld [vmem:[%s260 + $0x118] sm:$0xff]
        %v638 = vld [vmem:[%s260 + $0x120] sm:$0xff]
        %v639 = vld [vmem:[%s260 + $0x128] sm:$0xff]
        %v640 = vld [vmem:[%s260 + $0x130] sm:$0xff]
        %v641 = vld [vmem:[%s260 + $0x138] sm:$0xff]
        %v642 = vld [vmem:[%s260 + $0x140] sm:$0xff]
        %v643 = vld [vmem:[%s260 + $0x148] sm:$0xff]
        %v644 = vld [vmem:[%s260 + $0x150] sm:$0xff]
        %v645 = vld [vmem:[%s260 + $0x158] sm:$0xff]
        %v646 = vld [vmem:[%s260 + $0x160] sm:$0xff]
        %v647 = vld [vmem:[%s260 + $0x168] sm:$0xff]
        %v648 = vld [vmem:[%s260 + $0x170] sm:$0xff]
        %v649 = vld [vmem:[%s260 + $0x178] sm:$0xff]
        %v650 = vld [vmem:[%s260 + $0x180] sm:$0xff]
        %v651 = vld [vmem:[%s260 + $0x188] sm:$0xff]
        %v652 = vld [vmem:[%s260 + $0x190] sm:$0xff]
        %v653 = vld [vmem:[%s260 + $0x198] sm:$0xff]
        %v654 = vld [vmem:[%s260 + $0x1a0] sm:$0xff]
        %v655 = vld [vmem:[%s260 + $0x1a8] sm:$0xff]
        %v656 = vld [vmem:[%s260 + $0x1b0] sm:$0xff]
        %v657 = vld [vmem:[%s260 + $0x1b8] sm:$0xff]
        %v658 = vld [vmem:[%s260 + $0x1c0] sm:$0xff]
        %v659 = vld [vmem:[%s260 + $0x1c8] sm:$0xff]
        %v660 = vld [vmem:[%s260 + $0x1d0] sm:$0xff]
        %v661 = vld [vmem:[%s260 + $0x1d8] sm:$0xff]
        %v662 = vld [vmem:[%s260 + $0x1e0] sm:$0xff]
        %v663 = vld [vmem:[%s260 + $0x1e8] sm:$0xff]
        %v664 = vld [vmem:[%s260 + $0x1f0] sm:$0xff]
        %v665 = vld [vmem:[%s260 + $0x1f8] sm:$0xff]
        %v666 = vld [vmem:[%s260 + $0x200] sm:$0xff]
        %v667 = vld [vmem:[%s260 + $0x208] sm:$0xff]
        %v668 = vld [vmem:[%s260 + $0x210] sm:$0xff]
        %v669 = vld [vmem:[%s260 + $0x218] sm:$0xff]
        %v670 = vld [vmem:[%s260 + $0x220] sm:$0xff]
        %v671 = vld [vmem:[%s260 + $0x228] sm:$0xff]
        %v672 = vld [vmem:[%s260 + $0x230] sm:$0xff]
        %v673 = vld [vmem:[%s260 + $0x238] sm:$0xff]
        %v674 = vld [vmem:[%s260 + $0x240] sm:$0xff]
        %v675 = vld [vmem:[%s260 + $0x248] sm:$0xff]
        %v676 = vld [vmem:[%s260 + $0x250] sm:$0xff]
        %v677 = vld [vmem:[%s260 + $0x258] sm:$0xff]
        %v678 = vld [vmem:[%s260 + $0x260] sm:$0xff]
        %v679 = vld [vmem:[%s260 + $0x268] sm:$0xff]
        %v680 = vld [vmem:[%s260 + $0x270] sm:$0xff]
        %v681 = vld [vmem:[%s260 + $0x278] sm:$0xff]
        %v682 = vld [vmem:[%s260 + $0x280] sm:$0xff]
        %v683 = vld [vmem:[%s260 + $0x288] sm:$0xff]
        %v684 = vld [vmem:[%s260 + $0x290] sm:$0xff]
        %v685 = vld [vmem:[%s260 + $0x298] sm:$0xff]
        %v686 = vld [vmem:[%s260 + $0x2a0] sm:$0xff]
        %v687 = vld [vmem:[%s260 + $0x2a8] sm:$0xff]
        %v688 = vld [vmem:[%s260 + $0x2b0] sm:$0xff]
        %v689 = vld [vmem:[%s260 + $0x2b8] sm:$0xff]
        %v690 = vld [vmem:[%s260 + $0x2c0] sm:$0xff]
        %v691 = vld [vmem:[%s260 + $0x2c8] sm:$0xff]
        %v692 = vld [vmem:[%s260 + $0x2d0] sm:$0xff]
        %v693 = vld [vmem:[%s260 + $0x2d8] sm:$0xff]
        %v694 = vld [vmem:[%s260 + $0x2e0] sm:$0xff]
        %v695 = vld [vmem:[%s260 + $0x2e8] sm:$0xff]
        %v696 = vld [vmem:[%s260 + $0x2f0] sm:$0xff]
        %v697 = vld [vmem:[%s260 + $0x2f8] sm:$0xff]
        %v698 = vld [vmem:[%s260 + $0x300] sm:$0xff]
        %v699 = vld [vmem:[%s260 + $0x308] sm:$0xff]
        %v700 = vld [vmem:[%s260 + $0x310] sm:$0xff]
        %v701 = vld [vmem:[%s260 + $0x318] sm:$0xff]
        %v702 = vld [vmem:[%s260 + $0x320] sm:$0xff]
        %v703 = vld [vmem:[%s260 + $0x328] sm:$0xff]
        %v704 = vld [vmem:[%s260 + $0x330] sm:$0xff]
        %v705 = vld [vmem:[%s260 + $0x338] sm:$0xff]
        %v706 = vld [vmem:[%s260 + $0x340] sm:$0xff]
        %v707 = vld [vmem:[%s260 + $0x348] sm:$0xff]
        %v708 = vld [vmem:[%s260 + $0x350] sm:$0xff]
        %v709 = vld [vmem:[%s260 + $0x358] sm:$0xff]
        %v710 = vld [vmem:[%s260 + $0x360] sm:$0xff]
        %v711 = vld [vmem:[%s260 + $0x368] sm:$0xff]
        %v712 = vld [vmem:[%s260 + $0x370] sm:$0xff]
        %v713 = vld [vmem:[%s260 + $0x378] sm:$0xff]
        %v714 = vld [vmem:[%s260 + $0x380] sm:$0xff]
        %v715 = vld [vmem:[%s260 + $0x388] sm:$0xff]
        %v716 = vld [vmem:[%s260 + $0x390] sm:$0xff]
        %v717 = vld [vmem:[%s260 + $0x398] sm:$0xff]
        %v718 = vld [vmem:[%s260 + $0x3a0] sm:$0xff]
        %v719 = vld [vmem:[%s260 + $0x3a8] sm:$0xff]
        %v720 = vld [vmem:[%s260 + $0x3b0] sm:$0xff]
        %v721 = vld [vmem:[%s260 + $0x3b8] sm:$0xff]
        %v722 = vld [vmem:[%s260 + $0x3c0] sm:$0xff]
        %v723 = vld [vmem:[%s260 + $0x3c8] sm:$0xff]
        %v724 = vld [vmem:[%s260 + $0x3d0] sm:$0xff]
        %v725 = vld [vmem:[%s260 + $0x3d8] sm:$0xff]
        %v726 = vld [vmem:[%s260 + $0x3e0] sm:$0xff]
        %v727 = vld [vmem:[%s260 + $0x3e8] sm:$0xff]
        %v728 = vld [vmem:[%s260 + $0x3f0] sm:$0xff]
        %v729 = vld [vmem:[%s260 + $0x3f8] sm:$0xff]
        %v730 = vld [vmem:[%s260 + $0x400] sm:$0xff]
        %v731 = vld [vmem:[%s260 + $0x408] sm:$0xff]
        %v732 = vld [vmem:[%s260 + $0x410] sm:$0xff]
        %v733 = vld [vmem:[%s260 + $0x418] sm:$0xff]
        %v734 = vld [vmem:[%s260 + $0x420] sm:$0xff]
        %v735 = vld [vmem:[%s260 + $0x428] sm:$0xff]
        %v736 = vld [vmem:[%s260 + $0x430] sm:$0xff]
        %v737 = vld [vmem:[%s260 + $0x438] sm:$0xff]
        %v738 = vld [vmem:[%s260 + $0x440] sm:$0xff]
        %v739 = vld [vmem:[%s260 + $0x448] sm:$0xff]
        %v740 = vld [vmem:[%s260 + $0x450] sm:$0xff]
        %v741 = vld [vmem:[%s260 + $0x458] sm:$0xff]
        %v742 = vld [vmem:[%s260 + $0x460] sm:$0xff]
        %v743 = vld [vmem:[%s260 + $0x468] sm:$0xff]
        %v744 = vld [vmem:[%s260 + $0x470] sm:$0xff]
        %v745 = vld [vmem:[%s260 + $0x478] sm:$0xff]
        %v746 = vld [vmem:[%s260 + $0x480] sm:$0xff]
        %v747 = vld [vmem:[%s260 + $0x488] sm:$0xff]
        %v748 = vld [vmem:[%s260 + $0x490] sm:$0xff]
        %v749 = vld [vmem:[%s260 + $0x498] sm:$0xff]
        %v750 = vld [vmem:[%s260 + $0x4a0] sm:$0xff]
        %v751 = vld [vmem:[%s260 + $0x4a8] sm:$0xff]
        %v752 = vld [vmem:[%s260 + $0x4b0] sm:$0xff]
        %v753 = vld [vmem:[%s260 + $0x4b8] sm:$0xff]
        %v754 = vld [vmem:[%s260 + $0x4c0] sm:$0xff]
        %v755 = vld [vmem:[%s260 + $0x4c8] sm:$0xff]
        %v756 = vld [vmem:[%s260 + $0x4d0] sm:$0xff]
        %v757 = vld [vmem:[%s260 + $0x4d8] sm:$0xff]
        %v758 = vld [vmem:[%s260 + $0x4e0] sm:$0xff]
        %v759 = vld [vmem:[%s260 + $0x4e8] sm:$0xff]
        %v760 = vld [vmem:[%s260 + $0x4f0] sm:$0xff]
        %v761 = vld [vmem:[%s260 + $0x4f8] sm:$0xff]
        %v762 = vld [vmem:[%s260 + $0x500] sm:$0xff]
        %v763 = vld [vmem:[%s260 + $0x508] sm:$0xff]
        %v764 = vld [vmem:[%s260 + $0x510] sm:$0xff]
        %v765 = vld [vmem:[%s260 + $0x518] sm:$0xff]
        %v766 = vld [vmem:[%s260 + $0x520] sm:$0xff]
        %v767 = vld [vmem:[%s260 + $0x528] sm:$0xff]
        %v768 = vld [vmem:[%s260 + $0x530] sm:$0xff]
        %v769 = vld [vmem:[%s260 + $0x538] sm:$0xff]
        %v770 = vld [vmem:[%s260 + $0x540] sm:$0xff]
        %v771 = vld [vmem:[%s260 + $0x548] sm:$0xff]
        %v772 = vld [vmem:[%s260 + $0x550] sm:$0xff]
        %v773 = vld [vmem:[%s260 + $0x558] sm:$0xff]
        %v774 = vld [vmem:[%s260 + $0x560] sm:$0xff]
        %v775 = vld [vmem:[%s260 + $0x568] sm:$0xff]
        %v776 = vld [vmem:[%s260 + $0x570] sm:$0xff]
        %v777 = vld [vmem:[%s260 + $0x578] sm:$0xff]
        %v778 = vld [vmem:[%s260 + $0x580] sm:$0xff]
        %v779 = vld [vmem:[%s260 + $0x588] sm:$0xff]
        %v780 = vld [vmem:[%s260 + $0x590] sm:$0xff]
        %v781 = vld [vmem:[%s260 + $0x598] sm:$0xff]
        %v782 = vld [vmem:[%s260 + $0x5a0] sm:$0xff]
        %v783 = vld [vmem:[%s260 + $0x5a8] sm:$0xff]
        %v784 = vld [vmem:[%s260 + $0x5b0] sm:$0xff]
        %v785 = vld [vmem:[%s260 + $0x5b8] sm:$0xff]
        %v786 = vld [vmem:[%s260 + $0x5c0] sm:$0xff]
        %v787 = vld [vmem:[%s260 + $0x5c8] sm:$0xff]
        %v788 = vld [vmem:[%s260 + $0x5d0] sm:$0xff]
        %v789 = vld [vmem:[%s260 + $0x5d8] sm:$0xff]
        %v790 = vld [vmem:[%s260 + $0x5e0] sm:$0xff]
        %v791 = vld [vmem:[%s260 + $0x5e8] sm:$0xff]
        %v792 = vld [vmem:[%s260 + $0x5f0] sm:$0xff]
        %v793 = vld [vmem:[%s260 + $0x5f8] sm:$0xff]
        %v794 = vld [vmem:[%s260 + $0x600] sm:$0xff]
        %v795 = vld [vmem:[%s260 + $0x608] sm:$0xff]
        %v796 = vld [vmem:[%s260 + $0x610] sm:$0xff]
        %v797 = vld [vmem:[%s260 + $0x618] sm:$0xff]
        %v798 = vld [vmem:[%s260 + $0x620] sm:$0xff]
        %v799 = vld [vmem:[%s260 + $0x628] sm:$0xff]
        %v800 = vld [vmem:[%s260 + $0x630] sm:$0xff]
        %v801 = vld [vmem:[%s260 + $0x638] sm:$0xff]
        %v802 = vld [vmem:[%s260 + $0x640] sm:$0xff]
        %v803 = vld [vmem:[%s260 + $0x648] sm:$0xff]
        %v804 = vld [vmem:[%s260 + $0x650] sm:$0xff]
        %v805 = vld [vmem:[%s260 + $0x658] sm:$0xff]
        %v806 = vld [vmem:[%s260 + $0x660] sm:$0xff]
        %v807 = vld [vmem:[%s260 + $0x668] sm:$0xff]
        %v808 = vld [vmem:[%s260 + $0x670] sm:$0xff]
        %v809 = vld [vmem:[%s260 + $0x678] sm:$0xff]
        %v810 = vld [vmem:[%s260 + $0x680] sm:$0xff]
        %v811 = vld [vmem:[%s260 + $0x688] sm:$0xff]
        %v812 = vld [vmem:[%s260 + $0x690] sm:$0xff]
        %v813 = vld [vmem:[%s260 + $0x698] sm:$0xff]
        %v814 = vld [vmem:[%s260 + $0x6a0] sm:$0xff]
        %v815 = vld [vmem:[%s260 + $0x6a8] sm:$0xff]
        %v816 = vld [vmem:[%s260 + $0x6b0] sm:$0xff]
        %v817 = vld [vmem:[%s260 + $0x6b8] sm:$0xff]
        %v818 = vld [vmem:[%s260 + $0x6c0] sm:$0xff]
        %v819 = vld [vmem:[%s260 + $0x6c8] sm:$0xff]
        %v820 = vld [vmem:[%s260 + $0x6d0] sm:$0xff]
        %v821 = vld [vmem:[%s260 + $0x6d8] sm:$0xff]
        %v822 = vld [vmem:[%s260 + $0x6e0] sm:$0xff]
        %v823 = vld [vmem:[%s260 + $0x6e8] sm:$0xff]
        %v824 = vld [vmem:[%s260 + $0x6f0] sm:$0xff]
        %v825 = vld [vmem:[%s260 + $0x6f8] sm:$0xff]
        %v826 = vld [vmem:[%s260 + $0x700] sm:$0xff]
        %v827 = vld [vmem:[%s260 + $0x708] sm:$0xff]
        %v828 = vld [vmem:[%s260 + $0x710] sm:$0xff]
        %v829 = vld [vmem:[%s260 + $0x718] sm:$0xff]
        %v830 = vld [vmem:[%s260 + $0x720] sm:$0xff]
        %v831 = vld [vmem:[%s260 + $0x728] sm:$0xff]
        %v832 = vld [vmem:[%s260 + $0x730] sm:$0xff]
        %v833 = vld [vmem:[%s260 + $0x738] sm:$0xff]
        %v834 = vld [vmem:[%s260 + $0x740] sm:$0xff]
        %v835 = vld [vmem:[%s260 + $0x748] sm:$0xff]
        %v836 = vld [vmem:[%s260 + $0x750] sm:$0xff]
        %v837 = vld [vmem:[%s260 + $0x758] sm:$0xff]
        %v838 = vld [vmem:[%s260 + $0x760] sm:$0xff]
        %v839 = vld [vmem:[%s260 + $0x768] sm:$0xff]
        %v840 = vld [vmem:[%s260 + $0x770] sm:$0xff]
        %v841 = vld [vmem:[%s260 + $0x778] sm:$0xff]
        %v842 = vld [vmem:[%s260 + $0x780] sm:$0xff]
        %v843 = vld [vmem:[%s260 + $0x788] sm:$0xff]
        %v844 = vld [vmem:[%s260 + $0x790] sm:$0xff]
        %v845 = vld [vmem:[%s260 + $0x798] sm:$0xff]
        %v846 = vld [vmem:[%s260 + $0x7a0] sm:$0xff]
        %v847 = vld [vmem:[%s260 + $0x7a8] sm:$0xff]
        %v848 = vld [vmem:[%s260 + $0x7b0] sm:$0xff]
        %v849 = vld [vmem:[%s260 + $0x7b8] sm:$0xff]
        %v850 = vld [vmem:[%s260 + $0x7c0] sm:$0xff]
        %v851 = vld [vmem:[%s260 + $0x7c8] sm:$0xff]
        %v852 = vld [vmem:[%s260 + $0x7d0] sm:$0xff]
        %v853 = vld [vmem:[%s260 + $0x7d8] sm:$0xff]
        %v854 = vld [vmem:[%s260 + $0x7e0] sm:$0xff]
        %v855 = vld [vmem:[%s260 + $0x7e8] sm:$0xff]
        %v856 = vld [vmem:[%s260 + $0x7f0] sm:$0xff]
        %v857 = vld [vmem:[%s260 + $0x7f8] sm:$0xff]
        %v858 = vld [vmem:[%s260 + $0x800] sm:$0xff]
        %v859 = vld [vmem:[%s260 + $0x808] sm:$0xff]
        %v860 = vld [vmem:[%s260 + $0x810] sm:$0xff]
        %v861 = vld [vmem:[%s260 + $0x818] sm:$0xff]
        %v862 = vld [vmem:[%s260 + $0x820] sm:$0xff]
        %v863 = vld [vmem:[%s260 + $0x828] sm:$0xff]
        %v864 = vld [vmem:[%s260 + $0x830] sm:$0xff]
        %v865 = vld [vmem:[%s260 + $0x838] sm:$0xff]
        %v866 = vld [vmem:[%s260 + $0x840] sm:$0xff]
        %v867 = vld [vmem:[%s260 + $0x848] sm:$0xff]
        %v868 = vld [vmem:[%s260 + $0x850] sm:$0xff]
        %v869 = vld [vmem:[%s260 + $0x858] sm:$0xff]
        %v870 = vld [vmem:[%s260 + $0x860] sm:$0xff]
        %v871 = vld [vmem:[%s260 + $0x868] sm:$0xff]
        %v872 = vld [vmem:[%s260 + $0x870] sm:$0xff]
        %v873 = vld [vmem:[%s260 + $0x878] sm:$0xff]
        %v874 = vld [vmem:[%s260 + $0x880] sm:$0xff]
        %v875 = vld [vmem:[%s260 + $0x888] sm:$0xff]
        %v876 = vld [vmem:[%s260 + $0x890] sm:$0xff]
        %v877 = vld [vmem:[%s260 + $0x898] sm:$0xff]
        %v878 = vld [vmem:[%s260 + $0x8a0] sm:$0xff]
        %v879 = vld [vmem:[%s260 + $0x8a8] sm:$0xff]
        %v880 = vld [vmem:[%s260 + $0x8b0] sm:$0xff]
        %v881 = vld [vmem:[%s260 + $0x8b8] sm:$0xff]
        %v882 = vld [vmem:[%s260 + $0x8c0] sm:$0xff]
        %v883 = vld [vmem:[%s260 + $0x8c8] sm:$0xff]
        %v884 = vld [vmem:[%s260 + $0x8d0] sm:$0xff]
        %v885 = vld [vmem:[%s260 + $0x8d8] sm:$0xff]
        %v886 = vld [vmem:[%s260 + $0x8e0] sm:$0xff]
        %v887 = vld [vmem:[%s260 + $0x8e8] sm:$0xff]
        %v888 = vld [vmem:[%s260 + $0x8f0] sm:$0xff]
        %v889 = vld [vmem:[%s260 + $0x8f8] sm:$0xff]
        %v890 = vld [vmem:[%s269] sm:$0xff]
        %v891 = vld [vmem:[%s269 + $0x8] sm:$0xff]
        %v892 = vld [vmem:[%s269 + $0x10] sm:$0xff]
        %v893 = vld [vmem:[%s269 + $0x18] sm:$0xff]
        %v894 = vld [vmem:[%s269 + $0x20] sm:$0xff]
        %v895 = vld [vmem:[%s269 + $0x28] sm:$0xff]
        %v896 = vld [vmem:[%s269 + $0x30] sm:$0xff]
        %v897 = vld [vmem:[%s269 + $0x38] sm:$0xff]
        %v898 = vld [vmem:[%s269 + $0x40] sm:$0xff]
        %v899 = vld [vmem:[%s269 + $0x48] sm:$0xff]
        %v900 = vld [vmem:[%s269 + $0x50] sm:$0xff]
        %v901 = vld [vmem:[%s269 + $0x58] sm:$0xff]
        %v902 = vld [vmem:[%s269 + $0x60] sm:$0xff]
        %v903 = vld [vmem:[%s269 + $0x68] sm:$0xff]
        %v904 = vld [vmem:[%s269 + $0x70] sm:$0xff]
        %v905 = vld [vmem:[%s269 + $0x78] sm:$0xff]
        %v906 = vld [vmem:[%s269 + $0x80] sm:$0xff]
        %v907 = vld [vmem:[%s269 + $0x88] sm:$0xff]
        %v908 = vld [vmem:[%s269 + $0x90] sm:$0xff]
        %v909 = vld [vmem:[%s269 + $0x98] sm:$0xff]
        %v910 = vld [vmem:[%s269 + $0xa0] sm:$0xff]
        %v911 = vld [vmem:[%s269 + $0xa8] sm:$0xff]
        %v912 = vld [vmem:[%s269 + $0xb0] sm:$0xff]
        %v913 = vld [vmem:[%s269 + $0xb8] sm:$0xff]
        %v914 = vld [vmem:[%s269 + $0xc0] sm:$0xff]
        %v915 = vld [vmem:[%s269 + $0xc8] sm:$0xff]
        %v916 = vld [vmem:[%s269 + $0xd0] sm:$0xff]
        %v917 = vld [vmem:[%s269 + $0xd8] sm:$0xff]
        %v918 = vld [vmem:[%s269 + $0xe0] sm:$0xff]
        %v919 = vld [vmem:[%s269 + $0xe8] sm:$0xff]
        %v920 = vld [vmem:[%s269 + $0xf0] sm:$0xff]
        %v921 = vld [vmem:[%s269 + $0xf8] sm:$0xff]
        %v922 = vld [vmem:[%s269 + $0x100] sm:$0xff]
        %v923 = vld [vmem:[%s269 + $0x108] sm:$0xff]
        %v924 = vld [vmem:[%s269 + $0x110] sm:$0xff]
        %v925 = vld [vmem:[%s269 + $0x118] sm:$0xff]
        %v926 = vld [vmem:[%s269 + $0x120] sm:$0xff]
        %v927 = vld [vmem:[%s269 + $0x128] sm:$0xff]
        %v928 = vld [vmem:[%s269 + $0x130] sm:$0xff]
        %v929 = vld [vmem:[%s269 + $0x138] sm:$0xff]
        %v930 = vld [vmem:[%s269 + $0x140] sm:$0xff]
        %v931 = vld [vmem:[%s269 + $0x148] sm:$0xff]
        %v932 = vld [vmem:[%s269 + $0x150] sm:$0xff]
        %v933 = vld [vmem:[%s269 + $0x158] sm:$0xff]
        %v934 = vld [vmem:[%s269 + $0x160] sm:$0xff]
        %v935 = vld [vmem:[%s269 + $0x168] sm:$0xff]
        %v936 = vld [vmem:[%s269 + $0x170] sm:$0xff]
        %v937 = vld [vmem:[%s269 + $0x178] sm:$0xff]
        %v938 = vld [vmem:[%s269 + $0x180] sm:$0xff]
        %v939 = vld [vmem:[%s269 + $0x188] sm:$0xff]
        %v940 = vld [vmem:[%s269 + $0x190] sm:$0xff]
        %v941 = vld [vmem:[%s269 + $0x198] sm:$0xff]
        %v942 = vld [vmem:[%s269 + $0x1a0] sm:$0xff]
        %v943 = vld [vmem:[%s269 + $0x1a8] sm:$0xff]
        %v944 = vld [vmem:[%s269 + $0x1b0] sm:$0xff]
        %v945 = vld [vmem:[%s269 + $0x1b8] sm:$0xff]
        %v946 = vld [vmem:[%s269 + $0x1c0] sm:$0xff]
        %v947 = vld [vmem:[%s269 + $0x1c8] sm:$0xff]
        %v948 = vld [vmem:[%s269 + $0x1d0] sm:$0xff]
        %v949 = vld [vmem:[%s269 + $0x1d8] sm:$0xff]
        %v950 = vld [vmem:[%s269 + $0x1e0] sm:$0xff]
        %v951 = vld [vmem:[%s269 + $0x1e8] sm:$0xff]
        %v952 = vld [vmem:[%s269 + $0x1f0] sm:$0xff]
        %v953 = vld [vmem:[%s269 + $0x1f8] sm:$0xff]
        %v954 = vld [vmem:[%s269 + $0x200] sm:$0xff]
        %v955 = vld [vmem:[%s269 + $0x208] sm:$0xff]
        %v956 = vld [vmem:[%s269 + $0x210] sm:$0xff]
        %v957 = vld [vmem:[%s269 + $0x218] sm:$0xff]
        %v958 = vld [vmem:[%s269 + $0x220] sm:$0xff]
        %v959 = vld [vmem:[%s269 + $0x228] sm:$0xff]
        %v960 = vld [vmem:[%s269 + $0x230] sm:$0xff]
        %v961 = vld [vmem:[%s269 + $0x238] sm:$0xff]
        %v962 = vld [vmem:[%s269 + $0x240] sm:$0xff]
        %v963 = vld [vmem:[%s269 + $0x248] sm:$0xff]
        %v964 = vld [vmem:[%s269 + $0x250] sm:$0xff]
        %v965 = vld [vmem:[%s269 + $0x258] sm:$0xff]
        %v966 = vld [vmem:[%s269 + $0x260] sm:$0xff]
        %v967 = vld [vmem:[%s269 + $0x268] sm:$0xff]
        %v968 = vld [vmem:[%s269 + $0x270] sm:$0xff]
        %v969 = vld [vmem:[%s269 + $0x278] sm:$0xff]
        %v970 = vld [vmem:[%s269 + $0x280] sm:$0xff]
        %v971 = vld [vmem:[%s269 + $0x288] sm:$0xff]
        %v972 = vld [vmem:[%s269 + $0x290] sm:$0xff]
        %v973 = vld [vmem:[%s269 + $0x298] sm:$0xff]
        %v974 = vld [vmem:[%s269 + $0x2a0] sm:$0xff]
        %v975 = vld [vmem:[%s269 + $0x2a8] sm:$0xff]
        %v976 = vld [vmem:[%s269 + $0x2b0] sm:$0xff]
        %v977 = vld [vmem:[%s269 + $0x2b8] sm:$0xff]
        %v978 = vld [vmem:[%s269 + $0x2c0] sm:$0xff]
        %v979 = vld [vmem:[%s269 + $0x2c8] sm:$0xff]
        %v980 = vld [vmem:[%s269 + $0x2d0] sm:$0xff]
        %v981 = vld [vmem:[%s269 + $0x2d8] sm:$0xff]
        %v982 = vld [vmem:[%s269 + $0x2e0] sm:$0xff]
        %v983 = vld [vmem:[%s269 + $0x2e8] sm:$0xff]
        %v984 = vld [vmem:[%s269 + $0x2f0] sm:$0xff]
        %v985 = vld [vmem:[%s269 + $0x2f8] sm:$0xff]
        %v986 = vld [vmem:[%s269 + $0x300] sm:$0xff]
        %v987 = vld [vmem:[%s269 + $0x308] sm:$0xff]
        %v988 = vld [vmem:[%s269 + $0x310] sm:$0xff]
        %v989 = vld [vmem:[%s269 + $0x318] sm:$0xff]
        %v990 = vld [vmem:[%s269 + $0x320] sm:$0xff]
        %v991 = vld [vmem:[%s269 + $0x328] sm:$0xff]
        %v992 = vld [vmem:[%s269 + $0x330] sm:$0xff]
        %v993 = vld [vmem:[%s269 + $0x338] sm:$0xff]
        %v994 = vld [vmem:[%s269 + $0x340] sm:$0xff]
        %v995 = vld [vmem:[%s269 + $0x348] sm:$0xff]
        %v996 = vld [vmem:[%s269 + $0x350] sm:$0xff]
        %v997 = vld [vmem:[%s269 + $0x358] sm:$0xff]
        %v998 = vld [vmem:[%s269 + $0x360] sm:$0xff]
        %v999 = vld [vmem:[%s269 + $0x368] sm:$0xff]
        %v1000 = vld [vmem:[%s269 + $0x370] sm:$0xff]
        %v1001 = vld [vmem:[%s269 + $0x378] sm:$0xff]
        %v1002 = vld [vmem:[%s269 + $0x380] sm:$0xff]
        %v1003 = vld [vmem:[%s269 + $0x388] sm:$0xff]
        %v1004 = vld [vmem:[%s269 + $0x390] sm:$0xff]
        %v1005 = vld [vmem:[%s269 + $0x398] sm:$0xff]
        %v1006 = vld [vmem:[%s269 + $0x3a0] sm:$0xff]
        %v1007 = vld [vmem:[%s269 + $0x3a8] sm:$0xff]
        %v1008 = vld [vmem:[%s269 + $0x3b0] sm:$0xff]
        %v1009 = vld [vmem:[%s269 + $0x3b8] sm:$0xff]
        %v1010 = vld [vmem:[%s269 + $0x3c0] sm:$0xff]
        %v1011 = vld [vmem:[%s269 + $0x3c8] sm:$0xff]
        %v1012 = vld [vmem:[%s269 + $0x3d0] sm:$0xff]
        %v1013 = vld [vmem:[%s269 + $0x3d8] sm:$0xff]
        %v1014 = vld [vmem:[%s269 + $0x3e0] sm:$0xff]
        %v1015 = vld [vmem:[%s269 + $0x3e8] sm:$0xff]
        %v1016 = vld [vmem:[%s269 + $0x3f0] sm:$0xff]
        %v1017 = vld [vmem:[%s269 + $0x3f8] sm:$0xff]
        %v1018 = vld [vmem:[%s269 + $0x400] sm:$0xff]
        %v1019 = vld [vmem:[%s269 + $0x408] sm:$0xff]
        %v1020 = vld [vmem:[%s269 + $0x410] sm:$0xff]
        %v1021 = vld [vmem:[%s269 + $0x418] sm:$0xff]
        %v1022 = vld [vmem:[%s269 + $0x420] sm:$0xff]
        %v1023 = vld [vmem:[%s269 + $0x428] sm:$0xff]
        %v1024 = vld [vmem:[%s269 + $0x430] sm:$0xff]
        %v1025 = vld [vmem:[%s269 + $0x438] sm:$0xff]
        %v1026 = vld [vmem:[%s269 + $0x440] sm:$0xff]
        %v1027 = vld [vmem:[%s269 + $0x448] sm:$0xff]
        %v1028 = vld [vmem:[%s269 + $0x450] sm:$0xff]
        %v1029 = vld [vmem:[%s269 + $0x458] sm:$0xff]
        %v1030 = vld [vmem:[%s269 + $0x460] sm:$0xff]
        %v1031 = vld [vmem:[%s269 + $0x468] sm:$0xff]
        %v1032 = vld [vmem:[%s269 + $0x470] sm:$0xff]
        %v1033 = vld [vmem:[%s269 + $0x478] sm:$0xff]
        %v1034 = vld [vmem:[%s269 + $0x480] sm:$0xff]
        %v1035 = vld [vmem:[%s269 + $0x488] sm:$0xff]
        %v1036 = vld [vmem:[%s269 + $0x490] sm:$0xff]
        %v1037 = vld [vmem:[%s269 + $0x498] sm:$0xff]
        %v1038 = vld [vmem:[%s269 + $0x4a0] sm:$0xff]
        %v1039 = vld [vmem:[%s269 + $0x4a8] sm:$0xff]
        %v1040 = vld [vmem:[%s269 + $0x4b0] sm:$0xff]
        %v1041 = vld [vmem:[%s269 + $0x4b8] sm:$0xff]
        %v1042 = vld [vmem:[%s269 + $0x4c0] sm:$0xff]
        %v1043 = vld [vmem:[%s269 + $0x4c8] sm:$0xff]
        %v1044 = vld [vmem:[%s269 + $0x4d0] sm:$0xff]
        %v1045 = vld [vmem:[%s269 + $0x4d8] sm:$0xff]
        %v1046 = vld [vmem:[%s269 + $0x4e0] sm:$0xff]
        %v1047 = vld [vmem:[%s269 + $0x4e8] sm:$0xff]
        %v1048 = vld [vmem:[%s269 + $0x4f0] sm:$0xff]
        %v1049 = vld [vmem:[%s269 + $0x4f8] sm:$0xff]
        %v1050 = vld [vmem:[%s269 + $0x500] sm:$0xff]
        %v1051 = vld [vmem:[%s269 + $0x508] sm:$0xff]
        %v1052 = vld [vmem:[%s269 + $0x510] sm:$0xff]
        %v1053 = vld [vmem:[%s269 + $0x518] sm:$0xff]
        %v1054 = vld [vmem:[%s269 + $0x520] sm:$0xff]
        %v1055 = vld [vmem:[%s269 + $0x528] sm:$0xff]
        %v1056 = vld [vmem:[%s269 + $0x530] sm:$0xff]
        %v1057 = vld [vmem:[%s269 + $0x538] sm:$0xff]
        %v1058 = vld [vmem:[%s269 + $0x540] sm:$0xff]
        %v1059 = vld [vmem:[%s269 + $0x548] sm:$0xff]
        %v1060 = vld [vmem:[%s269 + $0x550] sm:$0xff]
        %v1061 = vld [vmem:[%s269 + $0x558] sm:$0xff]
        %v1062 = vld [vmem:[%s269 + $0x560] sm:$0xff]
        %v1063 = vld [vmem:[%s269 + $0x568] sm:$0xff]
        %v1064 = vld [vmem:[%s269 + $0x570] sm:$0xff]
        %v1065 = vld [vmem:[%s269 + $0x578] sm:$0xff]
        %v1066 = vld [vmem:[%s269 + $0x580] sm:$0xff]
        %v1067 = vld [vmem:[%s269 + $0x588] sm:$0xff]
        %v1068 = vld [vmem:[%s269 + $0x590] sm:$0xff]
        %v1069 = vld [vmem:[%s269 + $0x598] sm:$0xff]
        %v1070 = vld [vmem:[%s269 + $0x5a0] sm:$0xff]
        %v1071 = vld [vmem:[%s269 + $0x5a8] sm:$0xff]
        %v1072 = vld [vmem:[%s269 + $0x5b0] sm:$0xff]
        %v1073 = vld [vmem:[%s269 + $0x5b8] sm:$0xff]
        %v1074 = vld [vmem:[%s269 + $0x5c0] sm:$0xff]
        %v1075 = vld [vmem:[%s269 + $0x5c8] sm:$0xff]
        %v1076 = vld [vmem:[%s269 + $0x5d0] sm:$0xff]
        %v1077 = vld [vmem:[%s269 + $0x5d8] sm:$0xff]
        %v1078 = vld [vmem:[%s269 + $0x5e0] sm:$0xff]
        %v1079 = vld [vmem:[%s269 + $0x5e8] sm:$0xff]
        %v1080 = vld [vmem:[%s269 + $0x5f0] sm:$0xff]
        %v1081 = vld [vmem:[%s269 + $0x5f8] sm:$0xff]
        %v1082 = vld [vmem:[%s269 + $0x600] sm:$0xff]
        %v1083 = vld [vmem:[%s269 + $0x608] sm:$0xff]
        %v1084 = vld [vmem:[%s269 + $0x610] sm:$0xff]
        %v1085 = vld [vmem:[%s269 + $0x618] sm:$0xff]
        %v1086 = vld [vmem:[%s269 + $0x620] sm:$0xff]
        %v1087 = vld [vmem:[%s269 + $0x628] sm:$0xff]
        %v1088 = vld [vmem:[%s269 + $0x630] sm:$0xff]
        %v1089 = vld [vmem:[%s269 + $0x638] sm:$0xff]
        %v1090 = vld [vmem:[%s269 + $0x640] sm:$0xff]
        %v1091 = vld [vmem:[%s269 + $0x648] sm:$0xff]
        %v1092 = vld [vmem:[%s269 + $0x650] sm:$0xff]
        %v1093 = vld [vmem:[%s269 + $0x658] sm:$0xff]
        %v1094 = vld [vmem:[%s269 + $0x660] sm:$0xff]
        %v1095 = vld [vmem:[%s269 + $0x668] sm:$0xff]
        %v1096 = vld [vmem:[%s269 + $0x670] sm:$0xff]
        %v1097 = vld [vmem:[%s269 + $0x678] sm:$0xff]
        %v1098 = vld [vmem:[%s269 + $0x680] sm:$0xff]
        %v1099 = vld [vmem:[%s269 + $0x688] sm:$0xff]
        %v1100 = vld [vmem:[%s269 + $0x690] sm:$0xff]
        %v1101 = vld [vmem:[%s269 + $0x698] sm:$0xff]
        %v1102 = vld [vmem:[%s269 + $0x6a0] sm:$0xff]
        %v1103 = vld [vmem:[%s269 + $0x6a8] sm:$0xff]
        %v1104 = vld [vmem:[%s269 + $0x6b0] sm:$0xff]
        %v1105 = vld [vmem:[%s269 + $0x6b8] sm:$0xff]
        %v1106 = vld [vmem:[%s269 + $0x6c0] sm:$0xff]
        %v1107 = vld [vmem:[%s269 + $0x6c8] sm:$0xff]
        %v1108 = vld [vmem:[%s269 + $0x6d0] sm:$0xff]
        %v1109 = vld [vmem:[%s269 + $0x6d8] sm:$0xff]
        %v1110 = vld [vmem:[%s269 + $0x6e0] sm:$0xff]
        %v1111 = vld [vmem:[%s269 + $0x6e8] sm:$0xff]
        %v1112 = vld [vmem:[%s269 + $0x6f0] sm:$0xff]
        %v1113 = vld [vmem:[%s269 + $0x6f8] sm:$0xff]
        %v1114 = vld [vmem:[%s269 + $0x700] sm:$0xff]
        %v1115 = vld [vmem:[%s269 + $0x708] sm:$0xff]
        %v1116 = vld [vmem:[%s269 + $0x710] sm:$0xff]
        %v1117 = vld [vmem:[%s269 + $0x718] sm:$0xff]
        %v1118 = vld [vmem:[%s269 + $0x720] sm:$0xff]
        %v1119 = vld [vmem:[%s269 + $0x728] sm:$0xff]
        %v1120 = vld [vmem:[%s269 + $0x730] sm:$0xff]
        %v1121 = vld [vmem:[%s269 + $0x738] sm:$0xff]
        %v1122 = vld [vmem:[%s269 + $0x740] sm:$0xff]
        %v1123 = vld [vmem:[%s269 + $0x748] sm:$0xff]
        %v1124 = vld [vmem:[%s269 + $0x750] sm:$0xff]
        %v1125 = vld [vmem:[%s269 + $0x758] sm:$0xff]
        %v1126 = vld [vmem:[%s269 + $0x760] sm:$0xff]
        %v1127 = vld [vmem:[%s269 + $0x768] sm:$0xff]
        %v1128 = vld [vmem:[%s269 + $0x770] sm:$0xff]
        %v1129 = vld [vmem:[%s269 + $0x778] sm:$0xff]
        %v1130 = vld [vmem:[%s269 + $0x780] sm:$0xff]
        %v1131 = vld [vmem:[%s269 + $0x788] sm:$0xff]
        %v1132 = vld [vmem:[%s269 + $0x790] sm:$0xff]
        %v1133 = vld [vmem:[%s269 + $0x798] sm:$0xff]
        %v1134 = vld [vmem:[%s269 + $0x7a0] sm:$0xff]
        %v1135 = vld [vmem:[%s269 + $0x7a8] sm:$0xff]
        %v1136 = vld [vmem:[%s269 + $0x7b0] sm:$0xff]
        %v1137 = vld [vmem:[%s269 + $0x7b8] sm:$0xff]
        %v1138 = vld [vmem:[%s269 + $0x7c0] sm:$0xff]
        %v1139 = vld [vmem:[%s269 + $0x7c8] sm:$0xff]
        %v1140 = vld [vmem:[%s269 + $0x7d0] sm:$0xff]
        %v1141 = vld [vmem:[%s269 + $0x7d8] sm:$0xff]
        %v1142 = vld [vmem:[%s269 + $0x7e0] sm:$0xff]
        %v1143 = vld [vmem:[%s269 + $0x7e8] sm:$0xff]
        %v1144 = vld [vmem:[%s269 + $0x7f0] sm:$0xff]
        %v1145 = vld [vmem:[%s269 + $0x7f8] sm:$0xff]
        %v1146 = vld [vmem:[%s269 + $0x800] sm:$0xff]
        %v1147 = vld [vmem:[%s269 + $0x808] sm:$0xff]
        %v1148 = vld [vmem:[%s269 + $0x810] sm:$0xff]
        %v1149 = vld [vmem:[%s269 + $0x818] sm:$0xff]
        %v1150 = vld [vmem:[%s269 + $0x820] sm:$0xff]
        %v1151 = vld [vmem:[%s269 + $0x828] sm:$0xff]
        %v1152 = vld [vmem:[%s269 + $0x830] sm:$0xff]
        %v1153 = vld [vmem:[%s269 + $0x838] sm:$0xff]
        %v1154 = vld [vmem:[%s269 + $0x840] sm:$0xff]
        %v1155 = vld [vmem:[%s269 + $0x848] sm:$0xff]
        %v1156 = vld [vmem:[%s269 + $0x850] sm:$0xff]
        %v1157 = vld [vmem:[%s269 + $0x858] sm:$0xff]
        %v1158 = vld [vmem:[%s269 + $0x860] sm:$0xff]
        %v1159 = vld [vmem:[%s269 + $0x868] sm:$0xff]
        %v1160 = vld [vmem:[%s269 + $0x870] sm:$0xff]
        %v1161 = vld [vmem:[%s269 + $0x878] sm:$0xff]
        %v1162 = vld [vmem:[%s269 + $0x880] sm:$0xff]
        %v1163 = vld [vmem:[%s269 + $0x888] sm:$0xff]
        %v1164 = vld [vmem:[%s269 + $0x890] sm:$0xff]
        %v1165 = vld [vmem:[%s269 + $0x898] sm:$0xff]
        %v1166 = vld [vmem:[%s269 + $0x8a0] sm:$0xff]
        %v1167 = vld [vmem:[%s269 + $0x8a8] sm:$0xff]
        %v1168 = vld [vmem:[%s269 + $0x8b0] sm:$0xff]
        %v1169 = vld [vmem:[%s269 + $0x8b8] sm:$0xff]
        %v1170 = vld [vmem:[%s269 + $0x8c0] sm:$0xff]
        %v1171 = vld [vmem:[%s269 + $0x8c8] sm:$0xff]
        %v1172 = vld [vmem:[%s269 + $0x8d0] sm:$0xff]
        %v1173 = vld [vmem:[%s269 + $0x8d8] sm:$0xff]
        %v1174 = vld [vmem:[%s269 + $0x8e0] sm:$0xff]
        %v1175 = vld [vmem:[%s269 + $0x8e8] sm:$0xff]
        %v1176 = vld [vmem:[%s269 + $0x8f0] sm:$0xff]
        %v1177 = vld [vmem:[%s269 + $0x8f8] sm:$0xff]
        %1178 = vmatprep.subr.mxu0 %v936
        %1179 = vmatpush1.msra.mxu0 %v935
        %1180 = vmatprep.subr.mxu0 %v933
        %1181 = vmatpush1.msra.mxu0 %v932
        %1182 = vmatprep.subr.mxu0 %v930
        %1183 = vmatpush1.msra.mxu0 %v929
        %1184 = vmatprep.subr.mxu0 %v927
        %1185 = vmatpush1.msra.mxu0 %v926
        %1186 = vmatprep.subr.mxu0 %v924
        %1187 = vmatpush1.msra.mxu0 %v923
        %1188 = vmatprep.subr.mxu0 %v921
        %1189 = vmatpush1.msra.mxu0 %v920
        %1190 = vmatprep.subr.mxu0 %v918
        %1191 = vmatpush1.msra.mxu0 %v917
        %1192 = vmatprep.subr.mxu0 %v915
        %1193 = vmatpush1.msra.mxu0 %v914
        %1194 = vmatprep.subr.mxu0 %v912
        %1195 = vmatpush1.msra.mxu0 %v911
        %1196 = vmatprep.subr.mxu0 %v909
        %1197 = vmatpush1.msra.mxu0 %v908
        %1198 = vmatprep.subr.mxu0 %v906
        %1199 = vmatpush1.msra.mxu0 %v905
        %1200 = vmatprep.subr.mxu0 %v903
        %1201 = vmatpush1.msra.mxu0 %v902
        %1202 = vmatprep.subr.mxu0 %v900
        %1203 = vmatpush1.msra.mxu0 %v899
        %1204 = vmatprep.subr.mxu0 %v897
        %1205 = vmatpush1.msra.mxu0 %v896
        %1206 = vmatprep.subr.mxu0 %v894
        %1207 = vmatpush1.msra.mxu0 %v893
        %1208 = vmatprep.subr.mxu0 %v891
        %1209 = vmatpush1.msra.mxu0 %v890
        %1210 = vmatprep.subr.mxu0 %v984
        %1211 = vmatpush2.msra.mxu0 %v983
        %1212 = vmatprep.subr.mxu0 %v981
        %1213 = vmatpush2.msra.mxu0 %v980
        %1214 = vmatprep.subr.mxu0 %v978
        %1215 = vmatpush2.msra.mxu0 %v977
        %1216 = vmatprep.subr.mxu0 %v975
        %1217 = vmatpush2.msra.mxu0 %v974
        %1218 = vmatprep.subr.mxu0 %v972
        %1219 = vmatpush2.msra.mxu0 %v971
        %1220 = vmatprep.subr.mxu0 %v969
        %1221 = vmatpush2.msra.mxu0 %v968
        %1222 = vmatprep.subr.mxu0 %v966
        %1223 = vmatpush2.msra.mxu0 %v965
        %1224 = vmatprep.subr.mxu0 %v963
        %1225 = vmatpush2.msra.mxu0 %v962
        %1226 = vmatprep.subr.mxu0 %v960
        %1227 = vmatpush2.msra.mxu0 %v959
        %1228 = vmatprep.subr.mxu0 %v957
        %1229 = vmatpush2.msra.mxu0 %v956
        %1230 = vmatprep.subr.mxu0 %v954
        %1231 = vmatpush2.msra.mxu0 %v953
        %1232 = vmatprep.subr.mxu0 %v951
        %1233 = vmatpush2.msra.mxu0 %v950
        %1234 = vmatprep.subr.mxu0 %v948
        %1235 = vmatpush2.msra.mxu0 %v947
        %1236 = vmatprep.subr.mxu0 %v945
        %1237 = vmatpush2.msra.mxu0 %v944
        %1238 = vmatprep.subr.mxu0 %v942
        %1239 = vmatpush2.msra.mxu0 %v941
        %1240 = vmatprep.subr.mxu0 %v939
        %1241 = vmatpush2.msra.mxu0 %v938
        %1242 = vmatprep.mubr.f32.mxu0 %v603
        %1243 = vmatmul.mubr.f32.gmra.mxu0 %v602
        %v1244 = vpop.f32.mrf.mxu0
        %v1245 = vadd.f32 0.0, %v1244
        %v1246 = vpop.f32.mrf.mxu0
        %v1247 = vadd.f32 0.0, %v1246
        %1248 = vmatprep.mubr.f32.mxu0 %v609
        %1249 = vmatmul.mubr.f32.gmra.mxu0 %v608
        %v1250 = vpop.f32.mrf.mxu0
        %v1251 = vadd.f32 0.0, %v1250
        %v1252 = vpop.f32.mrf.mxu0
        %v1253 = vadd.f32 0.0, %v1252
        %1254 = vmatprep.mubr.f32.mxu0 %v615
        %1255 = vmatmul.mubr.f32.gmra.mxu0 %v614
        %v1256 = vpop.f32.mrf.mxu0
        %v1257 = vadd.f32 0.0, %v1256
        %v1258 = vpop.f32.mrf.mxu0
        %v1259 = vadd.f32 0.0, %v1258
        %1260 = vmatprep.mubr.f32.mxu0 %v621
        %1261 = vmatmul.mubr.f32.gmra.mxu0 %v620
        %v1262 = vpop.f32.mrf.mxu0
        %v1263 = vadd.f32 0.0, %v1262
        %v1264 = vpop.f32.mrf.mxu0
        %v1265 = vadd.f32 0.0, %v1264
        %1266 = vmatprep.mubr.f32.mxu0 %v627
        %1267 = vmatmul.mubr.f32.gmra.mxu0 %v626
        %v1268 = vpop.f32.mrf.mxu0
        %v1269 = vadd.f32 0.0, %v1268
        %v1270 = vpop.f32.mrf.mxu0
        %v1271 = vadd.f32 0.0, %v1270
        %1272 = vmatprep.mubr.f32.mxu0 %v633
        %1273 = vmatmul.mubr.f32.gmra.mxu0 %v632
        %v1274 = vpop.f32.mrf.mxu0
        %v1275 = vadd.f32 0.0, %v1274
        %v1276 = vpop.f32.mrf.mxu0
        %v1277 = vadd.f32 0.0, %v1276
        %1278 = vmatprep.mubr.f32.mxu0 %v639
        %1279 = vmatmul.mubr.f32.gmra.mxu0 %v638
        %v1280 = vpop.f32.mrf.mxu0
        %v1281 = vadd.f32 0.0, %v1280
        %v1282 = vpop.f32.mrf.mxu0
        %v1283 = vadd.f32 0.0, %v1282
        %1284 = vmatprep.mubr.f32.mxu0 %v645
        %1285 = vmatmul.mubr.f32.gmra.mxu0 %v644
        %v1286 = vpop.f32.mrf.mxu0
        %v1287 = vadd.f32 0.0, %v1286
        %v1288 = vpop.f32.mrf.mxu0
        %v1289 = vadd.f32 0.0, %v1288
        %1290 = vmatprep.mubr.f32.mxu0 %v651
        %1291 = vmatmul.mubr.f32.gmra.mxu0 %v650
        %v1292 = vpop.f32.mrf.mxu0
        %v1293 = vadd.f32 0.0, %v1292
        %v1294 = vpop.f32.mrf.mxu0
        %v1295 = vadd.f32 0.0, %v1294
        %1296 = vmatprep.mubr.f32.mxu0 %v657
        %1297 = vmatmul.mubr.f32.gmra.mxu0 %v656
        %v1298 = vpop.f32.mrf.mxu0
        %v1299 = vadd.f32 0.0, %v1298
        %v1300 = vpop.f32.mrf.mxu0
        %v1301 = vadd.f32 0.0, %v1300
        %1302 = vmatprep.mubr.f32.mxu0 %v663
        %1303 = vmatmul.mubr.f32.gmra.mxu0 %v662
        %v1304 = vpop.f32.mrf.mxu0
        %v1305 = vadd.f32 0.0, %v1304
        %v1306 = vpop.f32.mrf.mxu0
        %v1307 = vadd.f32 0.0, %v1306
        %1308 = vmatprep.mubr.f32.mxu0 %v669
        %1309 = vmatmul.mubr.f32.gmra.mxu0 %v668
        %v1310 = vpop.f32.mrf.mxu0
        %v1311 = vadd.f32 0.0, %v1310
        %v1312 = vpop.f32.mrf.mxu0
        %v1313 = vadd.f32 0.0, %v1312
        %1314 = vmatprep.mubr.f32.mxu0 %v675
        %1315 = vmatmul.mubr.f32.gmra.mxu0 %v674
        %v1316 = vpop.f32.mrf.mxu0
        %v1317 = vadd.f32 0.0, %v1316
        %v1318 = vpop.f32.mrf.mxu0
        %v1319 = vadd.f32 0.0, %v1318
        %1320 = vmatprep.mubr.f32.mxu0 %v681
        %1321 = vmatmul.mubr.f32.gmra.mxu0 %v680
        %v1322 = vpop.f32.mrf.mxu0
        %v1323 = vadd.f32 0.0, %v1322
        %v1324 = vpop.f32.mrf.mxu0
        %v1325 = vadd.f32 0.0, %v1324
        %1326 = vmatprep.mubr.f32.mxu0 %v687
        %1327 = vmatmul.mubr.f32.gmra.mxu0 %v686
        %v1328 = vpop.f32.mrf.mxu0
        %v1329 = vadd.f32 0.0, %v1328
        %v1330 = vpop.f32.mrf.mxu0
        %v1331 = vadd.f32 0.0, %v1330
        %1332 = vmatprep.mubr.f32.mxu0 %v693
        %1333 = vmatmul.mubr.f32.gmra.mxu0 %v692
        %v1334 = vpop.f32.mrf.mxu0
        %v1335 = vadd.f32 0.0, %v1334
        %v1336 = vpop.f32.mrf.mxu0
        %v1337 = vadd.f32 0.0, %v1336
        %1338 = vmatprep.mubr.f32.mxu0 %v699
        %1339 = vmatmul.mubr.f32.gmra.mxu0 %v698
        %v1340 = vpop.f32.mrf.mxu0
        %v1341 = vadd.f32 0.0, %v1340
        %v1342 = vpop.f32.mrf.mxu0
        %v1343 = vadd.f32 0.0, %v1342
        %1344 = vmatprep.mubr.f32.mxu0 %v705
        %1345 = vmatmul.mubr.f32.gmra.mxu0 %v704
        %v1346 = vpop.f32.mrf.mxu0
        %v1347 = vadd.f32 0.0, %v1346
        %v1348 = vpop.f32.mrf.mxu0
        %v1349 = vadd.f32 0.0, %v1348
        %1350 = vmatprep.mubr.f32.mxu0 %v711
        %1351 = vmatmul.mubr.f32.gmra.mxu0 %v710
        %v1352 = vpop.f32.mrf.mxu0
        %v1353 = vadd.f32 0.0, %v1352
        %v1354 = vpop.f32.mrf.mxu0
        %v1355 = vadd.f32 0.0, %v1354
        %1356 = vmatprep.mubr.f32.mxu0 %v717
        %1357 = vmatmul.mubr.f32.gmra.mxu0 %v716
        %v1358 = vpop.f32.mrf.mxu0
        %v1359 = vadd.f32 0.0, %v1358
        %v1360 = vpop.f32.mrf.mxu0
        %v1361 = vadd.f32 0.0, %v1360
        %1362 = vmatprep.mubr.f32.mxu0 %v723
        %1363 = vmatmul.mubr.f32.gmra.mxu0 %v722
        %v1364 = vpop.f32.mrf.mxu0
        %v1365 = vadd.f32 0.0, %v1364
        %v1366 = vpop.f32.mrf.mxu0
        %v1367 = vadd.f32 0.0, %v1366
        %1368 = vmatprep.mubr.f32.mxu0 %v729
        %1369 = vmatmul.mubr.f32.gmra.mxu0 %v728
        %v1370 = vpop.f32.mrf.mxu0
        %v1371 = vadd.f32 0.0, %v1370
        %v1372 = vpop.f32.mrf.mxu0
        %v1373 = vadd.f32 0.0, %v1372
        %1374 = vmatprep.mubr.f32.mxu0 %v735
        %1375 = vmatmul.mubr.f32.gmra.mxu0 %v734
        %v1376 = vpop.f32.mrf.mxu0
        %v1377 = vadd.f32 0.0, %v1376
        %v1378 = vpop.f32.mrf.mxu0
        %v1379 = vadd.f32 0.0, %v1378
        %1380 = vmatprep.mubr.f32.mxu0 %v741
        %1381 = vmatmul.mubr.f32.gmra.mxu0 %v740
        %v1382 = vpop.f32.mrf.mxu0
        %v1383 = vadd.f32 0.0, %v1382
        %v1384 = vpop.f32.mrf.mxu0
        %v1385 = vadd.f32 0.0, %v1384
        %1386 = vmatprep.mubr.f32.mxu0 %v747
        %1387 = vmatmul.mubr.f32.gmra.mxu0 %v746
        %v1388 = vpop.f32.mrf.mxu0
        %v1389 = vadd.f32 0.0, %v1388
        %v1390 = vpop.f32.mrf.mxu0
        %v1391 = vadd.f32 0.0, %v1390
        %1392 = vmatprep.mubr.f32.mxu0 %v753
        %1393 = vmatmul.mubr.f32.gmra.mxu0 %v752
        %v1394 = vpop.f32.mrf.mxu0
        %v1395 = vadd.f32 0.0, %v1394
        %v1396 = vpop.f32.mrf.mxu0
        %v1397 = vadd.f32 0.0, %v1396
        %1398 = vmatprep.mubr.f32.mxu0 %v759
        %1399 = vmatmul.mubr.f32.gmra.mxu0 %v758
        %v1400 = vpop.f32.mrf.mxu0
        %v1401 = vadd.f32 0.0, %v1400
        %v1402 = vpop.f32.mrf.mxu0
        %v1403 = vadd.f32 0.0, %v1402
        %1404 = vmatprep.mubr.f32.mxu0 %v765
        %1405 = vmatmul.mubr.f32.gmra.mxu0 %v764
        %v1406 = vpop.f32.mrf.mxu0
        %v1407 = vadd.f32 0.0, %v1406
        %v1408 = vpop.f32.mrf.mxu0
        %v1409 = vadd.f32 0.0, %v1408
        %1410 = vmatprep.mubr.f32.mxu0 %v771
        %1411 = vmatmul.mubr.f32.gmra.mxu0 %v770
        %v1412 = vpop.f32.mrf.mxu0
        %v1413 = vadd.f32 0.0, %v1412
        %v1414 = vpop.f32.mrf.mxu0
        %v1415 = vadd.f32 0.0, %v1414
        %1416 = vmatprep.mubr.f32.mxu0 %v777
        %1417 = vmatmul.mubr.f32.gmra.mxu0 %v776
        %v1418 = vpop.f32.mrf.mxu0
        %v1419 = vadd.f32 0.0, %v1418
        %v1420 = vpop.f32.mrf.mxu0
        %v1421 = vadd.f32 0.0, %v1420
        %1422 = vmatprep.mubr.f32.mxu0 %v783
        %1423 = vmatmul.mubr.f32.gmra.mxu0 %v782
        %v1424 = vpop.f32.mrf.mxu0
        %v1425 = vadd.f32 0.0, %v1424
        %v1426 = vpop.f32.mrf.mxu0
        %v1427 = vadd.f32 0.0, %v1426
        %1428 = vmatprep.mubr.f32.mxu0 %v789
        %1429 = vmatmul.mubr.f32.gmra.mxu0 %v788
        %v1430 = vpop.f32.mrf.mxu0
        %v1431 = vadd.f32 0.0, %v1430
        %v1432 = vpop.f32.mrf.mxu0
        %v1433 = vadd.f32 0.0, %v1432
        %1434 = vmatprep.mubr.f32.mxu0 %v795
        %1435 = vmatmul.mubr.f32.gmra.mxu0 %v794
        %v1436 = vpop.f32.mrf.mxu0
        %v1437 = vadd.f32 0.0, %v1436
        %v1438 = vpop.f32.mrf.mxu0
        %v1439 = vadd.f32 0.0, %v1438
        %1440 = vmatprep.mubr.f32.mxu0 %v801
        %1441 = vmatmul.mubr.f32.gmra.mxu0 %v800
        %v1442 = vpop.f32.mrf.mxu0
        %v1443 = vadd.f32 0.0, %v1442
        %v1444 = vpop.f32.mrf.mxu0
        %v1445 = vadd.f32 0.0, %v1444
        %1446 = vmatprep.mubr.f32.mxu0 %v807
        %1447 = vmatmul.mubr.f32.gmra.mxu0 %v806
        %v1448 = vpop.f32.mrf.mxu0
        %v1449 = vadd.f32 0.0, %v1448
        %v1450 = vpop.f32.mrf.mxu0
        %v1451 = vadd.f32 0.0, %v1450
        %1452 = vmatprep.mubr.f32.mxu0 %v813
        %1453 = vmatmul.mubr.f32.gmra.mxu0 %v812
        %v1454 = vpop.f32.mrf.mxu0
        %v1455 = vadd.f32 0.0, %v1454
        %v1456 = vpop.f32.mrf.mxu0
        %v1457 = vadd.f32 0.0, %v1456
        %1458 = vmatprep.mubr.f32.mxu0 %v819
        %1459 = vmatmul.mubr.f32.gmra.mxu0 %v818
        %v1460 = vpop.f32.mrf.mxu0
        %v1461 = vadd.f32 0.0, %v1460
        %v1462 = vpop.f32.mrf.mxu0
        %v1463 = vadd.f32 0.0, %v1462
        %1464 = vmatprep.mubr.f32.mxu0 %v825
        %1465 = vmatmul.mubr.f32.gmra.mxu0 %v824
        %v1466 = vpop.f32.mrf.mxu0
        %v1467 = vadd.f32 0.0, %v1466
        %v1468 = vpop.f32.mrf.mxu0
        %v1469 = vadd.f32 0.0, %v1468
        %1470 = vmatprep.mubr.f32.mxu0 %v831
        %1471 = vmatmul.mubr.f32.gmra.mxu0 %v830
        %v1472 = vpop.f32.mrf.mxu0
        %v1473 = vadd.f32 0.0, %v1472
        %v1474 = vpop.f32.mrf.mxu0
        %v1475 = vadd.f32 0.0, %v1474
        %1476 = vmatprep.mubr.f32.mxu0 %v837
        %1477 = vmatmul.mubr.f32.gmra.mxu0 %v836
        %v1478 = vpop.f32.mrf.mxu0
        %v1479 = vadd.f32 0.0, %v1478
        %v1480 = vpop.f32.mrf.mxu0
        %v1481 = vadd.f32 0.0, %v1480
        %1482 = vmatprep.mubr.f32.mxu0 %v843
        %1483 = vmatmul.mubr.f32.gmra.mxu0 %v842
        %v1484 = vpop.f32.mrf.mxu0
        %v1485 = vadd.f32 0.0, %v1484
        %v1486 = vpop.f32.mrf.mxu0
        %v1487 = vadd.f32 0.0, %v1486
        %1488 = vmatprep.mubr.f32.mxu0 %v849
        %1489 = vmatmul.mubr.f32.gmra.mxu0 %v848
        %v1490 = vpop.f32.mrf.mxu0
        %v1491 = vadd.f32 0.0, %v1490
        %v1492 = vpop.f32.mrf.mxu0
        %v1493 = vadd.f32 0.0, %v1492
        %1494 = vmatprep.mubr.f32.mxu0 %v855
        %1495 = vmatmul.mubr.f32.gmra.mxu0 %v854
        %v1496 = vpop.f32.mrf.mxu0
        %v1497 = vadd.f32 0.0, %v1496
        %v1498 = vpop.f32.mrf.mxu0
        %v1499 = vadd.f32 0.0, %v1498
        %1500 = vmatprep.mubr.f32.mxu0 %v861
        %1501 = vmatmul.mubr.f32.gmra.mxu0 %v860
        %v1502 = vpop.f32.mrf.mxu0
        %v1503 = vadd.f32 0.0, %v1502
        %v1504 = vpop.f32.mrf.mxu0
        %v1505 = vadd.f32 0.0, %v1504
        %1506 = vmatprep.mubr.f32.mxu0 %v867
        %1507 = vmatmul.mubr.f32.gmra.mxu0 %v866
        %v1508 = vpop.f32.mrf.mxu0
        %v1509 = vadd.f32 0.0, %v1508
        %v1510 = vpop.f32.mrf.mxu0
        %v1511 = vadd.f32 0.0, %v1510
        %1512 = vmatprep.mubr.f32.mxu0 %v873
        %1513 = vmatmul.mubr.f32.gmra.mxu0 %v872
        %v1514 = vpop.f32.mrf.mxu0
        %v1515 = vadd.f32 0.0, %v1514
        %v1516 = vpop.f32.mrf.mxu0
        %v1517 = vadd.f32 0.0, %v1516
        %1518 = vmatprep.mubr.f32.mxu0 %v879
        %1519 = vmatmul.mubr.f32.gmra.mxu0 %v878
        %v1520 = vpop.f32.mrf.mxu0
        %v1521 = vadd.f32 0.0, %v1520
        %v1522 = vpop.f32.mrf.mxu0
        %v1523 = vadd.f32 0.0, %v1522
        %1524 = vmatprep.mubr.f32.mxu0 %v885
        %1525 = vmatmul.mubr.f32.gmra.mxu0 %v884
        %v1526 = vpop.f32.mrf.mxu0
        %v1527 = vadd.f32 0.0, %v1526
        %v1528 = vpop.f32.mrf.mxu0
        %v1529 = vadd.f32 0.0, %v1528
        %1530 = vdwg.mxu0
        %1531 = vmatprep.subr.mxu0 %v1032
        %1532 = vmatpush1.msra.mxu0 %v1031
        %1533 = vmatprep.subr.mxu0 %v1029
        %1534 = vmatpush1.msra.mxu0 %v1028
        %1535 = vmatprep.subr.mxu0 %v1026
        %1536 = vmatpush1.msra.mxu0 %v1025
        %1537 = vmatprep.subr.mxu0 %v1023
        %1538 = vmatpush1.msra.mxu0 %v1022
        %1539 = vmatprep.subr.mxu0 %v1020
        %1540 = vmatpush1.msra.mxu0 %v1019
        %1541 = vmatprep.subr.mxu0 %v1017
        %1542 = vmatpush1.msra.mxu0 %v1016
        %1543 = vmatprep.subr.mxu0 %v1014
        %1544 = vmatpush1.msra.mxu0 %v1013
        %1545 = vmatprep.subr.mxu0 %v1011
        %1546 = vmatpush1.msra.mxu0 %v1010
        %1547 = vmatprep.subr.mxu0 %v1008
        %1548 = vmatpush1.msra.mxu0 %v1007
        %1549 = vmatprep.subr.mxu0 %v1005
        %1550 = vmatpush1.msra.mxu0 %v1004
        %1551 = vmatprep.subr.mxu0 %v1002
        %1552 = vmatpush1.msra.mxu0 %v1001
        %1553 = vmatprep.subr.mxu0 %v999
        %1554 = vmatpush1.msra.mxu0 %v998
        %1555 = vmatprep.subr.mxu0 %v996
        %1556 = vmatpush1.msra.mxu0 %v995
        %1557 = vmatprep.subr.mxu0 %v993
        %1558 = vmatpush1.msra.mxu0 %v992
        %1559 = vmatprep.subr.mxu0 %v990
        %1560 = vmatpush1.msra.mxu0 %v989
        %1561 = vmatprep.subr.mxu0 %v987
        %1562 = vmatpush1.msra.mxu0 %v986
        %1563 = vmatprep.subr.mxu0 %v1080
        %1564 = vmatpush2.msra.mxu0 %v1079
        %1565 = vmatprep.subr.mxu0 %v1077
        %1566 = vmatpush2.msra.mxu0 %v1076
        %1567 = vmatprep.subr.mxu0 %v1074
        %1568 = vmatpush2.msra.mxu0 %v1073
        %1569 = vmatprep.subr.mxu0 %v1071
        %1570 = vmatpush2.msra.mxu0 %v1070
        %1571 = vmatprep.subr.mxu0 %v1068
        %1572 = vmatpush2.msra.mxu0 %v1067
        %1573 = vmatprep.subr.mxu0 %v1065
        %1574 = vmatpush2.msra.mxu0 %v1064
        %1575 = vmatprep.subr.mxu0 %v1062
        %1576 = vmatpush2.msra.mxu0 %v1061
        %1577 = vmatprep.subr.mxu0 %v1059
        %1578 = vmatpush2.msra.mxu0 %v1058
        %1579 = vmatprep.subr.mxu0 %v1056
        %1580 = vmatpush2.msra.mxu0 %v1055
        %1581 = vmatprep.subr.mxu0 %v1053
        %1582 = vmatpush2.msra.mxu0 %v1052
        %1583 = vmatprep.subr.mxu0 %v1050
        %1584 = vmatpush2.msra.mxu0 %v1049
        %1585 = vmatprep.subr.mxu0 %v1047
        %1586 = vmatpush2.msra.mxu0 %v1046
        %1587 = vmatprep.subr.mxu0 %v1044
        %1588 = vmatpush2.msra.mxu0 %v1043
        %1589 = vmatprep.subr.mxu0 %v1041
        %1590 = vmatpush2.msra.mxu0 %v1040
        %1591 = vmatprep.subr.mxu0 %v1038
        %1592 = vmatpush2.msra.mxu0 %v1037
        %1593 = vmatprep.subr.mxu0 %v1035
        %1594 = vmatpush2.msra.mxu0 %v1034
        %1595 = vmatprep.mubr.f32.mxu0 %v605
        %1596 = vmatmul.mubr.f32.gmra.mxu0 %v604
        %v1597 = vpop.f32.mrf.mxu0
        %v1598 = vadd.f32 %v1245, %v1597
        %v1599 = vpop.f32.mrf.mxu0
        %v1600 = vadd.f32 %v1247, %v1599
        %1601 = vmatprep.mubr.f32.mxu0 %v611
        %1602 = vmatmul.mubr.f32.gmra.mxu0 %v610
        %v1603 = vpop.f32.mrf.mxu0
        %v1604 = vadd.f32 %v1251, %v1603
        %v1605 = vpop.f32.mrf.mxu0
        %v1606 = vadd.f32 %v1253, %v1605
        %1607 = vmatprep.mubr.f32.mxu0 %v617
        %1608 = vmatmul.mubr.f32.gmra.mxu0 %v616
        %v1609 = vpop.f32.mrf.mxu0
        %v1610 = vadd.f32 %v1257, %v1609
        %v1611 = vpop.f32.mrf.mxu0
        %v1612 = vadd.f32 %v1259, %v1611
        %1613 = vmatprep.mubr.f32.mxu0 %v623
        %1614 = vmatmul.mubr.f32.gmra.mxu0 %v622
        %v1615 = vpop.f32.mrf.mxu0
        %v1616 = vadd.f32 %v1263, %v1615
        %v1617 = vpop.f32.mrf.mxu0
        %v1618 = vadd.f32 %v1265, %v1617
        %1619 = vmatprep.mubr.f32.mxu0 %v629
        %1620 = vmatmul.mubr.f32.gmra.mxu0 %v628
        %v1621 = vpop.f32.mrf.mxu0
        %v1622 = vadd.f32 %v1269, %v1621
        %v1623 = vpop.f32.mrf.mxu0
        %v1624 = vadd.f32 %v1271, %v1623
        %1625 = vmatprep.mubr.f32.mxu0 %v635
        %1626 = vmatmul.mubr.f32.gmra.mxu0 %v634
        %v1627 = vpop.f32.mrf.mxu0
        %v1628 = vadd.f32 %v1275, %v1627
        %v1629 = vpop.f32.mrf.mxu0
        %v1630 = vadd.f32 %v1277, %v1629
        %1631 = vmatprep.mubr.f32.mxu0 %v641
        %1632 = vmatmul.mubr.f32.gmra.mxu0 %v640
        %v1633 = vpop.f32.mrf.mxu0
        %v1634 = vadd.f32 %v1281, %v1633
        %v1635 = vpop.f32.mrf.mxu0
        %v1636 = vadd.f32 %v1283, %v1635
        %1637 = vmatprep.mubr.f32.mxu0 %v647
        %1638 = vmatmul.mubr.f32.gmra.mxu0 %v646
        %v1639 = vpop.f32.mrf.mxu0
        %v1640 = vadd.f32 %v1287, %v1639
        %v1641 = vpop.f32.mrf.mxu0
        %v1642 = vadd.f32 %v1289, %v1641
        %1643 = vmatprep.mubr.f32.mxu0 %v653
        %1644 = vmatmul.mubr.f32.gmra.mxu0 %v652
        %v1645 = vpop.f32.mrf.mxu0
        %v1646 = vadd.f32 %v1293, %v1645
        %v1647 = vpop.f32.mrf.mxu0
        %v1648 = vadd.f32 %v1295, %v1647
        %1649 = vmatprep.mubr.f32.mxu0 %v659
        %1650 = vmatmul.mubr.f32.gmra.mxu0 %v658
        %v1651 = vpop.f32.mrf.mxu0
        %v1652 = vadd.f32 %v1299, %v1651
        %v1653 = vpop.f32.mrf.mxu0
        %v1654 = vadd.f32 %v1301, %v1653
        %1655 = vmatprep.mubr.f32.mxu0 %v665
        %1656 = vmatmul.mubr.f32.gmra.mxu0 %v664
        %v1657 = vpop.f32.mrf.mxu0
        %v1658 = vadd.f32 %v1305, %v1657
        %v1659 = vpop.f32.mrf.mxu0
        %v1660 = vadd.f32 %v1307, %v1659
        %1661 = vmatprep.mubr.f32.mxu0 %v671
        %1662 = vmatmul.mubr.f32.gmra.mxu0 %v670
        %v1663 = vpop.f32.mrf.mxu0
        %v1664 = vadd.f32 %v1311, %v1663
        %v1665 = vpop.f32.mrf.mxu0
        %v1666 = vadd.f32 %v1313, %v1665
        %1667 = vmatprep.mubr.f32.mxu0 %v677
        %1668 = vmatmul.mubr.f32.gmra.mxu0 %v676
        %v1669 = vpop.f32.mrf.mxu0
        %v1670 = vadd.f32 %v1317, %v1669
        %v1671 = vpop.f32.mrf.mxu0
        %v1672 = vadd.f32 %v1319, %v1671
        %1673 = vmatprep.mubr.f32.mxu0 %v683
        %1674 = vmatmul.mubr.f32.gmra.mxu0 %v682
        %v1675 = vpop.f32.mrf.mxu0
        %v1676 = vadd.f32 %v1323, %v1675
        %v1677 = vpop.f32.mrf.mxu0
        %v1678 = vadd.f32 %v1325, %v1677
        %1679 = vmatprep.mubr.f32.mxu0 %v689
        %1680 = vmatmul.mubr.f32.gmra.mxu0 %v688
        %v1681 = vpop.f32.mrf.mxu0
        %v1682 = vadd.f32 %v1329, %v1681
        %v1683 = vpop.f32.mrf.mxu0
        %v1684 = vadd.f32 %v1331, %v1683
        %1685 = vmatprep.mubr.f32.mxu0 %v695
        %1686 = vmatmul.mubr.f32.gmra.mxu0 %v694
        %v1687 = vpop.f32.mrf.mxu0
        %v1688 = vadd.f32 %v1335, %v1687
        %v1689 = vpop.f32.mrf.mxu0
        %v1690 = vadd.f32 %v1337, %v1689
        %1691 = vmatprep.mubr.f32.mxu0 %v701
        %1692 = vmatmul.mubr.f32.gmra.mxu0 %v700
        %v1693 = vpop.f32.mrf.mxu0
        %v1694 = vadd.f32 %v1341, %v1693
        %v1695 = vpop.f32.mrf.mxu0
        %v1696 = vadd.f32 %v1343, %v1695
        %1697 = vmatprep.mubr.f32.mxu0 %v707
        %1698 = vmatmul.mubr.f32.gmra.mxu0 %v706
        %v1699 = vpop.f32.mrf.mxu0
        %v1700 = vadd.f32 %v1347, %v1699
        %v1701 = vpop.f32.mrf.mxu0
        %v1702 = vadd.f32 %v1349, %v1701
        %1703 = vmatprep.mubr.f32.mxu0 %v713
        %1704 = vmatmul.mubr.f32.gmra.mxu0 %v712
        %v1705 = vpop.f32.mrf.mxu0
        %v1706 = vadd.f32 %v1353, %v1705
        %v1707 = vpop.f32.mrf.mxu0
        %v1708 = vadd.f32 %v1355, %v1707
        %1709 = vmatprep.mubr.f32.mxu0 %v719
        %1710 = vmatmul.mubr.f32.gmra.mxu0 %v718
        %v1711 = vpop.f32.mrf.mxu0
        %v1712 = vadd.f32 %v1359, %v1711
        %v1713 = vpop.f32.mrf.mxu0
        %v1714 = vadd.f32 %v1361, %v1713
        %1715 = vmatprep.mubr.f32.mxu0 %v725
        %1716 = vmatmul.mubr.f32.gmra.mxu0 %v724
        %v1717 = vpop.f32.mrf.mxu0
        %v1718 = vadd.f32 %v1365, %v1717
        %v1719 = vpop.f32.mrf.mxu0
        %v1720 = vadd.f32 %v1367, %v1719
        %1721 = vmatprep.mubr.f32.mxu0 %v731
        %1722 = vmatmul.mubr.f32.gmra.mxu0 %v730
        %v1723 = vpop.f32.mrf.mxu0
        %v1724 = vadd.f32 %v1371, %v1723
        %v1725 = vpop.f32.mrf.mxu0
        %v1726 = vadd.f32 %v1373, %v1725
        %1727 = vmatprep.mubr.f32.mxu0 %v737
        %1728 = vmatmul.mubr.f32.gmra.mxu0 %v736
        %v1729 = vpop.f32.mrf.mxu0
        %v1730 = vadd.f32 %v1377, %v1729
        %v1731 = vpop.f32.mrf.mxu0
        %v1732 = vadd.f32 %v1379, %v1731
        %1733 = vmatprep.mubr.f32.mxu0 %v743
        %1734 = vmatmul.mubr.f32.gmra.mxu0 %v742
        %v1735 = vpop.f32.mrf.mxu0
        %v1736 = vadd.f32 %v1383, %v1735
        %v1737 = vpop.f32.mrf.mxu0
        %v1738 = vadd.f32 %v1385, %v1737
        %1739 = vmatprep.mubr.f32.mxu0 %v749
        %1740 = vmatmul.mubr.f32.gmra.mxu0 %v748
        %v1741 = vpop.f32.mrf.mxu0
        %v1742 = vadd.f32 %v1389, %v1741
        %v1743 = vpop.f32.mrf.mxu0
        %v1744 = vadd.f32 %v1391, %v1743
        %1745 = vmatprep.mubr.f32.mxu0 %v755
        %1746 = vmatmul.mubr.f32.gmra.mxu0 %v754
        %v1747 = vpop.f32.mrf.mxu0
        %v1748 = vadd.f32 %v1395, %v1747
        %v1749 = vpop.f32.mrf.mxu0
        %v1750 = vadd.f32 %v1397, %v1749
        %1751 = vmatprep.mubr.f32.mxu0 %v761
        %1752 = vmatmul.mubr.f32.gmra.mxu0 %v760
        %v1753 = vpop.f32.mrf.mxu0
        %v1754 = vadd.f32 %v1401, %v1753
        %v1755 = vpop.f32.mrf.mxu0
        %v1756 = vadd.f32 %v1403, %v1755
        %1757 = vmatprep.mubr.f32.mxu0 %v767
        %1758 = vmatmul.mubr.f32.gmra.mxu0 %v766
        %v1759 = vpop.f32.mrf.mxu0
        %v1760 = vadd.f32 %v1407, %v1759
        %v1761 = vpop.f32.mrf.mxu0
        %v1762 = vadd.f32 %v1409, %v1761
        %1763 = vmatprep.mubr.f32.mxu0 %v773
        %1764 = vmatmul.mubr.f32.gmra.mxu0 %v772
        %v1765 = vpop.f32.mrf.mxu0
        %v1766 = vadd.f32 %v1413, %v1765
        %v1767 = vpop.f32.mrf.mxu0
        %v1768 = vadd.f32 %v1415, %v1767
        %1769 = vmatprep.mubr.f32.mxu0 %v779
        %1770 = vmatmul.mubr.f32.gmra.mxu0 %v778
        %v1771 = vpop.f32.mrf.mxu0
        %v1772 = vadd.f32 %v1419, %v1771
        %v1773 = vpop.f32.mrf.mxu0
        %v1774 = vadd.f32 %v1421, %v1773
        %1775 = vmatprep.mubr.f32.mxu0 %v785
        %1776 = vmatmul.mubr.f32.gmra.mxu0 %v784
        %v1777 = vpop.f32.mrf.mxu0
        %v1778 = vadd.f32 %v1425, %v1777
        %v1779 = vpop.f32.mrf.mxu0
        %v1780 = vadd.f32 %v1427, %v1779
        %1781 = vmatprep.mubr.f32.mxu0 %v791
        %1782 = vmatmul.mubr.f32.gmra.mxu0 %v790
        %v1783 = vpop.f32.mrf.mxu0
        %v1784 = vadd.f32 %v1431, %v1783
        %v1785 = vpop.f32.mrf.mxu0
        %v1786 = vadd.f32 %v1433, %v1785
        %1787 = vmatprep.mubr.f32.mxu0 %v797
        %1788 = vmatmul.mubr.f32.gmra.mxu0 %v796
        %v1789 = vpop.f32.mrf.mxu0
        %v1790 = vadd.f32 %v1437, %v1789
        %v1791 = vpop.f32.mrf.mxu0
        %v1792 = vadd.f32 %v1439, %v1791
        %1793 = vmatprep.mubr.f32.mxu0 %v803
        %1794 = vmatmul.mubr.f32.gmra.mxu0 %v802
        %v1795 = vpop.f32.mrf.mxu0
        %v1796 = vadd.f32 %v1443, %v1795
        %v1797 = vpop.f32.mrf.mxu0
        %v1798 = vadd.f32 %v1445, %v1797
        %1799 = vmatprep.mubr.f32.mxu0 %v809
        %1800 = vmatmul.mubr.f32.gmra.mxu0 %v808
        %v1801 = vpop.f32.mrf.mxu0
        %v1802 = vadd.f32 %v1449, %v1801
        %v1803 = vpop.f32.mrf.mxu0
        %v1804 = vadd.f32 %v1451, %v1803
        %1805 = vmatprep.mubr.f32.mxu0 %v815
        %1806 = vmatmul.mubr.f32.gmra.mxu0 %v814
        %v1807 = vpop.f32.mrf.mxu0
        %v1808 = vadd.f32 %v1455, %v1807
        %v1809 = vpop.f32.mrf.mxu0
        %v1810 = vadd.f32 %v1457, %v1809
        %1811 = vmatprep.mubr.f32.mxu0 %v821
        %1812 = vmatmul.mubr.f32.gmra.mxu0 %v820
        %v1813 = vpop.f32.mrf.mxu0
        %v1814 = vadd.f32 %v1461, %v1813
        %v1815 = vpop.f32.mrf.mxu0
        %v1816 = vadd.f32 %v1463, %v1815
        %1817 = vmatprep.mubr.f32.mxu0 %v827
        %1818 = vmatmul.mubr.f32.gmra.mxu0 %v826
        %v1819 = vpop.f32.mrf.mxu0
        %v1820 = vadd.f32 %v1467, %v1819
        %v1821 = vpop.f32.mrf.mxu0
        %v1822 = vadd.f32 %v1469, %v1821
        %1823 = vmatprep.mubr.f32.mxu0 %v833
        %1824 = vmatmul.mubr.f32.gmra.mxu0 %v832
        %v1825 = vpop.f32.mrf.mxu0
        %v1826 = vadd.f32 %v1473, %v1825
        %v1827 = vpop.f32.mrf.mxu0
        %v1828 = vadd.f32 %v1475, %v1827
        %1829 = vmatprep.mubr.f32.mxu0 %v839
        %1830 = vmatmul.mubr.f32.gmra.mxu0 %v838
        %v1831 = vpop.f32.mrf.mxu0
        %v1832 = vadd.f32 %v1479, %v1831
        %v1833 = vpop.f32.mrf.mxu0
        %v1834 = vadd.f32 %v1481, %v1833
        %1835 = vmatprep.mubr.f32.mxu0 %v845
        %1836 = vmatmul.mubr.f32.gmra.mxu0 %v844
        %v1837 = vpop.f32.mrf.mxu0
        %v1838 = vadd.f32 %v1485, %v1837
        %v1839 = vpop.f32.mrf.mxu0
        %v1840 = vadd.f32 %v1487, %v1839
        %1841 = vmatprep.mubr.f32.mxu0 %v851
        %1842 = vmatmul.mubr.f32.gmra.mxu0 %v850
        %v1843 = vpop.f32.mrf.mxu0
        %v1844 = vadd.f32 %v1491, %v1843
        %v1845 = vpop.f32.mrf.mxu0
        %v1846 = vadd.f32 %v1493, %v1845
        %1847 = vmatprep.mubr.f32.mxu0 %v857
        %1848 = vmatmul.mubr.f32.gmra.mxu0 %v856
        %v1849 = vpop.f32.mrf.mxu0
        %v1850 = vadd.f32 %v1497, %v1849
        %v1851 = vpop.f32.mrf.mxu0
        %v1852 = vadd.f32 %v1499, %v1851
        %1853 = vmatprep.mubr.f32.mxu0 %v863
        %1854 = vmatmul.mubr.f32.gmra.mxu0 %v862
        %v1855 = vpop.f32.mrf.mxu0
        %v1856 = vadd.f32 %v1503, %v1855
        %v1857 = vpop.f32.mrf.mxu0
        %v1858 = vadd.f32 %v1505, %v1857
        %1859 = vmatprep.mubr.f32.mxu0 %v869
        %1860 = vmatmul.mubr.f32.gmra.mxu0 %v868
        %v1861 = vpop.f32.mrf.mxu0
        %v1862 = vadd.f32 %v1509, %v1861
        %v1863 = vpop.f32.mrf.mxu0
        %v1864 = vadd.f32 %v1511, %v1863
        %1865 = vmatprep.mubr.f32.mxu0 %v875
        %1866 = vmatmul.mubr.f32.gmra.mxu0 %v874
        %v1867 = vpop.f32.mrf.mxu0
        %v1868 = vadd.f32 %v1515, %v1867
        %v1869 = vpop.f32.mrf.mxu0
        %v1870 = vadd.f32 %v1517, %v1869
        %1871 = vmatprep.mubr.f32.mxu0 %v881
        %1872 = vmatmul.mubr.f32.gmra.mxu0 %v880
        %v1873 = vpop.f32.mrf.mxu0
        %v1874 = vadd.f32 %v1521, %v1873
        %v1875 = vpop.f32.mrf.mxu0
        %v1876 = vadd.f32 %v1523, %v1875
        %1877 = vmatprep.mubr.f32.mxu0 %v887
        %1878 = vmatmul.mubr.f32.gmra.mxu0 %v886
        %v1879 = vpop.f32.mrf.mxu0
        %v1880 = vadd.f32 %v1527, %v1879
        %v1881 = vpop.f32.mrf.mxu0
        %v1882 = vadd.f32 %v1529, %v1881
        %1883 = vdwg.mxu0
        %1884 = vmatprep.subr.mxu0 %v1128
        %1885 = vmatpush1.msra.mxu0 %v1127
        %1886 = vmatprep.subr.mxu0 %v1125
        %1887 = vmatpush1.msra.mxu0 %v1124
        %1888 = vmatprep.subr.mxu0 %v1122
        %1889 = vmatpush1.msra.mxu0 %v1121
        %1890 = vmatprep.subr.mxu0 %v1119
        %1891 = vmatpush1.msra.mxu0 %v1118
        %1892 = vmatprep.subr.mxu0 %v1116
        %1893 = vmatpush1.msra.mxu0 %v1115
        %1894 = vmatprep.subr.mxu0 %v1113
        %1895 = vmatpush1.msra.mxu0 %v1112
        %1896 = vmatprep.subr.mxu0 %v1110
        %1897 = vmatpush1.msra.mxu0 %v1109
        %1898 = vmatprep.subr.mxu0 %v1107
        %1899 = vmatpush1.msra.mxu0 %v1106
        %1900 = vmatprep.subr.mxu0 %v1104
        %1901 = vmatpush1.msra.mxu0 %v1103
        %1902 = vmatprep.subr.mxu0 %v1101
        %1903 = vmatpush1.msra.mxu0 %v1100
        %1904 = vmatprep.subr.mxu0 %v1098
        %1905 = vmatpush1.msra.mxu0 %v1097
        %1906 = vmatprep.subr.mxu0 %v1095
        %1907 = vmatpush1.msra.mxu0 %v1094
        %1908 = vmatprep.subr.mxu0 %v1092
        %1909 = vmatpush1.msra.mxu0 %v1091
        %1910 = vmatprep.subr.mxu0 %v1089
        %1911 = vmatpush1.msra.mxu0 %v1088
        %1912 = vmatprep.subr.mxu0 %v1086
        %1913 = vmatpush1.msra.mxu0 %v1085
        %1914 = vmatprep.subr.mxu0 %v1083
        %1915 = vmatpush1.msra.mxu0 %v1082
        %1916 = vmatprep.subr.mxu0 %v1176
        %1917 = vmatpush2.msra.mxu0 %v1175
        %1918 = vmatprep.subr.mxu0 %v1173
        %1919 = vmatpush2.msra.mxu0 %v1172
        %1920 = vmatprep.subr.mxu0 %v1170
        %1921 = vmatpush2.msra.mxu0 %v1169
        %1922 = vmatprep.subr.mxu0 %v1167
        %1923 = vmatpush2.msra.mxu0 %v1166
        %1924 = vmatprep.subr.mxu0 %v1164
        %1925 = vmatpush2.msra.mxu0 %v1163
        %1926 = vmatprep.subr.mxu0 %v1161
        %1927 = vmatpush2.msra.mxu0 %v1160
        %1928 = vmatprep.subr.mxu0 %v1158
        %1929 = vmatpush2.msra.mxu0 %v1157
        %1930 = vmatprep.subr.mxu0 %v1155
        %1931 = vmatpush2.msra.mxu0 %v1154
        %1932 = vmatprep.subr.mxu0 %v1152
        %1933 = vmatpush2.msra.mxu0 %v1151
        %1934 = vmatprep.subr.mxu0 %v1149
        %1935 = vmatpush2.msra.mxu0 %v1148
        %1936 = vmatprep.subr.mxu0 %v1146
        %1937 = vmatpush2.msra.mxu0 %v1145
        %1938 = vmatprep.subr.mxu0 %v1143
        %1939 = vmatpush2.msra.mxu0 %v1142
        %1940 = vmatprep.subr.mxu0 %v1140
        %1941 = vmatpush2.msra.mxu0 %v1139
        %1942 = vmatprep.subr.mxu0 %v1137
        %1943 = vmatpush2.msra.mxu0 %v1136
        %1944 = vmatprep.subr.mxu0 %v1134
        %1945 = vmatpush2.msra.mxu0 %v1133
        %1946 = vmatprep.subr.mxu0 %v1131
        %1947 = vmatpush2.msra.mxu0 %v1130
        %1948 = vmatprep.mubr.f32.mxu0 %v607
        %1949 = vmatmul.mubr.f32.gmra.mxu0 %v606
        %v1950 = vpop.f32.mrf.mxu0
        %v1951 = vadd.f32 %v1598, %v1950
        %v1952 = vpop.f32.mrf.mxu0
        %v1953 = vadd.f32 %v1600, %v1952
        %1954 = vmatprep.mubr.f32.mxu0 %v613
        %1955 = vmatmul.mubr.f32.gmra.mxu0 %v612
        %v1956 = vpop.f32.mrf.mxu0
        %v1957 = vadd.f32 %v1604, %v1956
        %v1958 = vpop.f32.mrf.mxu0
        %v1959 = vadd.f32 %v1606, %v1958
        %1960 = vmatprep.mubr.f32.mxu0 %v619
        %1961 = vmatmul.mubr.f32.gmra.mxu0 %v618
        %v1962 = vpop.f32.mrf.mxu0
        %v1963 = vadd.f32 %v1610, %v1962
        %v1964 = vpop.f32.mrf.mxu0
        %v1965 = vadd.f32 %v1612, %v1964
        %1966 = vmatprep.mubr.f32.mxu0 %v625
        %1967 = vmatmul.mubr.f32.gmra.mxu0 %v624
        %v1968 = vpop.f32.mrf.mxu0
        %v1969 = vadd.f32 %v1616, %v1968
        %v1970 = vpop.f32.mrf.mxu0
        %v1971 = vadd.f32 %v1618, %v1970
        %1972 = vmatprep.mubr.f32.mxu0 %v631
        %1973 = vmatmul.mubr.f32.gmra.mxu0 %v630
        %v1974 = vpop.f32.mrf.mxu0
        %v1975 = vadd.f32 %v1622, %v1974
        %v1976 = vpop.f32.mrf.mxu0
        %v1977 = vadd.f32 %v1624, %v1976
        %1978 = vmatprep.mubr.f32.mxu0 %v637
        %1979 = vmatmul.mubr.f32.gmra.mxu0 %v636
        %v1980 = vpop.f32.mrf.mxu0
        %v1981 = vadd.f32 %v1628, %v1980
        %v1982 = vpop.f32.mrf.mxu0
        %v1983 = vadd.f32 %v1630, %v1982
        %1984 = vmatprep.mubr.f32.mxu0 %v643
        %1985 = vmatmul.mubr.f32.gmra.mxu0 %v642
        %v1986 = vpop.f32.mrf.mxu0
        %v1987 = vadd.f32 %v1634, %v1986
        %v1988 = vpop.f32.mrf.mxu0
        %v1989 = vadd.f32 %v1636, %v1988
        %1990 = vmatprep.mubr.f32.mxu0 %v649
        %1991 = vmatmul.mubr.f32.gmra.mxu0 %v648
        %v1992 = vpop.f32.mrf.mxu0
        %v1993 = vadd.f32 %v1640, %v1992
        %v1994 = vpop.f32.mrf.mxu0
        %v1995 = vadd.f32 %v1642, %v1994
        %1996 = vmatprep.mubr.f32.mxu0 %v655
        %1997 = vmatmul.mubr.f32.gmra.mxu0 %v654
        %v1998 = vpop.f32.mrf.mxu0
        %v1999 = vadd.f32 %v1646, %v1998
        %v2000 = vpop.f32.mrf.mxu0
        %v2001 = vadd.f32 %v1648, %v2000
        %2002 = vmatprep.mubr.f32.mxu0 %v661
        %2003 = vmatmul.mubr.f32.gmra.mxu0 %v660
        %v2004 = vpop.f32.mrf.mxu0
        %v2005 = vadd.f32 %v1652, %v2004
        %v2006 = vpop.f32.mrf.mxu0
        %v2007 = vadd.f32 %v1654, %v2006
        %2008 = vmatprep.mubr.f32.mxu0 %v667
        %2009 = vmatmul.mubr.f32.gmra.mxu0 %v666
        %v2010 = vpop.f32.mrf.mxu0
        %v2011 = vadd.f32 %v1658, %v2010
        %v2012 = vpop.f32.mrf.mxu0
        %v2013 = vadd.f32 %v1660, %v2012
        %2014 = vmatprep.mubr.f32.mxu0 %v673
        %2015 = vmatmul.mubr.f32.gmra.mxu0 %v672
        %v2016 = vpop.f32.mrf.mxu0
        %v2017 = vadd.f32 %v1664, %v2016
        %v2018 = vpop.f32.mrf.mxu0
        %v2019 = vadd.f32 %v1666, %v2018
        %2020 = vmatprep.mubr.f32.mxu0 %v679
        %2021 = vmatmul.mubr.f32.gmra.mxu0 %v678
        %v2022 = vpop.f32.mrf.mxu0
        %v2023 = vadd.f32 %v1670, %v2022
        %v2024 = vpop.f32.mrf.mxu0
        %v2025 = vadd.f32 %v1672, %v2024
        %2026 = vmatprep.mubr.f32.mxu0 %v685
        %2027 = vmatmul.mubr.f32.gmra.mxu0 %v684
        %v2028 = vpop.f32.mrf.mxu0
        %v2029 = vadd.f32 %v1676, %v2028
        %v2030 = vpop.f32.mrf.mxu0
        %v2031 = vadd.f32 %v1678, %v2030
        %2032 = vmatprep.mubr.f32.mxu0 %v691
        %2033 = vmatmul.mubr.f32.gmra.mxu0 %v690
        %v2034 = vpop.f32.mrf.mxu0
        %v2035 = vadd.f32 %v1682, %v2034
        %v2036 = vpop.f32.mrf.mxu0
        %v2037 = vadd.f32 %v1684, %v2036
        %2038 = vmatprep.mubr.f32.mxu0 %v697
        %2039 = vmatmul.mubr.f32.gmra.mxu0 %v696
        %v2040 = vpop.f32.mrf.mxu0
        %v2041 = vadd.f32 %v1688, %v2040
        %v2042 = vpop.f32.mrf.mxu0
        %v2043 = vadd.f32 %v1690, %v2042
        %2044 = vmatprep.mubr.f32.mxu0 %v703
        %2045 = vmatmul.mubr.f32.gmra.mxu0 %v702
        %v2046 = vpop.f32.mrf.mxu0
        %v2047 = vadd.f32 %v1694, %v2046
        %v2048 = vpop.f32.mrf.mxu0
        %v2049 = vadd.f32 %v1696, %v2048
        %2050 = vmatprep.mubr.f32.mxu0 %v709
        %2051 = vmatmul.mubr.f32.gmra.mxu0 %v708
        %v2052 = vpop.f32.mrf.mxu0
        %v2053 = vadd.f32 %v1700, %v2052
        %v2054 = vpop.f32.mrf.mxu0
        %v2055 = vadd.f32 %v1702, %v2054
        %2056 = vmatprep.mubr.f32.mxu0 %v715
        %2057 = vmatmul.mubr.f32.gmra.mxu0 %v714
        %v2058 = vpop.f32.mrf.mxu0
        %v2059 = vadd.f32 %v1706, %v2058
        %v2060 = vpop.f32.mrf.mxu0
        %v2061 = vadd.f32 %v1708, %v2060
        %2062 = vmatprep.mubr.f32.mxu0 %v721
        %2063 = vmatmul.mubr.f32.gmra.mxu0 %v720
        %v2064 = vpop.f32.mrf.mxu0
        %v2065 = vadd.f32 %v1712, %v2064
        %v2066 = vpop.f32.mrf.mxu0
        %v2067 = vadd.f32 %v1714, %v2066
        %2068 = vmatprep.mubr.f32.mxu0 %v727
        %2069 = vmatmul.mubr.f32.gmra.mxu0 %v726
        %v2070 = vpop.f32.mrf.mxu0
        %v2071 = vadd.f32 %v1718, %v2070
        %v2072 = vpop.f32.mrf.mxu0
        %v2073 = vadd.f32 %v1720, %v2072
        %2074 = vmatprep.mubr.f32.mxu0 %v733
        %2075 = vmatmul.mubr.f32.gmra.mxu0 %v732
        %v2076 = vpop.f32.mrf.mxu0
        %v2077 = vadd.f32 %v1724, %v2076
        %v2078 = vpop.f32.mrf.mxu0
        %v2079 = vadd.f32 %v1726, %v2078
        %2080 = vmatprep.mubr.f32.mxu0 %v739
        %2081 = vmatmul.mubr.f32.gmra.mxu0 %v738
        %v2082 = vpop.f32.mrf.mxu0
        %v2083 = vadd.f32 %v1730, %v2082
        %v2084 = vpop.f32.mrf.mxu0
        %v2085 = vadd.f32 %v1732, %v2084
        %2086 = vmatprep.mubr.f32.mxu0 %v745
        %2087 = vmatmul.mubr.f32.gmra.mxu0 %v744
        %v2088 = vpop.f32.mrf.mxu0
        %v2089 = vadd.f32 %v1736, %v2088
        %v2090 = vpop.f32.mrf.mxu0
        %v2091 = vadd.f32 %v1738, %v2090
        %2092 = vmatprep.mubr.f32.mxu0 %v751
        %2093 = vmatmul.mubr.f32.gmra.mxu0 %v750
        %v2094 = vpop.f32.mrf.mxu0
        %v2095 = vadd.f32 %v1742, %v2094
        %v2096 = vpop.f32.mrf.mxu0
        %v2097 = vadd.f32 %v1744, %v2096
        %2098 = vmatprep.mubr.f32.mxu0 %v757
        %2099 = vmatmul.mubr.f32.gmra.mxu0 %v756
        %v2100 = vpop.f32.mrf.mxu0
        %v2101 = vadd.f32 %v1748, %v2100
        %v2102 = vpop.f32.mrf.mxu0
        %v2103 = vadd.f32 %v1750, %v2102
        %2104 = vmatprep.mubr.f32.mxu0 %v763
        %2105 = vmatmul.mubr.f32.gmra.mxu0 %v762
        %v2106 = vpop.f32.mrf.mxu0
        %v2107 = vadd.f32 %v1754, %v2106
        %v2108 = vpop.f32.mrf.mxu0
        %v2109 = vadd.f32 %v1756, %v2108
        %2110 = vmatprep.mubr.f32.mxu0 %v769
        %2111 = vmatmul.mubr.f32.gmra.mxu0 %v768
        %v2112 = vpop.f32.mrf.mxu0
        %v2113 = vadd.f32 %v1760, %v2112
        %v2114 = vpop.f32.mrf.mxu0
        %v2115 = vadd.f32 %v1762, %v2114
        %2116 = vmatprep.mubr.f32.mxu0 %v775
        %2117 = vmatmul.mubr.f32.gmra.mxu0 %v774
        %v2118 = vpop.f32.mrf.mxu0
        %v2119 = vadd.f32 %v1766, %v2118
        %v2120 = vpop.f32.mrf.mxu0
        %v2121 = vadd.f32 %v1768, %v2120
        %2122 = vmatprep.mubr.f32.mxu0 %v781
        %2123 = vmatmul.mubr.f32.gmra.mxu0 %v780
        %v2124 = vpop.f32.mrf.mxu0
        %v2125 = vadd.f32 %v1772, %v2124
        %v2126 = vpop.f32.mrf.mxu0
        %v2127 = vadd.f32 %v1774, %v2126
        %2128 = vmatprep.mubr.f32.mxu0 %v787
        %2129 = vmatmul.mubr.f32.gmra.mxu0 %v786
        %v2130 = vpop.f32.mrf.mxu0
        %v2131 = vadd.f32 %v1778, %v2130
        %v2132 = vpop.f32.mrf.mxu0
        %v2133 = vadd.f32 %v1780, %v2132
        %2134 = vmatprep.mubr.f32.mxu0 %v793
        %2135 = vmatmul.mubr.f32.gmra.mxu0 %v792
        %v2136 = vpop.f32.mrf.mxu0
        %v2137 = vadd.f32 %v1784, %v2136
        %v2138 = vpop.f32.mrf.mxu0
        %v2139 = vadd.f32 %v1786, %v2138
        %2140 = vmatprep.mubr.f32.mxu0 %v799
        %2141 = vmatmul.mubr.f32.gmra.mxu0 %v798
        %v2142 = vpop.f32.mrf.mxu0
        %v2143 = vadd.f32 %v1790, %v2142
        %v2144 = vpop.f32.mrf.mxu0
        %v2145 = vadd.f32 %v1792, %v2144
        %2146 = vmatprep.mubr.f32.mxu0 %v805
        %2147 = vmatmul.mubr.f32.gmra.mxu0 %v804
        %v2148 = vpop.f32.mrf.mxu0
        %v2149 = vadd.f32 %v1796, %v2148
        %v2150 = vpop.f32.mrf.mxu0
        %v2151 = vadd.f32 %v1798, %v2150
        %2152 = vmatprep.mubr.f32.mxu0 %v811
        %2153 = vmatmul.mubr.f32.gmra.mxu0 %v810
        %v2154 = vpop.f32.mrf.mxu0
        %v2155 = vadd.f32 %v1802, %v2154
        %v2156 = vpop.f32.mrf.mxu0
        %v2157 = vadd.f32 %v1804, %v2156
        %2158 = vmatprep.mubr.f32.mxu0 %v817
        %2159 = vmatmul.mubr.f32.gmra.mxu0 %v816
        %v2160 = vpop.f32.mrf.mxu0
        %v2161 = vadd.f32 %v1808, %v2160
        %v2162 = vpop.f32.mrf.mxu0
        %v2163 = vadd.f32 %v1810, %v2162
        %2164 = vmatprep.mubr.f32.mxu0 %v823
        %2165 = vmatmul.mubr.f32.gmra.mxu0 %v822
        %v2166 = vpop.f32.mrf.mxu0
        %v2167 = vadd.f32 %v1814, %v2166
        %v2168 = vpop.f32.mrf.mxu0
        %v2169 = vadd.f32 %v1816, %v2168
        %2170 = vmatprep.mubr.f32.mxu0 %v829
        %2171 = vmatmul.mubr.f32.gmra.mxu0 %v828
        %v2172 = vpop.f32.mrf.mxu0
        %v2173 = vadd.f32 %v1820, %v2172
        %v2174 = vpop.f32.mrf.mxu0
        %v2175 = vadd.f32 %v1822, %v2174
        %2176 = vmatprep.mubr.f32.mxu0 %v835
        %2177 = vmatmul.mubr.f32.gmra.mxu0 %v834
        %v2178 = vpop.f32.mrf.mxu0
        %v2179 = vadd.f32 %v1826, %v2178
        %v2180 = vpop.f32.mrf.mxu0
        %v2181 = vadd.f32 %v1828, %v2180
        %2182 = vmatprep.mubr.f32.mxu0 %v841
        %2183 = vmatmul.mubr.f32.gmra.mxu0 %v840
        %v2184 = vpop.f32.mrf.mxu0
        %v2185 = vadd.f32 %v1832, %v2184
        %v2186 = vpop.f32.mrf.mxu0
        %v2187 = vadd.f32 %v1834, %v2186
        %2188 = vmatprep.mubr.f32.mxu0 %v847
        %2189 = vmatmul.mubr.f32.gmra.mxu0 %v846
        %v2190 = vpop.f32.mrf.mxu0
        %v2191 = vadd.f32 %v1838, %v2190
        %v2192 = vpop.f32.mrf.mxu0
        %v2193 = vadd.f32 %v1840, %v2192
        %2194 = vmatprep.mubr.f32.mxu0 %v853
        %2195 = vmatmul.mubr.f32.gmra.mxu0 %v852
        %v2196 = vpop.f32.mrf.mxu0
        %v2197 = vadd.f32 %v1844, %v2196
        %v2198 = vpop.f32.mrf.mxu0
        %v2199 = vadd.f32 %v1846, %v2198
        %2200 = vmatprep.mubr.f32.mxu0 %v859
        %2201 = vmatmul.mubr.f32.gmra.mxu0 %v858
        %v2202 = vpop.f32.mrf.mxu0
        %v2203 = vadd.f32 %v1850, %v2202
        %v2204 = vpop.f32.mrf.mxu0
        %v2205 = vadd.f32 %v1852, %v2204
        %2206 = vmatprep.mubr.f32.mxu0 %v865
        %2207 = vmatmul.mubr.f32.gmra.mxu0 %v864
        %v2208 = vpop.f32.mrf.mxu0
        %v2209 = vadd.f32 %v1856, %v2208
        %v2210 = vpop.f32.mrf.mxu0
        %v2211 = vadd.f32 %v1858, %v2210
        %2212 = vmatprep.mubr.f32.mxu0 %v871
        %2213 = vmatmul.mubr.f32.gmra.mxu0 %v870
        %v2214 = vpop.f32.mrf.mxu0
        %v2215 = vadd.f32 %v1862, %v2214
        %v2216 = vpop.f32.mrf.mxu0
        %v2217 = vadd.f32 %v1864, %v2216
        %2218 = vmatprep.mubr.f32.mxu0 %v877
        %2219 = vmatmul.mubr.f32.gmra.mxu0 %v876
        %v2220 = vpop.f32.mrf.mxu0
        %v2221 = vadd.f32 %v1868, %v2220
        %v2222 = vpop.f32.mrf.mxu0
        %v2223 = vadd.f32 %v1870, %v2222
        %2224 = vmatprep.mubr.f32.mxu0 %v883
        %2225 = vmatmul.mubr.f32.gmra.mxu0 %v882
        %v2226 = vpop.f32.mrf.mxu0
        %v2227 = vadd.f32 %v1874, %v2226
        %v2228 = vpop.f32.mrf.mxu0
        %v2229 = vadd.f32 %v1876, %v2228
        %2230 = vmatprep.mubr.f32.mxu0 %v889
        %2231 = vmatmul.mubr.f32.gmra.mxu0 %v888
        %v2232 = vpop.f32.mrf.mxu0
        %v2233 = vadd.f32 %v1880, %v2232
        %v2234 = vpop.f32.mrf.mxu0
        %v2235 = vadd.f32 %v1882, %v2234
        %2236 = vdwg.mxu0
        %2237 = vmatprep.subr.mxu0 0.0
        %2238 = vmatpush1.msra.mxu0 %v937
        %2239 = vmatprep.subr.mxu0 0.0
        %2240 = vmatpush1.msra.mxu0 %v934
        %2241 = vmatprep.subr.mxu0 0.0
        %2242 = vmatpush1.msra.mxu0 %v931
        %2243 = vmatprep.subr.mxu0 0.0
        %2244 = vmatpush1.msra.mxu0 %v928
        %2245 = vmatprep.subr.mxu0 0.0
        %2246 = vmatpush1.msra.mxu0 %v925
        %2247 = vmatprep.subr.mxu0 0.0
        %2248 = vmatpush1.msra.mxu0 %v922
        %2249 = vmatprep.subr.mxu0 0.0
        %2250 = vmatpush1.msra.mxu0 %v919
        %2251 = vmatprep.subr.mxu0 0.0
        %2252 = vmatpush1.msra.mxu0 %v916
        %2253 = vmatprep.subr.mxu0 0.0
        %2254 = vmatpush1.msra.mxu0 %v913
        %2255 = vmatprep.subr.mxu0 0.0
        %2256 = vmatpush1.msra.mxu0 %v910
        %2257 = vmatprep.subr.mxu0 0.0
        %2258 = vmatpush1.msra.mxu0 %v907
        %2259 = vmatprep.subr.mxu0 0.0
        %2260 = vmatpush1.msra.mxu0 %v904
        %2261 = vmatprep.subr.mxu0 0.0
        %2262 = vmatpush1.msra.mxu0 %v901
        %2263 = vmatprep.subr.mxu0 0.0
        %2264 = vmatpush1.msra.mxu0 %v898
        %2265 = vmatprep.subr.mxu0 0.0
        %2266 = vmatpush1.msra.mxu0 %v895
        %2267 = vmatprep.subr.mxu0 0.0
        %2268 = vmatpush1.msra.mxu0 %v892
        %2269 = vmatprep.subr.mxu0 0.0
        %2270 = vmatpush2.msra.mxu0 %v985
        %2271 = vmatprep.subr.mxu0 0.0
        %2272 = vmatpush2.msra.mxu0 %v982
        %2273 = vmatprep.subr.mxu0 0.0
        %2274 = vmatpush2.msra.mxu0 %v979
        %2275 = vmatprep.subr.mxu0 0.0
        %2276 = vmatpush2.msra.mxu0 %v976
        %2277 = vmatprep.subr.mxu0 0.0
        %2278 = vmatpush2.msra.mxu0 %v973
        %2279 = vmatprep.subr.mxu0 0.0
        %2280 = vmatpush2.msra.mxu0 %v970
        %2281 = vmatprep.subr.mxu0 0.0
        %2282 = vmatpush2.msra.mxu0 %v967
        %2283 = vmatprep.subr.mxu0 0.0
        %2284 = vmatpush2.msra.mxu0 %v964
        %2285 = vmatprep.subr.mxu0 0.0
        %2286 = vmatpush2.msra.mxu0 %v961
        %2287 = vmatprep.subr.mxu0 0.0
        %2288 = vmatpush2.msra.mxu0 %v958
        %2289 = vmatprep.subr.mxu0 0.0
        %2290 = vmatpush2.msra.mxu0 %v955
        %2291 = vmatprep.subr.mxu0 0.0
        %2292 = vmatpush2.msra.mxu0 %v952
        %2293 = vmatprep.subr.mxu0 0.0
        %2294 = vmatpush2.msra.mxu0 %v949
        %2295 = vmatprep.subr.mxu0 0.0
        %2296 = vmatpush2.msra.mxu0 %v946
        %2297 = vmatprep.subr.mxu0 0.0
        %2298 = vmatpush2.msra.mxu0 %v943
        %2299 = vmatprep.subr.mxu0 0.0
        %2300 = vmatpush2.msra.mxu0 %v940
        %2301 = vmatprep.mubr.f32.mxu0 %v603
        %2302 = vmatmul.mubr.f32.gmra.mxu0 %v602
        %v2303 = vpop.f32.mrf.mxu0
        %v2304 = vadd.f32 0.0, %v2303
        %v2305 = vpop.f32.mrf.mxu0
        %2306 = vmatprep.mubr.f32.mxu0 %v609
        %2307 = vmatmul.mubr.f32.gmra.mxu0 %v608
        %v2308 = vpop.f32.mrf.mxu0
        %v2309 = vadd.f32 0.0, %v2308
        %v2310 = vpop.f32.mrf.mxu0
        %2311 = vmatprep.mubr.f32.mxu0 %v615
        %2312 = vmatmul.mubr.f32.gmra.mxu0 %v614
        %v2313 = vpop.f32.mrf.mxu0
        %v2314 = vadd.f32 0.0, %v2313
        %v2315 = vpop.f32.mrf.mxu0
        %2316 = vmatprep.mubr.f32.mxu0 %v621
        %2317 = vmatmul.mubr.f32.gmra.mxu0 %v620
        %v2318 = vpop.f32.mrf.mxu0
        %v2319 = vadd.f32 0.0, %v2318
        %v2320 = vpop.f32.mrf.mxu0
        %2321 = vmatprep.mubr.f32.mxu0 %v627
        %2322 = vmatmul.mubr.f32.gmra.mxu0 %v626
        %v2323 = vpop.f32.mrf.mxu0
        %v2324 = vadd.f32 0.0, %v2323
        %v2325 = vpop.f32.mrf.mxu0
        %2326 = vmatprep.mubr.f32.mxu0 %v633
        %2327 = vmatmul.mubr.f32.gmra.mxu0 %v632
        %v2328 = vpop.f32.mrf.mxu0
        %v2329 = vadd.f32 0.0, %v2328
        %v2330 = vpop.f32.mrf.mxu0
        %2331 = vmatprep.mubr.f32.mxu0 %v639
        %2332 = vmatmul.mubr.f32.gmra.mxu0 %v638
        %v2333 = vpop.f32.mrf.mxu0
        %v2334 = vadd.f32 0.0, %v2333
        %v2335 = vpop.f32.mrf.mxu0
        %2336 = vmatprep.mubr.f32.mxu0 %v645
        %2337 = vmatmul.mubr.f32.gmra.mxu0 %v644
        %v2338 = vpop.f32.mrf.mxu0
        %v2339 = vadd.f32 0.0, %v2338
        %v2340 = vpop.f32.mrf.mxu0
        %2341 = vmatprep.mubr.f32.mxu0 %v651
        %2342 = vmatmul.mubr.f32.gmra.mxu0 %v650
        %v2343 = vpop.f32.mrf.mxu0
        %v2344 = vadd.f32 0.0, %v2343
        %v2345 = vpop.f32.mrf.mxu0
        %2346 = vmatprep.mubr.f32.mxu0 %v657
        %2347 = vmatmul.mubr.f32.gmra.mxu0 %v656
        %v2348 = vpop.f32.mrf.mxu0
        %v2349 = vadd.f32 0.0, %v2348
        %v2350 = vpop.f32.mrf.mxu0
        %2351 = vmatprep.mubr.f32.mxu0 %v663
        %2352 = vmatmul.mubr.f32.gmra.mxu0 %v662
        %v2353 = vpop.f32.mrf.mxu0
        %v2354 = vadd.f32 0.0, %v2353
        %v2355 = vpop.f32.mrf.mxu0
        %2356 = vmatprep.mubr.f32.mxu0 %v669
        %2357 = vmatmul.mubr.f32.gmra.mxu0 %v668
        %v2358 = vpop.f32.mrf.mxu0
        %v2359 = vadd.f32 0.0, %v2358
        %v2360 = vpop.f32.mrf.mxu0
        %2361 = vmatprep.mubr.f32.mxu0 %v675
        %2362 = vmatmul.mubr.f32.gmra.mxu0 %v674
        %v2363 = vpop.f32.mrf.mxu0
        %v2364 = vadd.f32 0.0, %v2363
        %v2365 = vpop.f32.mrf.mxu0
        %2366 = vmatprep.mubr.f32.mxu0 %v681
        %2367 = vmatmul.mubr.f32.gmra.mxu0 %v680
        %v2368 = vpop.f32.mrf.mxu0
        %v2369 = vadd.f32 0.0, %v2368
        %v2370 = vpop.f32.mrf.mxu0
        %2371 = vmatprep.mubr.f32.mxu0 %v687
        %2372 = vmatmul.mubr.f32.gmra.mxu0 %v686
        %v2373 = vpop.f32.mrf.mxu0
        %v2374 = vadd.f32 0.0, %v2373
        %v2375 = vpop.f32.mrf.mxu0
        %2376 = vmatprep.mubr.f32.mxu0 %v693
        %2377 = vmatmul.mubr.f32.gmra.mxu0 %v692
        %v2378 = vpop.f32.mrf.mxu0
        %v2379 = vadd.f32 0.0, %v2378
        %v2380 = vpop.f32.mrf.mxu0
        %2381 = vmatprep.mubr.f32.mxu0 %v699
        %2382 = vmatmul.mubr.f32.gmra.mxu0 %v698
        %v2383 = vpop.f32.mrf.mxu0
        %v2384 = vadd.f32 0.0, %v2383
        %v2385 = vpop.f32.mrf.mxu0
        %2386 = vmatprep.mubr.f32.mxu0 %v705
        %2387 = vmatmul.mubr.f32.gmra.mxu0 %v704
        %v2388 = vpop.f32.mrf.mxu0
        %v2389 = vadd.f32 0.0, %v2388
        %v2390 = vpop.f32.mrf.mxu0
        %2391 = vmatprep.mubr.f32.mxu0 %v711
        %2392 = vmatmul.mubr.f32.gmra.mxu0 %v710
        %v2393 = vpop.f32.mrf.mxu0
        %v2394 = vadd.f32 0.0, %v2393
        %v2395 = vpop.f32.mrf.mxu0
        %2396 = vmatprep.mubr.f32.mxu0 %v717
        %2397 = vmatmul.mubr.f32.gmra.mxu0 %v716
        %v2398 = vpop.f32.mrf.mxu0
        %v2399 = vadd.f32 0.0, %v2398
        %v2400 = vpop.f32.mrf.mxu0
        %2401 = vmatprep.mubr.f32.mxu0 %v723
        %2402 = vmatmul.mubr.f32.gmra.mxu0 %v722
        %v2403 = vpop.f32.mrf.mxu0
        %v2404 = vadd.f32 0.0, %v2403
        %v2405 = vpop.f32.mrf.mxu0
        %2406 = vmatprep.mubr.f32.mxu0 %v729
        %2407 = vmatmul.mubr.f32.gmra.mxu0 %v728
        %v2408 = vpop.f32.mrf.mxu0
        %v2409 = vadd.f32 0.0, %v2408
        %v2410 = vpop.f32.mrf.mxu0
        %2411 = vmatprep.mubr.f32.mxu0 %v735
        %2412 = vmatmul.mubr.f32.gmra.mxu0 %v734
        %v2413 = vpop.f32.mrf.mxu0
        %v2414 = vadd.f32 0.0, %v2413
        %v2415 = vpop.f32.mrf.mxu0
        %2416 = vmatprep.mubr.f32.mxu0 %v741
        %2417 = vmatmul.mubr.f32.gmra.mxu0 %v740
        %v2418 = vpop.f32.mrf.mxu0
        %v2419 = vadd.f32 0.0, %v2418
        %v2420 = vpop.f32.mrf.mxu0
        %2421 = vmatprep.mubr.f32.mxu0 %v747
        %2422 = vmatmul.mubr.f32.gmra.mxu0 %v746
        %v2423 = vpop.f32.mrf.mxu0
        %v2424 = vadd.f32 0.0, %v2423
        %v2425 = vpop.f32.mrf.mxu0
        %2426 = vmatprep.mubr.f32.mxu0 %v753
        %2427 = vmatmul.mubr.f32.gmra.mxu0 %v752
        %v2428 = vpop.f32.mrf.mxu0
        %v2429 = vadd.f32 0.0, %v2428
        %v2430 = vpop.f32.mrf.mxu0
        %2431 = vmatprep.mubr.f32.mxu0 %v759
        %2432 = vmatmul.mubr.f32.gmra.mxu0 %v758
        %v2433 = vpop.f32.mrf.mxu0
        %v2434 = vadd.f32 0.0, %v2433
        %v2435 = vpop.f32.mrf.mxu0
        %2436 = vmatprep.mubr.f32.mxu0 %v765
        %2437 = vmatmul.mubr.f32.gmra.mxu0 %v764
        %v2438 = vpop.f32.mrf.mxu0
        %v2439 = vadd.f32 0.0, %v2438
        %v2440 = vpop.f32.mrf.mxu0
        %2441 = vmatprep.mubr.f32.mxu0 %v771
        %2442 = vmatmul.mubr.f32.gmra.mxu0 %v770
        %v2443 = vpop.f32.mrf.mxu0
        %v2444 = vadd.f32 0.0, %v2443
        %v2445 = vpop.f32.mrf.mxu0
        %2446 = vmatprep.mubr.f32.mxu0 %v777
        %2447 = vmatmul.mubr.f32.gmra.mxu0 %v776
        %v2448 = vpop.f32.mrf.mxu0
        %v2449 = vadd.f32 0.0, %v2448
        %v2450 = vpop.f32.mrf.mxu0
        %2451 = vmatprep.mubr.f32.mxu0 %v783
        %2452 = vmatmul.mubr.f32.gmra.mxu0 %v782
        %v2453 = vpop.f32.mrf.mxu0
        %v2454 = vadd.f32 0.0, %v2453
        %v2455 = vpop.f32.mrf.mxu0
        %2456 = vmatprep.mubr.f32.mxu0 %v789
        %2457 = vmatmul.mubr.f32.gmra.mxu0 %v788
        %v2458 = vpop.f32.mrf.mxu0
        %v2459 = vadd.f32 0.0, %v2458
        %v2460 = vpop.f32.mrf.mxu0
        %2461 = vmatprep.mubr.f32.mxu0 %v795
        %2462 = vmatmul.mubr.f32.gmra.mxu0 %v794
        %v2463 = vpop.f32.mrf.mxu0
        %v2464 = vadd.f32 0.0, %v2463
        %v2465 = vpop.f32.mrf.mxu0
        %2466 = vmatprep.mubr.f32.mxu0 %v801
        %2467 = vmatmul.mubr.f32.gmra.mxu0 %v800
        %v2468 = vpop.f32.mrf.mxu0
        %v2469 = vadd.f32 0.0, %v2468
        %v2470 = vpop.f32.mrf.mxu0
        %2471 = vmatprep.mubr.f32.mxu0 %v807
        %2472 = vmatmul.mubr.f32.gmra.mxu0 %v806
        %v2473 = vpop.f32.mrf.mxu0
        %v2474 = vadd.f32 0.0, %v2473
        %v2475 = vpop.f32.mrf.mxu0
        %2476 = vmatprep.mubr.f32.mxu0 %v813
        %2477 = vmatmul.mubr.f32.gmra.mxu0 %v812
        %v2478 = vpop.f32.mrf.mxu0
        %v2479 = vadd.f32 0.0, %v2478
        %v2480 = vpop.f32.mrf.mxu0
        %2481 = vmatprep.mubr.f32.mxu0 %v819
        %2482 = vmatmul.mubr.f32.gmra.mxu0 %v818
        %v2483 = vpop.f32.mrf.mxu0
        %v2484 = vadd.f32 0.0, %v2483
        %v2485 = vpop.f32.mrf.mxu0
        %2486 = vmatprep.mubr.f32.mxu0 %v825
        %2487 = vmatmul.mubr.f32.gmra.mxu0 %v824
        %v2488 = vpop.f32.mrf.mxu0
        %v2489 = vadd.f32 0.0, %v2488
        %v2490 = vpop.f32.mrf.mxu0
        %2491 = vmatprep.mubr.f32.mxu0 %v831
        %2492 = vmatmul.mubr.f32.gmra.mxu0 %v830
        %v2493 = vpop.f32.mrf.mxu0
        %v2494 = vadd.f32 0.0, %v2493
        %v2495 = vpop.f32.mrf.mxu0
        %2496 = vmatprep.mubr.f32.mxu0 %v837
        %2497 = vmatmul.mubr.f32.gmra.mxu0 %v836
        %v2498 = vpop.f32.mrf.mxu0
        %v2499 = vadd.f32 0.0, %v2498
        %v2500 = vpop.f32.mrf.mxu0
        %2501 = vmatprep.mubr.f32.mxu0 %v843
        %2502 = vmatmul.mubr.f32.gmra.mxu0 %v842
        %v2503 = vpop.f32.mrf.mxu0
        %v2504 = vadd.f32 0.0, %v2503
        %v2505 = vpop.f32.mrf.mxu0
        %2506 = vmatprep.mubr.f32.mxu0 %v849
        %2507 = vmatmul.mubr.f32.gmra.mxu0 %v848
        %v2508 = vpop.f32.mrf.mxu0
        %v2509 = vadd.f32 0.0, %v2508
        %v2510 = vpop.f32.mrf.mxu0
        %2511 = vmatprep.mubr.f32.mxu0 %v855
        %2512 = vmatmul.mubr.f32.gmra.mxu0 %v854
        %v2513 = vpop.f32.mrf.mxu0
        %v2514 = vadd.f32 0.0, %v2513
        %v2515 = vpop.f32.mrf.mxu0
        %2516 = vmatprep.mubr.f32.mxu0 %v861
        %2517 = vmatmul.mubr.f32.gmra.mxu0 %v860
        %v2518 = vpop.f32.mrf.mxu0
        %v2519 = vadd.f32 0.0, %v2518
        %v2520 = vpop.f32.mrf.mxu0
        %2521 = vmatprep.mubr.f32.mxu0 %v867
        %2522 = vmatmul.mubr.f32.gmra.mxu0 %v866
        %v2523 = vpop.f32.mrf.mxu0
        %v2524 = vadd.f32 0.0, %v2523
        %v2525 = vpop.f32.mrf.mxu0
        %2526 = vmatprep.mubr.f32.mxu0 %v873
        %2527 = vmatmul.mubr.f32.gmra.mxu0 %v872
        %v2528 = vpop.f32.mrf.mxu0
        %v2529 = vadd.f32 0.0, %v2528
        %v2530 = vpop.f32.mrf.mxu0
        %2531 = vmatprep.mubr.f32.mxu0 %v879
        %2532 = vmatmul.mubr.f32.gmra.mxu0 %v878
        %v2533 = vpop.f32.mrf.mxu0
        %v2534 = vadd.f32 0.0, %v2533
        %v2535 = vpop.f32.mrf.mxu0
        %2536 = vmatprep.mubr.f32.mxu0 %v885
        %2537 = vmatmul.mubr.f32.gmra.mxu0 %v884
        %v2538 = vpop.f32.mrf.mxu0
        %v2539 = vadd.f32 0.0, %v2538
        %v2540 = vpop.f32.mrf.mxu0
        %2541 = vdwg.mxu0
        %2542 = vmatprep.subr.mxu0 0.0
        %2543 = vmatpush1.msra.mxu0 %v1033
        %2544 = vmatprep.subr.mxu0 0.0
        %2545 = vmatpush1.msra.mxu0 %v1030
        %2546 = vmatprep.subr.mxu0 0.0
        %2547 = vmatpush1.msra.mxu0 %v1027
        %2548 = vmatprep.subr.mxu0 0.0
        %2549 = vmatpush1.msra.mxu0 %v1024
        %2550 = vmatprep.subr.mxu0 0.0
        %2551 = vmatpush1.msra.mxu0 %v1021
        %2552 = vmatprep.subr.mxu0 0.0
        %2553 = vmatpush1.msra.mxu0 %v1018
        %2554 = vmatprep.subr.mxu0 0.0
        %2555 = vmatpush1.msra.mxu0 %v1015
        %2556 = vmatprep.subr.mxu0 0.0
        %2557 = vmatpush1.msra.mxu0 %v1012
        %2558 = vmatprep.subr.mxu0 0.0
        %2559 = vmatpush1.msra.mxu0 %v1009
        %2560 = vmatprep.subr.mxu0 0.0
        %2561 = vmatpush1.msra.mxu0 %v1006
        %2562 = vmatprep.subr.mxu0 0.0
        %2563 = vmatpush1.msra.mxu0 %v1003
        %2564 = vmatprep.subr.mxu0 0.0
        %2565 = vmatpush1.msra.mxu0 %v1000
        %2566 = vmatprep.subr.mxu0 0.0
        %2567 = vmatpush1.msra.mxu0 %v997
        %2568 = vmatprep.subr.mxu0 0.0
        %2569 = vmatpush1.msra.mxu0 %v994
        %2570 = vmatprep.subr.mxu0 0.0
        %2571 = vmatpush1.msra.mxu0 %v991
        %2572 = vmatprep.subr.mxu0 0.0
        %2573 = vmatpush1.msra.mxu0 %v988
        %2574 = vmatprep.subr.mxu0 0.0
        %2575 = vmatpush2.msra.mxu0 %v1081
        %2576 = vmatprep.subr.mxu0 0.0
        %2577 = vmatpush2.msra.mxu0 %v1078
        %2578 = vmatprep.subr.mxu0 0.0
        %2579 = vmatpush2.msra.mxu0 %v1075
        %2580 = vmatprep.subr.mxu0 0.0
        %2581 = vmatpush2.msra.mxu0 %v1072
        %2582 = vmatprep.subr.mxu0 0.0
        %2583 = vmatpush2.msra.mxu0 %v1069
        %2584 = vmatprep.subr.mxu0 0.0
        %2585 = vmatpush2.msra.mxu0 %v1066
        %2586 = vmatprep.subr.mxu0 0.0
        %2587 = vmatpush2.msra.mxu0 %v1063
        %2588 = vmatprep.subr.mxu0 0.0
        %2589 = vmatpush2.msra.mxu0 %v1060
        %2590 = vmatprep.subr.mxu0 0.0
        %2591 = vmatpush2.msra.mxu0 %v1057
        %2592 = vmatprep.subr.mxu0 0.0
        %2593 = vmatpush2.msra.mxu0 %v1054
        %2594 = vmatprep.subr.mxu0 0.0
        %2595 = vmatpush2.msra.mxu0 %v1051
        %2596 = vmatprep.subr.mxu0 0.0
        %2597 = vmatpush2.msra.mxu0 %v1048
        %2598 = vmatprep.subr.mxu0 0.0
        %2599 = vmatpush2.msra.mxu0 %v1045
        %2600 = vmatprep.subr.mxu0 0.0
        %2601 = vmatpush2.msra.mxu0 %v1042
        %2602 = vmatprep.subr.mxu0 0.0
        %2603 = vmatpush2.msra.mxu0 %v1039
        %2604 = vmatprep.subr.mxu0 0.0
        %2605 = vmatpush2.msra.mxu0 %v1036
        %2606 = vmatprep.mubr.f32.mxu0 %v605
        %2607 = vmatmul.mubr.f32.gmra.mxu0 %v604
        %v2608 = vpop.f32.mrf.mxu0
        %v2609 = vadd.f32 %v2304, %v2608
        %v2610 = vpop.f32.mrf.mxu0
        %2611 = vmatprep.mubr.f32.mxu0 %v611
        %2612 = vmatmul.mubr.f32.gmra.mxu0 %v610
        %v2613 = vpop.f32.mrf.mxu0
        %v2614 = vadd.f32 %v2309, %v2613
        %v2615 = vpop.f32.mrf.mxu0
        %2616 = vmatprep.mubr.f32.mxu0 %v617
        %2617 = vmatmul.mubr.f32.gmra.mxu0 %v616
        %v2618 = vpop.f32.mrf.mxu0
        %v2619 = vadd.f32 %v2314, %v2618
        %v2620 = vpop.f32.mrf.mxu0
        %2621 = vmatprep.mubr.f32.mxu0 %v623
        %2622 = vmatmul.mubr.f32.gmra.mxu0 %v622
        %v2623 = vpop.f32.mrf.mxu0
        %v2624 = vadd.f32 %v2319, %v2623
        %v2625 = vpop.f32.mrf.mxu0
        %2626 = vmatprep.mubr.f32.mxu0 %v629
        %2627 = vmatmul.mubr.f32.gmra.mxu0 %v628
        %v2628 = vpop.f32.mrf.mxu0
        %v2629 = vadd.f32 %v2324, %v2628
        %v2630 = vpop.f32.mrf.mxu0
        %2631 = vmatprep.mubr.f32.mxu0 %v635
        %2632 = vmatmul.mubr.f32.gmra.mxu0 %v634
        %v2633 = vpop.f32.mrf.mxu0
        %v2634 = vadd.f32 %v2329, %v2633
        %v2635 = vpop.f32.mrf.mxu0
        %2636 = vmatprep.mubr.f32.mxu0 %v641
        %2637 = vmatmul.mubr.f32.gmra.mxu0 %v640
        %v2638 = vpop.f32.mrf.mxu0
        %v2639 = vadd.f32 %v2334, %v2638
        %v2640 = vpop.f32.mrf.mxu0
        %2641 = vmatprep.mubr.f32.mxu0 %v647
        %2642 = vmatmul.mubr.f32.gmra.mxu0 %v646
        %v2643 = vpop.f32.mrf.mxu0
        %v2644 = vadd.f32 %v2339, %v2643
        %v2645 = vpop.f32.mrf.mxu0
        %2646 = vmatprep.mubr.f32.mxu0 %v653
        %2647 = vmatmul.mubr.f32.gmra.mxu0 %v652
        %v2648 = vpop.f32.mrf.mxu0
        %v2649 = vadd.f32 %v2344, %v2648
        %v2650 = vpop.f32.mrf.mxu0
        %2651 = vmatprep.mubr.f32.mxu0 %v659
        %2652 = vmatmul.mubr.f32.gmra.mxu0 %v658
        %v2653 = vpop.f32.mrf.mxu0
        %v2654 = vadd.f32 %v2349, %v2653
        %v2655 = vpop.f32.mrf.mxu0
        %2656 = vmatprep.mubr.f32.mxu0 %v665
        %2657 = vmatmul.mubr.f32.gmra.mxu0 %v664
        %v2658 = vpop.f32.mrf.mxu0
        %v2659 = vadd.f32 %v2354, %v2658
        %v2660 = vpop.f32.mrf.mxu0
        %2661 = vmatprep.mubr.f32.mxu0 %v671
        %2662 = vmatmul.mubr.f32.gmra.mxu0 %v670
        %v2663 = vpop.f32.mrf.mxu0
        %v2664 = vadd.f32 %v2359, %v2663
        %v2665 = vpop.f32.mrf.mxu0
        %2666 = vmatprep.mubr.f32.mxu0 %v677
        %2667 = vmatmul.mubr.f32.gmra.mxu0 %v676
        %v2668 = vpop.f32.mrf.mxu0
        %v2669 = vadd.f32 %v2364, %v2668
        %v2670 = vpop.f32.mrf.mxu0
        %2671 = vmatprep.mubr.f32.mxu0 %v683
        %2672 = vmatmul.mubr.f32.gmra.mxu0 %v682
        %v2673 = vpop.f32.mrf.mxu0
        %v2674 = vadd.f32 %v2369, %v2673
        %v2675 = vpop.f32.mrf.mxu0
        %2676 = vmatprep.mubr.f32.mxu0 %v689
        %2677 = vmatmul.mubr.f32.gmra.mxu0 %v688
        %v2678 = vpop.f32.mrf.mxu0
        %v2679 = vadd.f32 %v2374, %v2678
        %v2680 = vpop.f32.mrf.mxu0
        %2681 = vmatprep.mubr.f32.mxu0 %v695
        %2682 = vmatmul.mubr.f32.gmra.mxu0 %v694
        %v2683 = vpop.f32.mrf.mxu0
        %v2684 = vadd.f32 %v2379, %v2683
        %v2685 = vpop.f32.mrf.mxu0
        %2686 = vmatprep.mubr.f32.mxu0 %v701
        %2687 = vmatmul.mubr.f32.gmra.mxu0 %v700
        %v2688 = vpop.f32.mrf.mxu0
        %v2689 = vadd.f32 %v2384, %v2688
        %v2690 = vpop.f32.mrf.mxu0
        %2691 = vmatprep.mubr.f32.mxu0 %v707
        %2692 = vmatmul.mubr.f32.gmra.mxu0 %v706
        %v2693 = vpop.f32.mrf.mxu0
        %v2694 = vadd.f32 %v2389, %v2693
        %v2695 = vpop.f32.mrf.mxu0
        %2696 = vmatprep.mubr.f32.mxu0 %v713
        %2697 = vmatmul.mubr.f32.gmra.mxu0 %v712
        %v2698 = vpop.f32.mrf.mxu0
        %v2699 = vadd.f32 %v2394, %v2698
        %v2700 = vpop.f32.mrf.mxu0
        %2701 = vmatprep.mubr.f32.mxu0 %v719
        %2702 = vmatmul.mubr.f32.gmra.mxu0 %v718
        %v2703 = vpop.f32.mrf.mxu0
        %v2704 = vadd.f32 %v2399, %v2703
        %v2705 = vpop.f32.mrf.mxu0
        %2706 = vmatprep.mubr.f32.mxu0 %v725
        %2707 = vmatmul.mubr.f32.gmra.mxu0 %v724
        %v2708 = vpop.f32.mrf.mxu0
        %v2709 = vadd.f32 %v2404, %v2708
        %v2710 = vpop.f32.mrf.mxu0
        %2711 = vmatprep.mubr.f32.mxu0 %v731
        %2712 = vmatmul.mubr.f32.gmra.mxu0 %v730
        %v2713 = vpop.f32.mrf.mxu0
        %v2714 = vadd.f32 %v2409, %v2713
        %v2715 = vpop.f32.mrf.mxu0
        %2716 = vmatprep.mubr.f32.mxu0 %v737
        %2717 = vmatmul.mubr.f32.gmra.mxu0 %v736
        %v2718 = vpop.f32.mrf.mxu0
        %v2719 = vadd.f32 %v2414, %v2718
        %v2720 = vpop.f32.mrf.mxu0
        %2721 = vmatprep.mubr.f32.mxu0 %v743
        %2722 = vmatmul.mubr.f32.gmra.mxu0 %v742
        %v2723 = vpop.f32.mrf.mxu0
        %v2724 = vadd.f32 %v2419, %v2723
        %v2725 = vpop.f32.mrf.mxu0
        %2726 = vmatprep.mubr.f32.mxu0 %v749
        %2727 = vmatmul.mubr.f32.gmra.mxu0 %v748
        %v2728 = vpop.f32.mrf.mxu0
        %v2729 = vadd.f32 %v2424, %v2728
        %v2730 = vpop.f32.mrf.mxu0
        %2731 = vmatprep.mubr.f32.mxu0 %v755
        %2732 = vmatmul.mubr.f32.gmra.mxu0 %v754
        %v2733 = vpop.f32.mrf.mxu0
        %v2734 = vadd.f32 %v2429, %v2733
        %v2735 = vpop.f32.mrf.mxu0
        %2736 = vmatprep.mubr.f32.mxu0 %v761
        %2737 = vmatmul.mubr.f32.gmra.mxu0 %v760
        %v2738 = vpop.f32.mrf.mxu0
        %v2739 = vadd.f32 %v2434, %v2738
        %v2740 = vpop.f32.mrf.mxu0
        %2741 = vmatprep.mubr.f32.mxu0 %v767
        %2742 = vmatmul.mubr.f32.gmra.mxu0 %v766
        %v2743 = vpop.f32.mrf.mxu0
        %v2744 = vadd.f32 %v2439, %v2743
        %v2745 = vpop.f32.mrf.mxu0
        %2746 = vmatprep.mubr.f32.mxu0 %v773
        %2747 = vmatmul.mubr.f32.gmra.mxu0 %v772
        %v2748 = vpop.f32.mrf.mxu0
        %v2749 = vadd.f32 %v2444, %v2748
        %v2750 = vpop.f32.mrf.mxu0
        %2751 = vmatprep.mubr.f32.mxu0 %v779
        %2752 = vmatmul.mubr.f32.gmra.mxu0 %v778
        %v2753 = vpop.f32.mrf.mxu0
        %v2754 = vadd.f32 %v2449, %v2753
        %v2755 = vpop.f32.mrf.mxu0
        %2756 = vmatprep.mubr.f32.mxu0 %v785
        %2757 = vmatmul.mubr.f32.gmra.mxu0 %v784
        %v2758 = vpop.f32.mrf.mxu0
        %v2759 = vadd.f32 %v2454, %v2758
        %v2760 = vpop.f32.mrf.mxu0
        %2761 = vmatprep.mubr.f32.mxu0 %v791
        %2762 = vmatmul.mubr.f32.gmra.mxu0 %v790
        %v2763 = vpop.f32.mrf.mxu0
        %v2764 = vadd.f32 %v2459, %v2763
        %v2765 = vpop.f32.mrf.mxu0
        %2766 = vmatprep.mubr.f32.mxu0 %v797
        %2767 = vmatmul.mubr.f32.gmra.mxu0 %v796
        %v2768 = vpop.f32.mrf.mxu0
        %v2769 = vadd.f32 %v2464, %v2768
        %v2770 = vpop.f32.mrf.mxu0
        %2771 = vmatprep.mubr.f32.mxu0 %v803
        %2772 = vmatmul.mubr.f32.gmra.mxu0 %v802
        %v2773 = vpop.f32.mrf.mxu0
        %v2774 = vadd.f32 %v2469, %v2773
        %v2775 = vpop.f32.mrf.mxu0
        %2776 = vmatprep.mubr.f32.mxu0 %v809
        %2777 = vmatmul.mubr.f32.gmra.mxu0 %v808
        %v2778 = vpop.f32.mrf.mxu0
        %v2779 = vadd.f32 %v2474, %v2778
        %v2780 = vpop.f32.mrf.mxu0
        %2781 = vmatprep.mubr.f32.mxu0 %v815
        %2782 = vmatmul.mubr.f32.gmra.mxu0 %v814
        %v2783 = vpop.f32.mrf.mxu0
        %v2784 = vadd.f32 %v2479, %v2783
        %v2785 = vpop.f32.mrf.mxu0
        %2786 = vmatprep.mubr.f32.mxu0 %v821
        %2787 = vmatmul.mubr.f32.gmra.mxu0 %v820
        %v2788 = vpop.f32.mrf.mxu0
        %v2789 = vadd.f32 %v2484, %v2788
        %v2790 = vpop.f32.mrf.mxu0
        %2791 = vmatprep.mubr.f32.mxu0 %v827
        %2792 = vmatmul.mubr.f32.gmra.mxu0 %v826
        %v2793 = vpop.f32.mrf.mxu0
        %v2794 = vadd.f32 %v2489, %v2793
        %v2795 = vpop.f32.mrf.mxu0
        %2796 = vmatprep.mubr.f32.mxu0 %v833
        %2797 = vmatmul.mubr.f32.gmra.mxu0 %v832
        %v2798 = vpop.f32.mrf.mxu0
        %v2799 = vadd.f32 %v2494, %v2798
        %v2800 = vpop.f32.mrf.mxu0
        %2801 = vmatprep.mubr.f32.mxu0 %v839
        %2802 = vmatmul.mubr.f32.gmra.mxu0 %v838
        %v2803 = vpop.f32.mrf.mxu0
        %v2804 = vadd.f32 %v2499, %v2803
        %v2805 = vpop.f32.mrf.mxu0
        %2806 = vmatprep.mubr.f32.mxu0 %v845
        %2807 = vmatmul.mubr.f32.gmra.mxu0 %v844
        %v2808 = vpop.f32.mrf.mxu0
        %v2809 = vadd.f32 %v2504, %v2808
        %v2810 = vpop.f32.mrf.mxu0
        %2811 = vmatprep.mubr.f32.mxu0 %v851
        %2812 = vmatmul.mubr.f32.gmra.mxu0 %v850
        %v2813 = vpop.f32.mrf.mxu0
        %v2814 = vadd.f32 %v2509, %v2813
        %v2815 = vpop.f32.mrf.mxu0
        %2816 = vmatprep.mubr.f32.mxu0 %v857
        %2817 = vmatmul.mubr.f32.gmra.mxu0 %v856
        %v2818 = vpop.f32.mrf.mxu0
        %v2819 = vadd.f32 %v2514, %v2818
        %v2820 = vpop.f32.mrf.mxu0
        %2821 = vmatprep.mubr.f32.mxu0 %v863
        %2822 = vmatmul.mubr.f32.gmra.mxu0 %v862
        %v2823 = vpop.f32.mrf.mxu0
        %v2824 = vadd.f32 %v2519, %v2823
        %v2825 = vpop.f32.mrf.mxu0
        %2826 = vmatprep.mubr.f32.mxu0 %v869
        %2827 = vmatmul.mubr.f32.gmra.mxu0 %v868
        %v2828 = vpop.f32.mrf.mxu0
        %v2829 = vadd.f32 %v2524, %v2828
        %v2830 = vpop.f32.mrf.mxu0
        %2831 = vmatprep.mubr.f32.mxu0 %v875
        %2832 = vmatmul.mubr.f32.gmra.mxu0 %v874
        %v2833 = vpop.f32.mrf.mxu0
        %v2834 = vadd.f32 %v2529, %v2833
        %v2835 = vpop.f32.mrf.mxu0
        %2836 = vmatprep.mubr.f32.mxu0 %v881
        %2837 = vmatmul.mubr.f32.gmra.mxu0 %v880
        %v2838 = vpop.f32.mrf.mxu0
        %v2839 = vadd.f32 %v2534, %v2838
        %v2840 = vpop.f32.mrf.mxu0
        %2841 = vmatprep.mubr.f32.mxu0 %v887
        %2842 = vmatmul.mubr.f32.gmra.mxu0 %v886
        %v2843 = vpop.f32.mrf.mxu0
        %v2844 = vadd.f32 %v2539, %v2843
        %v2845 = vpop.f32.mrf.mxu0
        %2846 = vdwg.mxu0
        %2847 = vmatprep.subr.mxu0 0.0
        %2848 = vmatpush1.msra.mxu0 %v1129
        %2849 = vmatprep.subr.mxu0 0.0
        %2850 = vmatpush1.msra.mxu0 %v1126
        %2851 = vmatprep.subr.mxu0 0.0
        %2852 = vmatpush1.msra.mxu0 %v1123
        %2853 = vmatprep.subr.mxu0 0.0
        %2854 = vmatpush1.msra.mxu0 %v1120
        %2855 = vmatprep.subr.mxu0 0.0
        %2856 = vmatpush1.msra.mxu0 %v1117
        %2857 = vmatprep.subr.mxu0 0.0
        %2858 = vmatpush1.msra.mxu0 %v1114
        %2859 = vmatprep.subr.mxu0 0.0
        %2860 = vmatpush1.msra.mxu0 %v1111
        %2861 = vmatprep.subr.mxu0 0.0
        %2862 = vmatpush1.msra.mxu0 %v1108
        %2863 = vmatprep.subr.mxu0 0.0
        %2864 = vmatpush1.msra.mxu0 %v1105
        %2865 = vmatprep.subr.mxu0 0.0
        %2866 = vmatpush1.msra.mxu0 %v1102
        %2867 = vmatprep.subr.mxu0 0.0
        %2868 = vmatpush1.msra.mxu0 %v1099
        %2869 = vmatprep.subr.mxu0 0.0
        %2870 = vmatpush1.msra.mxu0 %v1096
        %2871 = vmatprep.subr.mxu0 0.0
        %2872 = vmatpush1.msra.mxu0 %v1093
        %2873 = vmatprep.subr.mxu0 0.0
        %2874 = vmatpush1.msra.mxu0 %v1090
        %2875 = vmatprep.subr.mxu0 0.0
        %2876 = vmatpush1.msra.mxu0 %v1087
        %2877 = vmatprep.subr.mxu0 0.0
        %2878 = vmatpush1.msra.mxu0 %v1084
        %2879 = vmatprep.subr.mxu0 0.0
        %2880 = vmatpush2.msra.mxu0 %v1177
        %2881 = vmatprep.subr.mxu0 0.0
        %2882 = vmatpush2.msra.mxu0 %v1174
        %2883 = vmatprep.subr.mxu0 0.0
        %2884 = vmatpush2.msra.mxu0 %v1171
        %2885 = vmatprep.subr.mxu0 0.0
        %2886 = vmatpush2.msra.mxu0 %v1168
        %2887 = vmatprep.subr.mxu0 0.0
        %2888 = vmatpush2.msra.mxu0 %v1165
        %2889 = vmatprep.subr.mxu0 0.0
        %2890 = vmatpush2.msra.mxu0 %v1162
        %2891 = vmatprep.subr.mxu0 0.0
        %2892 = vmatpush2.msra.mxu0 %v1159
        %2893 = vmatprep.subr.mxu0 0.0
        %2894 = vmatpush2.msra.mxu0 %v1156
        %2895 = vmatprep.subr.mxu0 0.0
        %2896 = vmatpush2.msra.mxu0 %v1153
        %2897 = vmatprep.subr.mxu0 0.0
        %2898 = vmatpush2.msra.mxu0 %v1150
        %2899 = vmatprep.subr.mxu0 0.0
        %2900 = vmatpush2.msra.mxu0 %v1147
        %2901 = vmatprep.subr.mxu0 0.0
        %2902 = vmatpush2.msra.mxu0 %v1144
        %2903 = vmatprep.subr.mxu0 0.0
        %2904 = vmatpush2.msra.mxu0 %v1141
        %2905 = vmatprep.subr.mxu0 0.0
        %2906 = vmatpush2.msra.mxu0 %v1138
        %2907 = vmatprep.subr.mxu0 0.0
        %2908 = vmatpush2.msra.mxu0 %v1135
        %2909 = vmatprep.subr.mxu0 0.0
        %2910 = vmatpush2.msra.mxu0 %v1132
        %2911 = vmatprep.mubr.f32.mxu0 %v607
        %2912 = vmatmul.mubr.f32.gmra.mxu0 %v606
        %v2913 = vpop.f32.mrf.mxu0
        %v2914 = vadd.f32 %v2609, %v2913
        %v2915 = vpop.f32.mrf.mxu0
        %2916 = vmatprep.mubr.f32.mxu0 %v613
        %2917 = vmatmul.mubr.f32.gmra.mxu0 %v612
        %v2918 = vpop.f32.mrf.mxu0
        %v2919 = vadd.f32 %v2614, %v2918
        %v2920 = vpop.f32.mrf.mxu0
        %2921 = vmatprep.mubr.f32.mxu0 %v619
        %2922 = vmatmul.mubr.f32.gmra.mxu0 %v618
        %v2923 = vpop.f32.mrf.mxu0
        %v2924 = vadd.f32 %v2619, %v2923
        %v2925 = vpop.f32.mrf.mxu0
        %2926 = vmatprep.mubr.f32.mxu0 %v625
        %2927 = vmatmul.mubr.f32.gmra.mxu0 %v624
        %v2928 = vpop.f32.mrf.mxu0
        %v2929 = vadd.f32 %v2624, %v2928
        %v2930 = vpop.f32.mrf.mxu0
        %2931 = vmatprep.mubr.f32.mxu0 %v631
        %2932 = vmatmul.mubr.f32.gmra.mxu0 %v630
        %v2933 = vpop.f32.mrf.mxu0
        %v2934 = vadd.f32 %v2629, %v2933
        %v2935 = vpop.f32.mrf.mxu0
        %2936 = vmatprep.mubr.f32.mxu0 %v637
        %2937 = vmatmul.mubr.f32.gmra.mxu0 %v636
        %v2938 = vpop.f32.mrf.mxu0
        %v2939 = vadd.f32 %v2634, %v2938
        %v2940 = vpop.f32.mrf.mxu0
        %2941 = vmatprep.mubr.f32.mxu0 %v643
        %2942 = vmatmul.mubr.f32.gmra.mxu0 %v642
        %v2943 = vpop.f32.mrf.mxu0
        %v2944 = vadd.f32 %v2639, %v2943
        %v2945 = vpop.f32.mrf.mxu0
        %2946 = vmatprep.mubr.f32.mxu0 %v649
        %2947 = vmatmul.mubr.f32.gmra.mxu0 %v648
        %v2948 = vpop.f32.mrf.mxu0
        %v2949 = vadd.f32 %v2644, %v2948
        %v2950 = vpop.f32.mrf.mxu0
        %2951 = vmatprep.mubr.f32.mxu0 %v655
        %2952 = vmatmul.mubr.f32.gmra.mxu0 %v654
        %v2953 = vpop.f32.mrf.mxu0
        %v2954 = vadd.f32 %v2649, %v2953
        %v2955 = vpop.f32.mrf.mxu0
        %2956 = vmatprep.mubr.f32.mxu0 %v661
        %2957 = vmatmul.mubr.f32.gmra.mxu0 %v660
        %v2958 = vpop.f32.mrf.mxu0
        %v2959 = vadd.f32 %v2654, %v2958
        %v2960 = vpop.f32.mrf.mxu0
        %2961 = vmatprep.mubr.f32.mxu0 %v667
        %2962 = vmatmul.mubr.f32.gmra.mxu0 %v666
        %v2963 = vpop.f32.mrf.mxu0
        %v2964 = vadd.f32 %v2659, %v2963
        %v2965 = vpop.f32.mrf.mxu0
        %2966 = vmatprep.mubr.f32.mxu0 %v673
        %2967 = vmatmul.mubr.f32.gmra.mxu0 %v672
        %v2968 = vpop.f32.mrf.mxu0
        %v2969 = vadd.f32 %v2664, %v2968
        %v2970 = vpop.f32.mrf.mxu0
        %2971 = vmatprep.mubr.f32.mxu0 %v679
        %2972 = vmatmul.mubr.f32.gmra.mxu0 %v678
        %v2973 = vpop.f32.mrf.mxu0
        %v2974 = vadd.f32 %v2669, %v2973
        %v2975 = vpop.f32.mrf.mxu0
        %2976 = vmatprep.mubr.f32.mxu0 %v685
        %2977 = vmatmul.mubr.f32.gmra.mxu0 %v684
        %v2978 = vpop.f32.mrf.mxu0
        %v2979 = vadd.f32 %v2674, %v2978
        %v2980 = vpop.f32.mrf.mxu0
        %2981 = vmatprep.mubr.f32.mxu0 %v691
        %2982 = vmatmul.mubr.f32.gmra.mxu0 %v690
        %v2983 = vpop.f32.mrf.mxu0
        %v2984 = vadd.f32 %v2679, %v2983
        %v2985 = vpop.f32.mrf.mxu0
        %2986 = vmatprep.mubr.f32.mxu0 %v697
        %2987 = vmatmul.mubr.f32.gmra.mxu0 %v696
        %v2988 = vpop.f32.mrf.mxu0
        %v2989 = vadd.f32 %v2684, %v2988
        %v2990 = vpop.f32.mrf.mxu0
        %2991 = vmatprep.mubr.f32.mxu0 %v703
        %2992 = vmatmul.mubr.f32.gmra.mxu0 %v702
        %v2993 = vpop.f32.mrf.mxu0
        %v2994 = vadd.f32 %v2689, %v2993
        %v2995 = vpop.f32.mrf.mxu0
        %2996 = vmatprep.mubr.f32.mxu0 %v709
        %2997 = vmatmul.mubr.f32.gmra.mxu0 %v708
        %v2998 = vpop.f32.mrf.mxu0
        %v2999 = vadd.f32 %v2694, %v2998
        %v3000 = vpop.f32.mrf.mxu0
        %3001 = vmatprep.mubr.f32.mxu0 %v715
        %3002 = vmatmul.mubr.f32.gmra.mxu0 %v714
        %v3003 = vpop.f32.mrf.mxu0
        %v3004 = vadd.f32 %v2699, %v3003
        %v3005 = vpop.f32.mrf.mxu0
        %3006 = vmatprep.mubr.f32.mxu0 %v721
        %3007 = vmatmul.mubr.f32.gmra.mxu0 %v720
        %v3008 = vpop.f32.mrf.mxu0
        %v3009 = vadd.f32 %v2704, %v3008
        %v3010 = vpop.f32.mrf.mxu0
        %3011 = vmatprep.mubr.f32.mxu0 %v727
        %3012 = vmatmul.mubr.f32.gmra.mxu0 %v726
        %v3013 = vpop.f32.mrf.mxu0
        %v3014 = vadd.f32 %v2709, %v3013
        %v3015 = vpop.f32.mrf.mxu0
        %3016 = vmatprep.mubr.f32.mxu0 %v733
        %3017 = vmatmul.mubr.f32.gmra.mxu0 %v732
        %v3018 = vpop.f32.mrf.mxu0
        %v3019 = vadd.f32 %v2714, %v3018
        %v3020 = vpop.f32.mrf.mxu0
        %3021 = vmatprep.mubr.f32.mxu0 %v739
        %3022 = vmatmul.mubr.f32.gmra.mxu0 %v738
        %v3023 = vpop.f32.mrf.mxu0
        %v3024 = vadd.f32 %v2719, %v3023
        %v3025 = vpop.f32.mrf.mxu0
        %3026 = vmatprep.mubr.f32.mxu0 %v745
        %3027 = vmatmul.mubr.f32.gmra.mxu0 %v744
        %v3028 = vpop.f32.mrf.mxu0
        %v3029 = vadd.f32 %v2724, %v3028
        %v3030 = vpop.f32.mrf.mxu0
        %3031 = vmatprep.mubr.f32.mxu0 %v751
        %3032 = vmatmul.mubr.f32.gmra.mxu0 %v750
        %v3033 = vpop.f32.mrf.mxu0
        %v3034 = vadd.f32 %v2729, %v3033
        %v3035 = vpop.f32.mrf.mxu0
        %3036 = vmatprep.mubr.f32.mxu0 %v757
        %3037 = vmatmul.mubr.f32.gmra.mxu0 %v756
        %v3038 = vpop.f32.mrf.mxu0
        %v3039 = vadd.f32 %v2734, %v3038
        %v3040 = vpop.f32.mrf.mxu0
        %3041 = vmatprep.mubr.f32.mxu0 %v763
        %3042 = vmatmul.mubr.f32.gmra.mxu0 %v762
        %v3043 = vpop.f32.mrf.mxu0
        %v3044 = vadd.f32 %v2739, %v3043
        %v3045 = vpop.f32.mrf.mxu0
        %3046 = vmatprep.mubr.f32.mxu0 %v769
        %3047 = vmatmul.mubr.f32.gmra.mxu0 %v768
        %v3048 = vpop.f32.mrf.mxu0
        %v3049 = vadd.f32 %v2744, %v3048
        %v3050 = vpop.f32.mrf.mxu0
        %3051 = vmatprep.mubr.f32.mxu0 %v775
        %3052 = vmatmul.mubr.f32.gmra.mxu0 %v774
        %v3053 = vpop.f32.mrf.mxu0
        %v3054 = vadd.f32 %v2749, %v3053
        %v3055 = vpop.f32.mrf.mxu0
        %3056 = vmatprep.mubr.f32.mxu0 %v781
        %3057 = vmatmul.mubr.f32.gmra.mxu0 %v780
        %v3058 = vpop.f32.mrf.mxu0
        %v3059 = vadd.f32 %v2754, %v3058
        %v3060 = vpop.f32.mrf.mxu0
        %3061 = vmatprep.mubr.f32.mxu0 %v787
        %3062 = vmatmul.mubr.f32.gmra.mxu0 %v786
        %v3063 = vpop.f32.mrf.mxu0
        %v3064 = vadd.f32 %v2759, %v3063
        %v3065 = vpop.f32.mrf.mxu0
        %3066 = vmatprep.mubr.f32.mxu0 %v793
        %3067 = vmatmul.mubr.f32.gmra.mxu0 %v792
        %v3068 = vpop.f32.mrf.mxu0
        %v3069 = vadd.f32 %v2764, %v3068
        %v3070 = vpop.f32.mrf.mxu0
        %3071 = vmatprep.mubr.f32.mxu0 %v799
        %3072 = vmatmul.mubr.f32.gmra.mxu0 %v798
        %v3073 = vpop.f32.mrf.mxu0
        %v3074 = vadd.f32 %v2769, %v3073
        %v3075 = vpop.f32.mrf.mxu0
        %3076 = vmatprep.mubr.f32.mxu0 %v805
        %3077 = vmatmul.mubr.f32.gmra.mxu0 %v804
        %v3078 = vpop.f32.mrf.mxu0
        %v3079 = vadd.f32 %v2774, %v3078
        %v3080 = vpop.f32.mrf.mxu0
        %3081 = vmatprep.mubr.f32.mxu0 %v811
        %3082 = vmatmul.mubr.f32.gmra.mxu0 %v810
        %v3083 = vpop.f32.mrf.mxu0
        %v3084 = vadd.f32 %v2779, %v3083
        %v3085 = vpop.f32.mrf.mxu0
        %3086 = vmatprep.mubr.f32.mxu0 %v817
        %3087 = vmatmul.mubr.f32.gmra.mxu0 %v816
        %v3088 = vpop.f32.mrf.mxu0
        %v3089 = vadd.f32 %v2784, %v3088
        %v3090 = vpop.f32.mrf.mxu0
        %3091 = vmatprep.mubr.f32.mxu0 %v823
        %3092 = vmatmul.mubr.f32.gmra.mxu0 %v822
        %v3093 = vpop.f32.mrf.mxu0
        %v3094 = vadd.f32 %v2789, %v3093
        %v3095 = vpop.f32.mrf.mxu0
        %3096 = vmatprep.mubr.f32.mxu0 %v829
        %3097 = vmatmul.mubr.f32.gmra.mxu0 %v828
        %v3098 = vpop.f32.mrf.mxu0
        %v3099 = vadd.f32 %v2794, %v3098
        %v3100 = vpop.f32.mrf.mxu0
        %3101 = vmatprep.mubr.f32.mxu0 %v835
        %3102 = vmatmul.mubr.f32.gmra.mxu0 %v834
        %v3103 = vpop.f32.mrf.mxu0
        %v3104 = vadd.f32 %v2799, %v3103
        %v3105 = vpop.f32.mrf.mxu0
        %3106 = vmatprep.mubr.f32.mxu0 %v841
        %3107 = vmatmul.mubr.f32.gmra.mxu0 %v840
        %v3108 = vpop.f32.mrf.mxu0
        %v3109 = vadd.f32 %v2804, %v3108
        %v3110 = vpop.f32.mrf.mxu0
        %3111 = vmatprep.mubr.f32.mxu0 %v847
        %3112 = vmatmul.mubr.f32.gmra.mxu0 %v846
        %v3113 = vpop.f32.mrf.mxu0
        %v3114 = vadd.f32 %v2809, %v3113
        %v3115 = vpop.f32.mrf.mxu0
        %3116 = vmatprep.mubr.f32.mxu0 %v853
        %3117 = vmatmul.mubr.f32.gmra.mxu0 %v852
        %v3118 = vpop.f32.mrf.mxu0
        %v3119 = vadd.f32 %v2814, %v3118
        %v3120 = vpop.f32.mrf.mxu0
        %3121 = vmatprep.mubr.f32.mxu0 %v859
        %3122 = vmatmul.mubr.f32.gmra.mxu0 %v858
        %v3123 = vpop.f32.mrf.mxu0
        %v3124 = vadd.f32 %v2819, %v3123
        %v3125 = vpop.f32.mrf.mxu0
        %3126 = vmatprep.mubr.f32.mxu0 %v865
        %3127 = vmatmul.mubr.f32.gmra.mxu0 %v864
        %v3128 = vpop.f32.mrf.mxu0
        %v3129 = vadd.f32 %v2824, %v3128
        %v3130 = vpop.f32.mrf.mxu0
        %3131 = vmatprep.mubr.f32.mxu0 %v871
        %3132 = vmatmul.mubr.f32.gmra.mxu0 %v870
        %v3133 = vpop.f32.mrf.mxu0
        %v3134 = vadd.f32 %v2829, %v3133
        %v3135 = vpop.f32.mrf.mxu0
        %3136 = vmatprep.mubr.f32.mxu0 %v877
        %3137 = vmatmul.mubr.f32.gmra.mxu0 %v876
        %v3138 = vpop.f32.mrf.mxu0
        %v3139 = vadd.f32 %v2834, %v3138
        %v3140 = vpop.f32.mrf.mxu0
        %3141 = vmatprep.mubr.f32.mxu0 %v883
        %3142 = vmatmul.mubr.f32.gmra.mxu0 %v882
        %v3143 = vpop.f32.mrf.mxu0
        %v3144 = vadd.f32 %v2839, %v3143
        %v3145 = vpop.f32.mrf.mxu0
        %3146 = vmatprep.mubr.f32.mxu0 %v889
        %3147 = vmatmul.mubr.f32.gmra.mxu0 %v888
        %v3148 = vpop.f32.mrf.mxu0
        %v3149 = vadd.f32 %v2844, %v3148
        %v3150 = vpop.f32.mrf.mxu0
        %3151 = vdwg.mxu0
        %v3152 = vadd.f32 %v458, %v1951
        %v3153 = vadd.f32 %v459, %v1953
        %v3154 = vadd.f32 %v460, %v2914
        %v3155 = vadd.f32 %v461, %v1957
        %v3156 = vadd.f32 %v462, %v1959
        %v3157 = vadd.f32 %v463, %v2919
        %v3158 = vadd.f32 %v464, %v1963
        %v3159 = vadd.f32 %v465, %v1965
        %v3160 = vadd.f32 %v466, %v2924
        %v3161 = vadd.f32 %v467, %v1969
        %v3162 = vadd.f32 %v468, %v1971
        %v3163 = vadd.f32 %v469, %v2929
        %v3164 = vadd.f32 %v470, %v1975
        %v3165 = vadd.f32 %v471, %v1977
        %v3166 = vadd.f32 %v472, %v2934
        %v3167 = vadd.f32 %v473, %v1981
        %v3168 = vadd.f32 %v474, %v1983
        %v3169 = vadd.f32 %v475, %v2939
        %v3170 = vadd.f32 %v476, %v1987
        %v3171 = vadd.f32 %v477, %v1989
        %v3172 = vadd.f32 %v478, %v2944
        %v3173 = vadd.f32 %v479, %v1993
        %v3174 = vadd.f32 %v480, %v1995
        %v3175 = vadd.f32 %v481, %v2949
        %v3176 = vadd.f32 %v482, %v1999
        %v3177 = vadd.f32 %v483, %v2001
        %v3178 = vadd.f32 %v484, %v2954
        %v3179 = vadd.f32 %v485, %v2005
        %v3180 = vadd.f32 %v486, %v2007
        %v3181 = vadd.f32 %v487, %v2959
        %v3182 = vadd.f32 %v488, %v2011
        %v3183 = vadd.f32 %v489, %v2013
        %v3184 = vadd.f32 %v490, %v2964
        %v3185 = vadd.f32 %v491, %v2017
        %v3186 = vadd.f32 %v492, %v2019
        %v3187 = vadd.f32 %v493, %v2969
        %v3188 = vadd.f32 %v494, %v2023
        %v3189 = vadd.f32 %v495, %v2025
        %v3190 = vadd.f32 %v496, %v2974
        %v3191 = vadd.f32 %v497, %v2029
        %v3192 = vadd.f32 %v498, %v2031
        %v3193 = vadd.f32 %v499, %v2979
        %v3194 = vadd.f32 %v500, %v2035
        %v3195 = vadd.f32 %v501, %v2037
        %v3196 = vadd.f32 %v502, %v2984
        %v3197 = vadd.f32 %v503, %v2041
        %v3198 = vadd.f32 %v504, %v2043
        %v3199 = vadd.f32 %v505, %v2989
        %v3200 = vadd.f32 %v506, %v2047
        %v3201 = vadd.f32 %v507, %v2049
        %v3202 = vadd.f32 %v508, %v2994
        %v3203 = vadd.f32 %v509, %v2053
        %v3204 = vadd.f32 %v510, %v2055
        %v3205 = vadd.f32 %v511, %v2999
        %v3206 = vadd.f32 %v512, %v2059
        %v3207 = vadd.f32 %v513, %v2061
        %v3208 = vadd.f32 %v514, %v3004
        %v3209 = vadd.f32 %v515, %v2065
        %v3210 = vadd.f32 %v516, %v2067
        %v3211 = vadd.f32 %v517, %v3009
        %v3212 = vadd.f32 %v518, %v2071
        %v3213 = vadd.f32 %v519, %v2073
        %v3214 = vadd.f32 %v520, %v3014
        %v3215 = vadd.f32 %v521, %v2077
        %v3216 = vadd.f32 %v522, %v2079
        %v3217 = vadd.f32 %v523, %v3019
        %v3218 = vadd.f32 %v524, %v2083
        %v3219 = vadd.f32 %v525, %v2085
        %v3220 = vadd.f32 %v526, %v3024
        %v3221 = vadd.f32 %v527, %v2089
        %v3222 = vadd.f32 %v528, %v2091
        %v3223 = vadd.f32 %v529, %v3029
        %v3224 = vadd.f32 %v530, %v2095
        %v3225 = vadd.f32 %v531, %v2097
        %v3226 = vadd.f32 %v532, %v3034
        %v3227 = vadd.f32 %v533, %v2101
        %v3228 = vadd.f32 %v534, %v2103
        %v3229 = vadd.f32 %v535, %v3039
        %v3230 = vadd.f32 %v536, %v2107
        %v3231 = vadd.f32 %v537, %v2109
        %v3232 = vadd.f32 %v538, %v3044
        %v3233 = vadd.f32 %v539, %v2113
        %v3234 = vadd.f32 %v540, %v2115
        %v3235 = vadd.f32 %v541, %v3049
        %v3236 = vadd.f32 %v542, %v2119
        %v3237 = vadd.f32 %v543, %v2121
        %v3238 = vadd.f32 %v544, %v3054
        %v3239 = vadd.f32 %v545, %v2125
        %v3240 = vadd.f32 %v546, %v2127
        %v3241 = vadd.f32 %v547, %v3059
        %v3242 = vadd.f32 %v548, %v2131
        %v3243 = vadd.f32 %v549, %v2133
        %v3244 = vadd.f32 %v550, %v3064
        %v3245 = vadd.f32 %v551, %v2137
        %v3246 = vadd.f32 %v552, %v2139
        %v3247 = vadd.f32 %v553, %v3069
        %v3248 = vadd.f32 %v554, %v2143
        %v3249 = vadd.f32 %v555, %v2145
        %v3250 = vadd.f32 %v556, %v3074
        %v3251 = vadd.f32 %v557, %v2149
        %v3252 = vadd.f32 %v558, %v2151
        %v3253 = vadd.f32 %v559, %v3079
        %v3254 = vadd.f32 %v560, %v2155
        %v3255 = vadd.f32 %v561, %v2157
        %v3256 = vadd.f32 %v562, %v3084
        %v3257 = vadd.f32 %v563, %v2161
        %v3258 = vadd.f32 %v564, %v2163
        %v3259 = vadd.f32 %v565, %v3089
        %v3260 = vadd.f32 %v566, %v2167
        %v3261 = vadd.f32 %v567, %v2169
        %v3262 = vadd.f32 %v568, %v3094
        %v3263 = vadd.f32 %v569, %v2173
        %v3264 = vadd.f32 %v570, %v2175
        %v3265 = vadd.f32 %v571, %v3099
        %v3266 = vadd.f32 %v572, %v2179
        %v3267 = vadd.f32 %v573, %v2181
        %v3268 = vadd.f32 %v574, %v3104
        %v3269 = vadd.f32 %v575, %v2185
        %v3270 = vadd.f32 %v576, %v2187
        %v3271 = vadd.f32 %v577, %v3109
        %v3272 = vadd.f32 %v578, %v2191
        %v3273 = vadd.f32 %v579, %v2193
        %v3274 = vadd.f32 %v580, %v3114
        %v3275 = vadd.f32 %v581, %v2197
        %v3276 = vadd.f32 %v582, %v2199
        %v3277 = vadd.f32 %v583, %v3119
        %v3278 = vadd.f32 %v584, %v2203
        %v3279 = vadd.f32 %v585, %v2205
        %v3280 = vadd.f32 %v586, %v3124
        %v3281 = vadd.f32 %v587, %v2209
        %v3282 = vadd.f32 %v588, %v2211
        %v3283 = vadd.f32 %v589, %v3129
        %v3284 = vadd.f32 %v590, %v2215
        %v3285 = vadd.f32 %v591, %v2217
        %v3286 = vadd.f32 %v592, %v3134
        %v3287 = vadd.f32 %v593, %v2221
        %v3288 = vadd.f32 %v594, %v2223
        %v3289 = vadd.f32 %v595, %v3139
        %v3290 = vadd.f32 %v596, %v2227
        %v3291 = vadd.f32 %v597, %v2229
        %v3292 = vadd.f32 %v598, %v3144
        %v3293 = vadd.f32 %v599, %v2233
        %v3294 = vadd.f32 %v600, %v2235
        %v3295 = vadd.f32 %v601, %v3149
        %3296 = vst [vmem:[%s301] sm:$0xff] %v3152
        %3297 = vst [vmem:[%s301 + $0x8] sm:$0xff] %v3153
        %3298 = vst [vmem:[%s301 + $0x10] sm:$0xff] %v3154
        %3299 = vst [vmem:[%s301 + $0x18] sm:$0xff] %v3155
        %3300 = vst [vmem:[%s301 + $0x20] sm:$0xff] %v3156
        %3301 = vst [vmem:[%s301 + $0x28] sm:$0xff] %v3157
        %3302 = vst [vmem:[%s301 + $0x30] sm:$0xff] %v3158
        %3303 = vst [vmem:[%s301 + $0x38] sm:$0xff] %v3159
        %3304 = vst [vmem:[%s301 + $0x40] sm:$0xff] %v3160
        %3305 = vst [vmem:[%s301 + $0x48] sm:$0xff] %v3161
        %3306 = vst [vmem:[%s301 + $0x50] sm:$0xff] %v3162
        %3307 = vst [vmem:[%s301 + $0x58] sm:$0xff] %v3163
        %3308 = vst [vmem:[%s301 + $0x60] sm:$0xff] %v3164
        %3309 = vst [vmem:[%s301 + $0x68] sm:$0xff] %v3165
        %3310 = vst [vmem:[%s301 + $0x70] sm:$0xff] %v3166
        %3311 = vst [vmem:[%s301 + $0x78] sm:$0xff] %v3167
        %3312 = vst [vmem:[%s301 + $0x80] sm:$0xff] %v3168
        %3313 = vst [vmem:[%s301 + $0x88] sm:$0xff] %v3169
        %3314 = vst [vmem:[%s301 + $0x90] sm:$0xff] %v3170
        %3315 = vst [vmem:[%s301 + $0x98] sm:$0xff] %v3171
        %3316 = vst [vmem:[%s301 + $0xa0] sm:$0xff] %v3172
        %3317 = vst [vmem:[%s301 + $0xa8] sm:$0xff] %v3173
        %3318 = vst [vmem:[%s301 + $0xb0] sm:$0xff] %v3174
        %3319 = vst [vmem:[%s301 + $0xb8] sm:$0xff] %v3175
        %3320 = vst [vmem:[%s301 + $0xc0] sm:$0xff] %v3176
        %3321 = vst [vmem:[%s301 + $0xc8] sm:$0xff] %v3177
        %3322 = vst [vmem:[%s301 + $0xd0] sm:$0xff] %v3178
        %3323 = vst [vmem:[%s301 + $0xd8] sm:$0xff] %v3179
        %3324 = vst [vmem:[%s301 + $0xe0] sm:$0xff] %v3180
        %3325 = vst [vmem:[%s301 + $0xe8] sm:$0xff] %v3181
        %3326 = vst [vmem:[%s301 + $0xf0] sm:$0xff] %v3182
        %3327 = vst [vmem:[%s301 + $0xf8] sm:$0xff] %v3183
        %3328 = vst [vmem:[%s301 + $0x100] sm:$0xff] %v3184
        %3329 = vst [vmem:[%s301 + $0x108] sm:$0xff] %v3185
        %3330 = vst [vmem:[%s301 + $0x110] sm:$0xff] %v3186
        %3331 = vst [vmem:[%s301 + $0x118] sm:$0xff] %v3187
        %3332 = vst [vmem:[%s301 + $0x120] sm:$0xff] %v3188
        %3333 = vst [vmem:[%s301 + $0x128] sm:$0xff] %v3189
        %3334 = vst [vmem:[%s301 + $0x130] sm:$0xff] %v3190
        %3335 = vst [vmem:[%s301 + $0x138] sm:$0xff] %v3191
        %3336 = vst [vmem:[%s301 + $0x140] sm:$0xff] %v3192
        %3337 = vst [vmem:[%s301 + $0x148] sm:$0xff] %v3193
        %3338 = vst [vmem:[%s301 + $0x150] sm:$0xff] %v3194
        %3339 = vst [vmem:[%s301 + $0x158] sm:$0xff] %v3195
        %3340 = vst [vmem:[%s301 + $0x160] sm:$0xff] %v3196
        %3341 = vst [vmem:[%s301 + $0x168] sm:$0xff] %v3197
        %3342 = vst [vmem:[%s301 + $0x170] sm:$0xff] %v3198
        %3343 = vst [vmem:[%s301 + $0x178] sm:$0xff] %v3199
        %3344 = vst [vmem:[%s301 + $0x180] sm:$0xff] %v3200
        %3345 = vst [vmem:[%s301 + $0x188] sm:$0xff] %v3201
        %3346 = vst [vmem:[%s301 + $0x190] sm:$0xff] %v3202
        %3347 = vst [vmem:[%s301 + $0x198] sm:$0xff] %v3203
        %3348 = vst [vmem:[%s301 + $0x1a0] sm:$0xff] %v3204
        %3349 = vst [vmem:[%s301 + $0x1a8] sm:$0xff] %v3205
        %3350 = vst [vmem:[%s301 + $0x1b0] sm:$0xff] %v3206
        %3351 = vst [vmem:[%s301 + $0x1b8] sm:$0xff] %v3207
        %3352 = vst [vmem:[%s301 + $0x1c0] sm:$0xff] %v3208
        %3353 = vst [vmem:[%s301 + $0x1c8] sm:$0xff] %v3209
        %3354 = vst [vmem:[%s301 + $0x1d0] sm:$0xff] %v3210
        %3355 = vst [vmem:[%s301 + $0x1d8] sm:$0xff] %v3211
        %3356 = vst [vmem:[%s301 + $0x1e0] sm:$0xff] %v3212
        %3357 = vst [vmem:[%s301 + $0x1e8] sm:$0xff] %v3213
        %3358 = vst [vmem:[%s301 + $0x1f0] sm:$0xff] %v3214
        %3359 = vst [vmem:[%s301 + $0x1f8] sm:$0xff] %v3215
        %3360 = vst [vmem:[%s301 + $0x200] sm:$0xff] %v3216
        %3361 = vst [vmem:[%s301 + $0x208] sm:$0xff] %v3217
        %3362 = vst [vmem:[%s301 + $0x210] sm:$0xff] %v3218
        %3363 = vst [vmem:[%s301 + $0x218] sm:$0xff] %v3219
        %3364 = vst [vmem:[%s301 + $0x220] sm:$0xff] %v3220
        %3365 = vst [vmem:[%s301 + $0x228] sm:$0xff] %v3221
        %3366 = vst [vmem:[%s301 + $0x230] sm:$0xff] %v3222
        %3367 = vst [vmem:[%s301 + $0x238] sm:$0xff] %v3223
        %3368 = vst [vmem:[%s301 + $0x240] sm:$0xff] %v3224
        %3369 = vst [vmem:[%s301 + $0x248] sm:$0xff] %v3225
        %3370 = vst [vmem:[%s301 + $0x250] sm:$0xff] %v3226
        %3371 = vst [vmem:[%s301 + $0x258] sm:$0xff] %v3227
        %3372 = vst [vmem:[%s301 + $0x260] sm:$0xff] %v3228
        %3373 = vst [vmem:[%s301 + $0x268] sm:$0xff] %v3229
        %3374 = vst [vmem:[%s301 + $0x270] sm:$0xff] %v3230
        %3375 = vst [vmem:[%s301 + $0x278] sm:$0xff] %v3231
        %3376 = vst [vmem:[%s301 + $0x280] sm:$0xff] %v3232
        %3377 = vst [vmem:[%s301 + $0x288] sm:$0xff] %v3233
        %3378 = vst [vmem:[%s301 + $0x290] sm:$0xff] %v3234
        %3379 = vst [vmem:[%s301 + $0x298] sm:$0xff] %v3235
        %3380 = vst [vmem:[%s301 + $0x2a0] sm:$0xff] %v3236
        %3381 = vst [vmem:[%s301 + $0x2a8] sm:$0xff] %v3237
        %3382 = vst [vmem:[%s301 + $0x2b0] sm:$0xff] %v3238
        %3383 = vst [vmem:[%s301 + $0x2b8] sm:$0xff] %v3239
        %3384 = vst [vmem:[%s301 + $0x2c0] sm:$0xff] %v3240
        %3385 = vst [vmem:[%s301 + $0x2c8] sm:$0xff] %v3241
        %3386 = vst [vmem:[%s301 + $0x2d0] sm:$0xff] %v3242
        %3387 = vst [vmem:[%s301 + $0x2d8] sm:$0xff] %v3243
        %3388 = vst [vmem:[%s301 + $0x2e0] sm:$0xff] %v3244
        %3389 = vst [vmem:[%s301 + $0x2e8] sm:$0xff] %v3245
        %3390 = vst [vmem:[%s301 + $0x2f0] sm:$0xff] %v3246
        %3391 = vst [vmem:[%s301 + $0x2f8] sm:$0xff] %v3247
        %3392 = vst [vmem:[%s301 + $0x300] sm:$0xff] %v3248
        %3393 = vst [vmem:[%s301 + $0x308] sm:$0xff] %v3249
        %3394 = vst [vmem:[%s301 + $0x310] sm:$0xff] %v3250
        %3395 = vst [vmem:[%s301 + $0x318] sm:$0xff] %v3251
        %3396 = vst [vmem:[%s301 + $0x320] sm:$0xff] %v3252
        %3397 = vst [vmem:[%s301 + $0x328] sm:$0xff] %v3253
        %3398 = vst [vmem:[%s301 + $0x330] sm:$0xff] %v3254
        %3399 = vst [vmem:[%s301 + $0x338] sm:$0xff] %v3255
        %3400 = vst [vmem:[%s301 + $0x340] sm:$0xff] %v3256
        %3401 = vst [vmem:[%s301 + $0x348] sm:$0xff] %v3257
        %3402 = vst [vmem:[%s301 + $0x350] sm:$0xff] %v3258
        %3403 = vst [vmem:[%s301 + $0x358] sm:$0xff] %v3259
        %3404 = vst [vmem:[%s301 + $0x360] sm:$0xff] %v3260
        %3405 = vst [vmem:[%s301 + $0x368] sm:$0xff] %v3261
        %3406 = vst [vmem:[%s301 + $0x370] sm:$0xff] %v3262
        %3407 = vst [vmem:[%s301 + $0x378] sm:$0xff] %v3263
        %3408 = vst [vmem:[%s301 + $0x380] sm:$0xff] %v3264
        %3409 = vst [vmem:[%s301 + $0x388] sm:$0xff] %v3265
        %3410 = vst [vmem:[%s301 + $0x390] sm:$0xff] %v3266
        %3411 = vst [vmem:[%s301 + $0x398] sm:$0xff] %v3267
        %3412 = vst [vmem:[%s301 + $0x3a0] sm:$0xff] %v3268
        %3413 = vst [vmem:[%s301 + $0x3a8] sm:$0xff] %v3269
        %3414 = vst [vmem:[%s301 + $0x3b0] sm:$0xff] %v3270
        %3415 = vst [vmem:[%s301 + $0x3b8] sm:$0xff] %v3271
        %3416 = vst [vmem:[%s301 + $0x3c0] sm:$0xff] %v3272
        %3417 = vst [vmem:[%s301 + $0x3c8] sm:$0xff] %v3273
        %3418 = vst [vmem:[%s301 + $0x3d0] sm:$0xff] %v3274
        %3419 = vst [vmem:[%s301 + $0x3d8] sm:$0xff] %v3275
        %3420 = vst [vmem:[%s301 + $0x3e0] sm:$0xff] %v3276
        %3421 = vst [vmem:[%s301 + $0x3e8] sm:$0xff] %v3277
        %3422 = vst [vmem:[%s301 + $0x3f0] sm:$0xff] %v3278
        %3423 = vst [vmem:[%s301 + $0x3f8] sm:$0xff] %v3279
        %3424 = vst [vmem:[%s301 + $0x400] sm:$0xff] %v3280
        %3425 = vst [vmem:[%s301 + $0x408] sm:$0xff] %v3281
        %3426 = vst [vmem:[%s301 + $0x410] sm:$0xff] %v3282
        %3427 = vst [vmem:[%s301 + $0x418] sm:$0xff] %v3283
        %3428 = vst [vmem:[%s301 + $0x420] sm:$0xff] %v3284
        %3429 = vst [vmem:[%s301 + $0x428] sm:$0xff] %v3285
        %3430 = vst [vmem:[%s301 + $0x430] sm:$0xff] %v3286
        %3431 = vst [vmem:[%s301 + $0x438] sm:$0xff] %v3287
        %3432 = vst [vmem:[%s301 + $0x440] sm:$0xff] %v3288
        %3433 = vst [vmem:[%s301 + $0x448] sm:$0xff] %v3289
        %3434 = vst [vmem:[%s301 + $0x450] sm:$0xff] %v3290
        %3435 = vst [vmem:[%s301 + $0x458] sm:$0xff] %v3291
        %3436 = vst [vmem:[%s301 + $0x460] sm:$0xff] %v3292
        %3437 = vst [vmem:[%s301 + $0x468] sm:$0xff] %v3293
        %3438 = vst [vmem:[%s301 + $0x470] sm:$0xff] %v3294
        %3439 = vst [vmem:[%s301 + $0x478] sm:$0xff] %v3295
        // Predicated region
        $region49: #{tpu_custom_call.1} parent=31 // pred_check
          %p3440 = pneg %p310
        $region50: #{tpu_custom_call.1} parent=31 // pred_check_branch
          %3442 = sbr.rel (%p3440) target = $region52
        $region51: #{tpu_custom_call.1} parent=31 // pred_region
          %v3443 = vld [vmem:[%s251] sm:$0xff]
          %v3444 = vld [vmem:[%s251 + $0x8] sm:$0xff]
          %v3445 = vld [vmem:[%s251 + $0x10] sm:$0xff]
          %v3446 = vld [vmem:[%s251 + $0x18] sm:$0xff]
          %v3447 = vld [vmem:[%s251 + $0x20] sm:$0xff]
          %v3448 = vld [vmem:[%s251 + $0x28] sm:$0xff]
          %v3449 = vld [vmem:[%s251 + $0x30] sm:$0xff]
          %v3450 = vld [vmem:[%s251 + $0x38] sm:$0xff]
          %v3451 = vld [vmem:[%s251 + $0x40] sm:$0xff]
          %v3452 = vld [vmem:[%s251 + $0x48] sm:$0xff]
          %v3453 = vld [vmem:[%s251 + $0x50] sm:$0xff]
          %v3454 = vld [vmem:[%s251 + $0x58] sm:$0xff]
          %v3455 = vld [vmem:[%s251 + $0x60] sm:$0xff]
          %v3456 = vld [vmem:[%s251 + $0x68] sm:$0xff]
          %v3457 = vld [vmem:[%s251 + $0x70] sm:$0xff]
          %v3458 = vld [vmem:[%s251 + $0x78] sm:$0xff]
          %v3459 = vld [vmem:[%s251 + $0x80] sm:$0xff]
          %v3460 = vld [vmem:[%s251 + $0x88] sm:$0xff]
          %v3461 = vld [vmem:[%s251 + $0x90] sm:$0xff]
          %v3462 = vld [vmem:[%s251 + $0x98] sm:$0xff]
          %v3463 = vld [vmem:[%s251 + $0xa0] sm:$0xff]
          %v3464 = vld [vmem:[%s251 + $0xa8] sm:$0xff]
          %v3465 = vld [vmem:[%s251 + $0xb0] sm:$0xff]
          %v3466 = vld [vmem:[%s251 + $0xb8] sm:$0xff]
          %v3467 = vld [vmem:[%s251 + $0xc0] sm:$0xff]
          %v3468 = vld [vmem:[%s251 + $0xc8] sm:$0xff]
          %v3469 = vld [vmem:[%s251 + $0xd0] sm:$0xff]
          %v3470 = vld [vmem:[%s251 + $0xd8] sm:$0xff]
          %v3471 = vld [vmem:[%s251 + $0xe0] sm:$0xff]
          %v3472 = vld [vmem:[%s251 + $0xe8] sm:$0xff]
          %v3473 = vld [vmem:[%s251 + $0xf0] sm:$0xff]
          %v3474 = vld [vmem:[%s251 + $0xf8] sm:$0xff]
          %v3475 = vld [vmem:[%s251 + $0x100] sm:$0xff]
          %v3476 = vld [vmem:[%s251 + $0x108] sm:$0xff]
          %v3477 = vld [vmem:[%s251 + $0x110] sm:$0xff]
          %v3478 = vld [vmem:[%s251 + $0x118] sm:$0xff]
          %v3479 = vld [vmem:[%s251 + $0x120] sm:$0xff]
          %v3480 = vld [vmem:[%s251 + $0x128] sm:$0xff]
          %v3481 = vld [vmem:[%s251 + $0x130] sm:$0xff]
          %v3482 = vld [vmem:[%s251 + $0x138] sm:$0xff]
          %v3483 = vld [vmem:[%s251 + $0x140] sm:$0xff]
          %v3484 = vld [vmem:[%s251 + $0x148] sm:$0xff]
          %v3485 = vld [vmem:[%s251 + $0x150] sm:$0xff]
          %v3486 = vld [vmem:[%s251 + $0x158] sm:$0xff]
          %v3487 = vld [vmem:[%s251 + $0x160] sm:$0xff]
          %v3488 = vld [vmem:[%s251 + $0x168] sm:$0xff]
          %v3489 = vld [vmem:[%s251 + $0x170] sm:$0xff]
          %v3490 = vld [vmem:[%s251 + $0x178] sm:$0xff]
          %v3491 = vld [vmem:[%s251 + $0x180] sm:$0xff]
          %v3492 = vld [vmem:[%s251 + $0x188] sm:$0xff]
          %v3493 = vld [vmem:[%s251 + $0x190] sm:$0xff]
          %v3494 = vld [vmem:[%s251 + $0x198] sm:$0xff]
          %v3495 = vld [vmem:[%s251 + $0x1a0] sm:$0xff]
          %v3496 = vld [vmem:[%s251 + $0x1a8] sm:$0xff]
          %v3497 = vld [vmem:[%s251 + $0x1b0] sm:$0xff]
          %v3498 = vld [vmem:[%s251 + $0x1b8] sm:$0xff]
          %v3499 = vld [vmem:[%s251 + $0x1c0] sm:$0xff]
          %v3500 = vld [vmem:[%s251 + $0x1c8] sm:$0xff]
          %v3501 = vld [vmem:[%s251 + $0x1d0] sm:$0xff]
          %v3502 = vld [vmem:[%s251 + $0x1d8] sm:$0xff]
          %v3503 = vld [vmem:[%s251 + $0x1e0] sm:$0xff]
          %v3504 = vld [vmem:[%s251 + $0x1e8] sm:$0xff]
          %v3505 = vld [vmem:[%s251 + $0x1f0] sm:$0xff]
          %v3506 = vld [vmem:[%s251 + $0x1f8] sm:$0xff]
          %v3507 = vld [vmem:[%s251 + $0x200] sm:$0xff]
          %v3508 = vld [vmem:[%s251 + $0x208] sm:$0xff]
          %v3509 = vld [vmem:[%s251 + $0x210] sm:$0xff]
          %v3510 = vld [vmem:[%s251 + $0x218] sm:$0xff]
          %v3511 = vld [vmem:[%s251 + $0x220] sm:$0xff]
          %v3512 = vld [vmem:[%s251 + $0x228] sm:$0xff]
          %v3513 = vld [vmem:[%s251 + $0x230] sm:$0xff]
          %v3514 = vld [vmem:[%s251 + $0x238] sm:$0xff]
          %v3515 = vld [vmem:[%s251 + $0x240] sm:$0xff]
          %v3516 = vld [vmem:[%s251 + $0x248] sm:$0xff]
          %v3517 = vld [vmem:[%s251 + $0x250] sm:$0xff]
          %v3518 = vld [vmem:[%s251 + $0x258] sm:$0xff]
          %v3519 = vld [vmem:[%s251 + $0x260] sm:$0xff]
          %v3520 = vld [vmem:[%s251 + $0x268] sm:$0xff]
          %v3521 = vld [vmem:[%s251 + $0x270] sm:$0xff]
          %v3522 = vld [vmem:[%s251 + $0x278] sm:$0xff]
          %v3523 = vld [vmem:[%s251 + $0x280] sm:$0xff]
          %v3524 = vld [vmem:[%s251 + $0x288] sm:$0xff]
          %v3525 = vld [vmem:[%s251 + $0x290] sm:$0xff]
          %v3526 = vld [vmem:[%s251 + $0x298] sm:$0xff]
          %v3527 = vld [vmem:[%s251 + $0x2a0] sm:$0xff]
          %v3528 = vld [vmem:[%s251 + $0x2a8] sm:$0xff]
          %v3529 = vld [vmem:[%s251 + $0x2b0] sm:$0xff]
          %v3530 = vld [vmem:[%s251 + $0x2b8] sm:$0xff]
          %v3531 = vld [vmem:[%s251 + $0x2c0] sm:$0xff]
          %v3532 = vld [vmem:[%s251 + $0x2c8] sm:$0xff]
          %v3533 = vld [vmem:[%s251 + $0x2d0] sm:$0xff]
          %v3534 = vld [vmem:[%s251 + $0x2d8] sm:$0xff]
          %v3535 = vld [vmem:[%s251 + $0x2e0] sm:$0xff]
          %v3536 = vld [vmem:[%s251 + $0x2e8] sm:$0xff]
          %v3537 = vld [vmem:[%s251 + $0x2f0] sm:$0xff]
          %v3538 = vld [vmem:[%s251 + $0x2f8] sm:$0xff]
          %v3539 = vld [vmem:[%s251 + $0x300] sm:$0xff]
          %v3540 = vld [vmem:[%s251 + $0x308] sm:$0xff]
          %v3541 = vld [vmem:[%s251 + $0x310] sm:$0xff]
          %v3542 = vld [vmem:[%s251 + $0x318] sm:$0xff]
          %v3543 = vld [vmem:[%s251 + $0x320] sm:$0xff]
          %v3544 = vld [vmem:[%s251 + $0x328] sm:$0xff]
          %v3545 = vld [vmem:[%s251 + $0x330] sm:$0xff]
          %v3546 = vld [vmem:[%s251 + $0x338] sm:$0xff]
          %v3547 = vld [vmem:[%s251 + $0x340] sm:$0xff]
          %v3548 = vld [vmem:[%s251 + $0x348] sm:$0xff]
          %v3549 = vld [vmem:[%s251 + $0x350] sm:$0xff]
          %v3550 = vld [vmem:[%s251 + $0x358] sm:$0xff]
          %v3551 = vld [vmem:[%s251 + $0x360] sm:$0xff]
          %v3552 = vld [vmem:[%s251 + $0x368] sm:$0xff]
          %v3553 = vld [vmem:[%s251 + $0x370] sm:$0xff]
          %v3554 = vld [vmem:[%s251 + $0x378] sm:$0xff]
          %v3555 = vld [vmem:[%s251 + $0x380] sm:$0xff]
          %v3556 = vld [vmem:[%s251 + $0x388] sm:$0xff]
          %v3557 = vld [vmem:[%s251 + $0x390] sm:$0xff]
          %v3558 = vld [vmem:[%s251 + $0x398] sm:$0xff]
          %v3559 = vld [vmem:[%s251 + $0x3a0] sm:$0xff]
          %v3560 = vld [vmem:[%s251 + $0x3a8] sm:$0xff]
          %v3561 = vld [vmem:[%s251 + $0x3b0] sm:$0xff]
          %v3562 = vld [vmem:[%s251 + $0x3b8] sm:$0xff]
          %v3563 = vld [vmem:[%s251 + $0x3c0] sm:$0xff]
          %v3564 = vld [vmem:[%s251 + $0x3c8] sm:$0xff]
          %v3565 = vld [vmem:[%s251 + $0x3d0] sm:$0xff]
          %v3566 = vld [vmem:[%s251 + $0x3d8] sm:$0xff]
          %v3567 = vld [vmem:[%s251 + $0x3e0] sm:$0xff]
          %v3568 = vld [vmem:[%s251 + $0x3e8] sm:$0xff]
          %v3569 = vld [vmem:[%s251 + $0x3f0] sm:$0xff]
          %v3570 = vld [vmem:[%s251 + $0x3f8] sm:$0xff]
          %v3571 = vld [vmem:[%s251 + $0x400] sm:$0xff]
          %v3572 = vld [vmem:[%s251 + $0x408] sm:$0xff]
          %v3573 = vld [vmem:[%s251 + $0x410] sm:$0xff]
          %v3574 = vld [vmem:[%s251 + $0x418] sm:$0xff]
          %v3575 = vld [vmem:[%s251 + $0x420] sm:$0xff]
          %v3576 = vld [vmem:[%s251 + $0x428] sm:$0xff]
          %v3577 = vld [vmem:[%s251 + $0x430] sm:$0xff]
          %v3578 = vld [vmem:[%s251 + $0x438] sm:$0xff]
          %v3579 = vld [vmem:[%s251 + $0x440] sm:$0xff]
          %v3580 = vld [vmem:[%s251 + $0x448] sm:$0xff]
          %v3581 = vld [vmem:[%s251 + $0x450] sm:$0xff]
          %v3582 = vld [vmem:[%s251 + $0x458] sm:$0xff]
          %v3583 = vld [vmem:[%s251 + $0x460] sm:$0xff]
          %v3584 = vld [vmem:[%s251 + $0x468] sm:$0xff]
          %v3585 = vld [vmem:[%s251 + $0x470] sm:$0xff]
          %v3586 = vld [vmem:[%s251 + $0x478] sm:$0xff]
          %v3587 = vmul.f32 %v3443, 0.5
          %v3588 = vmul.f32 %v3444, 0.5
          %v3589 = vmul.f32 %v3445, 0.5
          %v3590 = vmul.f32 %v3446, 0.5
          %v3591 = vmul.f32 %v3447, 0.5
          %v3592 = vmul.f32 %v3448, 0.5
          %v3593 = vmul.f32 %v3449, 0.5
          %v3594 = vmul.f32 %v3450, 0.5
          %v3595 = vmul.f32 %v3451, 0.5
          %v3596 = vmul.f32 %v3452, 0.5
          %v3597 = vmul.f32 %v3453, 0.5
          %v3598 = vmul.f32 %v3454, 0.5
          %v3599 = vmul.f32 %v3455, 0.5
          %v3600 = vmul.f32 %v3456, 0.5
          %v3601 = vmul.f32 %v3457, 0.5
          %v3602 = vmul.f32 %v3458, 0.5
          %v3603 = vmul.f32 %v3459, 0.5
          %v3604 = vmul.f32 %v3460, 0.5
          %v3605 = vmul.f32 %v3461, 0.5
          %v3606 = vmul.f32 %v3462, 0.5
          %v3607 = vmul.f32 %v3463, 0.5
          %v3608 = vmul.f32 %v3464, 0.5
          %v3609 = vmul.f32 %v3465, 0.5
          %v3610 = vmul.f32 %v3466, 0.5
          %v3611 = vmul.f32 %v3467, 0.5
          %v3612 = vmul.f32 %v3468, 0.5
          %v3613 = vmul.f32 %v3469, 0.5
          %v3614 = vmul.f32 %v3470, 0.5
          %v3615 = vmul.f32 %v3471, 0.5
          %v3616 = vmul.f32 %v3472, 0.5
          %v3617 = vmul.f32 %v3473, 0.5
          %v3618 = vmul.f32 %v3474, 0.5
          %v3619 = vmul.f32 %v3475, 0.5
          %v3620 = vmul.f32 %v3476, 0.5
          %v3621 = vmul.f32 %v3477, 0.5
          %v3622 = vmul.f32 %v3478, 0.5
          %v3623 = vmul.f32 %v3479, 0.5
          %v3624 = vmul.f32 %v3480, 0.5
          %v3625 = vmul.f32 %v3481, 0.5
          %v3626 = vmul.f32 %v3482, 0.5
          %v3627 = vmul.f32 %v3483, 0.5
          %v3628 = vmul.f32 %v3484, 0.5
          %v3629 = vmul.f32 %v3485, 0.5
          %v3630 = vmul.f32 %v3486, 0.5
          %v3631 = vmul.f32 %v3487, 0.5
          %v3632 = vmul.f32 %v3488, 0.5
          %v3633 = vmul.f32 %v3489, 0.5
          %v3634 = vmul.f32 %v3490, 0.5
          %v3635 = vmul.f32 %v3491, 0.5
          %v3636 = vmul.f32 %v3492, 0.5
          %v3637 = vmul.f32 %v3493, 0.5
          %v3638 = vmul.f32 %v3494, 0.5
          %v3639 = vmul.f32 %v3495, 0.5
          %v3640 = vmul.f32 %v3496, 0.5
          %v3641 = vmul.f32 %v3497, 0.5
          %v3642 = vmul.f32 %v3498, 0.5
          %v3643 = vmul.f32 %v3499, 0.5
          %v3644 = vmul.f32 %v3500, 0.5
          %v3645 = vmul.f32 %v3501, 0.5
          %v3646 = vmul.f32 %v3502, 0.5
          %v3647 = vmul.f32 %v3503, 0.5
          %v3648 = vmul.f32 %v3504, 0.5
          %v3649 = vmul.f32 %v3505, 0.5
          %v3650 = vmul.f32 %v3506, 0.5
          %v3651 = vmul.f32 %v3507, 0.5
          %v3652 = vmul.f32 %v3508, 0.5
          %v3653 = vmul.f32 %v3509, 0.5
          %v3654 = vmul.f32 %v3510, 0.5
          %v3655 = vmul.f32 %v3511, 0.5
          %v3656 = vmul.f32 %v3512, 0.5
          %v3657 = vmul.f32 %v3513, 0.5
          %v3658 = vmul.f32 %v3514, 0.5
          %v3659 = vmul.f32 %v3515, 0.5
          %v3660 = vmul.f32 %v3516, 0.5
          %v3661 = vmul.f32 %v3517, 0.5
          %v3662 = vmul.f32 %v3518, 0.5
          %v3663 = vmul.f32 %v3519, 0.5
          %v3664 = vmul.f32 %v3520, 0.5
          %v3665 = vmul.f32 %v3521, 0.5
          %v3666 = vmul.f32 %v3522, 0.5
          %v3667 = vmul.f32 %v3523, 0.5
          %v3668 = vmul.f32 %v3524, 0.5
          %v3669 = vmul.f32 %v3525, 0.5
          %v3670 = vmul.f32 %v3526, 0.5
          %v3671 = vmul.f32 %v3527, 0.5
          %v3672 = vmul.f32 %v3528, 0.5
          %v3673 = vmul.f32 %v3529, 0.5
          %v3674 = vmul.f32 %v3530, 0.5
          %v3675 = vmul.f32 %v3531, 0.5
          %v3676 = vmul.f32 %v3532, 0.5
          %v3677 = vmul.f32 %v3533, 0.5
          %v3678 = vmul.f32 %v3534, 0.5
          %v3679 = vmul.f32 %v3535, 0.5
          %v3680 = vmul.f32 %v3536, 0.5
          %v3681 = vmul.f32 %v3537, 0.5
          %v3682 = vmul.f32 %v3538, 0.5
          %v3683 = vmul.f32 %v3539, 0.5
          %v3684 = vmul.f32 %v3540, 0.5
          %v3685 = vmul.f32 %v3541, 0.5
          %v3686 = vmul.f32 %v3542, 0.5
          %v3687 = vmul.f32 %v3543, 0.5
          %v3688 = vmul.f32 %v3544, 0.5
          %v3689 = vmul.f32 %v3545, 0.5
          %v3690 = vmul.f32 %v3546, 0.5
          %v3691 = vmul.f32 %v3547, 0.5
          %v3692 = vmul.f32 %v3548, 0.5
          %v3693 = vmul.f32 %v3549, 0.5
          %v3694 = vmul.f32 %v3550, 0.5
          %v3695 = vmul.f32 %v3551, 0.5
          %v3696 = vmul.f32 %v3552, 0.5
          %v3697 = vmul.f32 %v3553, 0.5
          %v3698 = vmul.f32 %v3554, 0.5
          %v3699 = vmul.f32 %v3555, 0.5
          %v3700 = vmul.f32 %v3556, 0.5
          %v3701 = vmul.f32 %v3557, 0.5
          %v3702 = vmul.f32 %v3558, 0.5
          %v3703 = vmul.f32 %v3559, 0.5
          %v3704 = vmul.f32 %v3560, 0.5
          %v3705 = vmul.f32 %v3561, 0.5
          %v3706 = vmul.f32 %v3562, 0.5
          %v3707 = vmul.f32 %v3563, 0.5
          %v3708 = vmul.f32 %v3564, 0.5
          %v3709 = vmul.f32 %v3565, 0.5
          %v3710 = vmul.f32 %v3566, 0.5
          %v3711 = vmul.f32 %v3567, 0.5
          %v3712 = vmul.f32 %v3568, 0.5
          %v3713 = vmul.f32 %v3569, 0.5
          %v3714 = vmul.f32 %v3570, 0.5
          %v3715 = vmul.f32 %v3571, 0.5
          %v3716 = vmul.f32 %v3572, 0.5
          %v3717 = vmul.f32 %v3573, 0.5
          %v3718 = vmul.f32 %v3574, 0.5
          %v3719 = vmul.f32 %v3575, 0.5
          %v3720 = vmul.f32 %v3576, 0.5
          %v3721 = vmul.f32 %v3577, 0.5
          %v3722 = vmul.f32 %v3578, 0.5
          %v3723 = vmul.f32 %v3579, 0.5
          %v3724 = vmul.f32 %v3580, 0.5
          %v3725 = vmul.f32 %v3581, 0.5
          %v3726 = vmul.f32 %v3582, 0.5
          %v3727 = vmul.f32 %v3583, 0.5
          %v3728 = vmul.f32 %v3584, 0.5
          %v3729 = vmul.f32 %v3585, 0.5
          %v3730 = vmul.f32 %v3586, 0.5
          %v3731 = vld [vmem:[%s301] sm:$0xff]
          %v3732 = vld [vmem:[%s301 + $0x8] sm:$0xff]
          %v3733 = vld [vmem:[%s301 + $0x10] sm:$0xff]
          %v3734 = vld [vmem:[%s301 + $0x18] sm:$0xff]
          %v3735 = vld [vmem:[%s301 + $0x20] sm:$0xff]
          %v3736 = vld [vmem:[%s301 + $0x28] sm:$0xff]
          %v3737 = vld [vmem:[%s301 + $0x30] sm:$0xff]
          %v3738 = vld [vmem:[%s301 + $0x38] sm:$0xff]
          %v3739 = vld [vmem:[%s301 + $0x40] sm:$0xff]
          %v3740 = vld [vmem:[%s301 + $0x48] sm:$0xff]
          %v3741 = vld [vmem:[%s301 + $0x50] sm:$0xff]
          %v3742 = vld [vmem:[%s301 + $0x58] sm:$0xff]
          %v3743 = vld [vmem:[%s301 + $0x60] sm:$0xff]
          %v3744 = vld [vmem:[%s301 + $0x68] sm:$0xff]
          %v3745 = vld [vmem:[%s301 + $0x70] sm:$0xff]
          %v3746 = vld [vmem:[%s301 + $0x78] sm:$0xff]
          %v3747 = vld [vmem:[%s301 + $0x80] sm:$0xff]
          %v3748 = vld [vmem:[%s301 + $0x88] sm:$0xff]
          %v3749 = vld [vmem:[%s301 + $0x90] sm:$0xff]
          %v3750 = vld [vmem:[%s301 + $0x98] sm:$0xff]
          %v3751 = vld [vmem:[%s301 + $0xa0] sm:$0xff]
          %v3752 = vld [vmem:[%s301 + $0xa8] sm:$0xff]
          %v3753 = vld [vmem:[%s301 + $0xb0] sm:$0xff]
          %v3754 = vld [vmem:[%s301 + $0xb8] sm:$0xff]
          %v3755 = vld [vmem:[%s301 + $0xc0] sm:$0xff]
          %v3756 = vld [vmem:[%s301 + $0xc8] sm:$0xff]
          %v3757 = vld [vmem:[%s301 + $0xd0] sm:$0xff]
          %v3758 = vld [vmem:[%s301 + $0xd8] sm:$0xff]
          %v3759 = vld [vmem:[%s301 + $0xe0] sm:$0xff]
          %v3760 = vld [vmem:[%s301 + $0xe8] sm:$0xff]
          %v3761 = vld [vmem:[%s301 + $0xf0] sm:$0xff]
          %v3762 = vld [vmem:[%s301 + $0xf8] sm:$0xff]
          %v3763 = vld [vmem:[%s301 + $0x100] sm:$0xff]
          %v3764 = vld [vmem:[%s301 + $0x108] sm:$0xff]
          %v3765 = vld [vmem:[%s301 + $0x110] sm:$0xff]
          %v3766 = vld [vmem:[%s301 + $0x118] sm:$0xff]
          %v3767 = vld [vmem:[%s301 + $0x120] sm:$0xff]
          %v3768 = vld [vmem:[%s301 + $0x128] sm:$0xff]
          %v3769 = vld [vmem:[%s301 + $0x130] sm:$0xff]
          %v3770 = vld [vmem:[%s301 + $0x138] sm:$0xff]
          %v3771 = vld [vmem:[%s301 + $0x140] sm:$0xff]
          %v3772 = vld [vmem:[%s301 + $0x148] sm:$0xff]
          %v3773 = vld [vmem:[%s301 + $0x150] sm:$0xff]
          %v3774 = vld [vmem:[%s301 + $0x158] sm:$0xff]
          %v3775 = vld [vmem:[%s301 + $0x160] sm:$0xff]
          %v3776 = vld [vmem:[%s301 + $0x168] sm:$0xff]
          %v3777 = vld [vmem:[%s301 + $0x170] sm:$0xff]
          %v3778 = vld [vmem:[%s301 + $0x178] sm:$0xff]
          %v3779 = vld [vmem:[%s301 + $0x180] sm:$0xff]
          %v3780 = vld [vmem:[%s301 + $0x188] sm:$0xff]
          %v3781 = vld [vmem:[%s301 + $0x190] sm:$0xff]
          %v3782 = vld [vmem:[%s301 + $0x198] sm:$0xff]
          %v3783 = vld [vmem:[%s301 + $0x1a0] sm:$0xff]
          %v3784 = vld [vmem:[%s301 + $0x1a8] sm:$0xff]
          %v3785 = vld [vmem:[%s301 + $0x1b0] sm:$0xff]
          %v3786 = vld [vmem:[%s301 + $0x1b8] sm:$0xff]
          %v3787 = vld [vmem:[%s301 + $0x1c0] sm:$0xff]
          %v3788 = vld [vmem:[%s301 + $0x1c8] sm:$0xff]
          %v3789 = vld [vmem:[%s301 + $0x1d0] sm:$0xff]
          %v3790 = vld [vmem:[%s301 + $0x1d8] sm:$0xff]
          %v3791 = vld [vmem:[%s301 + $0x1e0] sm:$0xff]
          %v3792 = vld [vmem:[%s301 + $0x1e8] sm:$0xff]
          %v3793 = vld [vmem:[%s301 + $0x1f0] sm:$0xff]
          %v3794 = vld [vmem:[%s301 + $0x1f8] sm:$0xff]
          %v3795 = vld [vmem:[%s301 + $0x200] sm:$0xff]
          %v3796 = vld [vmem:[%s301 + $0x208] sm:$0xff]
          %v3797 = vld [vmem:[%s301 + $0x210] sm:$0xff]
          %v3798 = vld [vmem:[%s301 + $0x218] sm:$0xff]
          %v3799 = vld [vmem:[%s301 + $0x220] sm:$0xff]
          %v3800 = vld [vmem:[%s301 + $0x228] sm:$0xff]
          %v3801 = vld [vmem:[%s301 + $0x230] sm:$0xff]
          %v3802 = vld [vmem:[%s301 + $0x238] sm:$0xff]
          %v3803 = vld [vmem:[%s301 + $0x240] sm:$0xff]
          %v3804 = vld [vmem:[%s301 + $0x248] sm:$0xff]
          %v3805 = vld [vmem:[%s301 + $0x250] sm:$0xff]
          %v3806 = vld [vmem:[%s301 + $0x258] sm:$0xff]
          %v3807 = vld [vmem:[%s301 + $0x260] sm:$0xff]
          %v3808 = vld [vmem:[%s301 + $0x268] sm:$0xff]
          %v3809 = vld [vmem:[%s301 + $0x270] sm:$0xff]
          %v3810 = vld [vmem:[%s301 + $0x278] sm:$0xff]
          %v3811 = vld [vmem:[%s301 + $0x280] sm:$0xff]
          %v3812 = vld [vmem:[%s301 + $0x288] sm:$0xff]
          %v3813 = vld [vmem:[%s301 + $0x290] sm:$0xff]
          %v3814 = vld [vmem:[%s301 + $0x298] sm:$0xff]
          %v3815 = vld [vmem:[%s301 + $0x2a0] sm:$0xff]
          %v3816 = vld [vmem:[%s301 + $0x2a8] sm:$0xff]
          %v3817 = vld [vmem:[%s301 + $0x2b0] sm:$0xff]
          %v3818 = vld [vmem:[%s301 + $0x2b8] sm:$0xff]
          %v3819 = vld [vmem:[%s301 + $0x2c0] sm:$0xff]
          %v3820 = vld [vmem:[%s301 + $0x2c8] sm:$0xff]
          %v3821 = vld [vmem:[%s301 + $0x2d0] sm:$0xff]
          %v3822 = vld [vmem:[%s301 + $0x2d8] sm:$0xff]
          %v3823 = vld [vmem:[%s301 + $0x2e0] sm:$0xff]
          %v3824 = vld [vmem:[%s301 + $0x2e8] sm:$0xff]
          %v3825 = vld [vmem:[%s301 + $0x2f0] sm:$0xff]
          %v3826 = vld [vmem:[%s301 + $0x2f8] sm:$0xff]
          %v3827 = vld [vmem:[%s301 + $0x300] sm:$0xff]
          %v3828 = vld [vmem:[%s301 + $0x308] sm:$0xff]
          %v3829 = vld [vmem:[%s301 + $0x310] sm:$0xff]
          %v3830 = vld [vmem:[%s301 + $0x318] sm:$0xff]
          %v3831 = vld [vmem:[%s301 + $0x320] sm:$0xff]
          %v3832 = vld [vmem:[%s301 + $0x328] sm:$0xff]
          %v3833 = vld [vmem:[%s301 + $0x330] sm:$0xff]
          %v3834 = vld [vmem:[%s301 + $0x338] sm:$0xff]
          %v3835 = vld [vmem:[%s301 + $0x340] sm:$0xff]
          %v3836 = vld [vmem:[%s301 + $0x348] sm:$0xff]
          %v3837 = vld [vmem:[%s301 + $0x350] sm:$0xff]
          %v3838 = vld [vmem:[%s301 + $0x358] sm:$0xff]
          %v3839 = vld [vmem:[%s301 + $0x360] sm:$0xff]
          %v3840 = vld [vmem:[%s301 + $0x368] sm:$0xff]
          %v3841 = vld [vmem:[%s301 + $0x370] sm:$0xff]
          %v3842 = vld [vmem:[%s301 + $0x378] sm:$0xff]
          %v3843 = vld [vmem:[%s301 + $0x380] sm:$0xff]
          %v3844 = vld [vmem:[%s301 + $0x388] sm:$0xff]
          %v3845 = vld [vmem:[%s301 + $0x390] sm:$0xff]
          %v3846 = vld [vmem:[%s301 + $0x398] sm:$0xff]
          %v3847 = vld [vmem:[%s301 + $0x3a0] sm:$0xff]
          %v3848 = vld [vmem:[%s301 + $0x3a8] sm:$0xff]
          %v3849 = vld [vmem:[%s301 + $0x3b0] sm:$0xff]
          %v3850 = vld [vmem:[%s301 + $0x3b8] sm:$0xff]
          %v3851 = vld [vmem:[%s301 + $0x3c0] sm:$0xff]
          %v3852 = vld [vmem:[%s301 + $0x3c8] sm:$0xff]
          %v3853 = vld [vmem:[%s301 + $0x3d0] sm:$0xff]
          %v3854 = vld [vmem:[%s301 + $0x3d8] sm:$0xff]
          %v3855 = vld [vmem:[%s301 + $0x3e0] sm:$0xff]
          %v3856 = vld [vmem:[%s301 + $0x3e8] sm:$0xff]
          %v3857 = vld [vmem:[%s301 + $0x3f0] sm:$0xff]
          %v3858 = vld [vmem:[%s301 + $0x3f8] sm:$0xff]
          %v3859 = vld [vmem:[%s301 + $0x400] sm:$0xff]
          %v3860 = vld [vmem:[%s301 + $0x408] sm:$0xff]
          %v3861 = vld [vmem:[%s301 + $0x410] sm:$0xff]
          %v3862 = vld [vmem:[%s301 + $0x418] sm:$0xff]
          %v3863 = vld [vmem:[%s301 + $0x420] sm:$0xff]
          %v3864 = vld [vmem:[%s301 + $0x428] sm:$0xff]
          %v3865 = vld [vmem:[%s301 + $0x430] sm:$0xff]
          %v3866 = vld [vmem:[%s301 + $0x438] sm:$0xff]
          %v3867 = vld [vmem:[%s301 + $0x440] sm:$0xff]
          %v3868 = vld [vmem:[%s301 + $0x448] sm:$0xff]
          %v3869 = vld [vmem:[%s301 + $0x450] sm:$0xff]
          %v3870 = vld [vmem:[%s301 + $0x458] sm:$0xff]
          %v3871 = vld [vmem:[%s301 + $0x460] sm:$0xff]
          %v3872 = vld [vmem:[%s301 + $0x468] sm:$0xff]
          %v3873 = vld [vmem:[%s301 + $0x470] sm:$0xff]
          %v3874 = vld [vmem:[%s301 + $0x478] sm:$0xff]
          %v3875 = vmul.f32 %v3731, 2.0
          %v3876 = vmul.f32 %v3732, 2.0
          %v3877 = vmul.f32 %v3733, 2.0
          %v3878 = vmul.f32 %v3734, 2.0
          %v3879 = vmul.f32 %v3735, 2.0
          %v3880 = vmul.f32 %v3736, 2.0
          %v3881 = vmul.f32 %v3737, 2.0
          %v3882 = vmul.f32 %v3738, 2.0
          %v3883 = vmul.f32 %v3739, 2.0
          %v3884 = vmul.f32 %v3740, 2.0
          %v3885 = vmul.f32 %v3741, 2.0
          %v3886 = vmul.f32 %v3742, 2.0
          %v3887 = vmul.f32 %v3743, 2.0
          %v3888 = vmul.f32 %v3744, 2.0
          %v3889 = vmul.f32 %v3745, 2.0
          %v3890 = vmul.f32 %v3746, 2.0
          %v3891 = vmul.f32 %v3747, 2.0
          %v3892 = vmul.f32 %v3748, 2.0
          %v3893 = vmul.f32 %v3749, 2.0
          %v3894 = vmul.f32 %v3750, 2.0
          %v3895 = vmul.f32 %v3751, 2.0
          %v3896 = vmul.f32 %v3752, 2.0
          %v3897 = vmul.f32 %v3753, 2.0
          %v3898 = vmul.f32 %v3754, 2.0
          %v3899 = vmul.f32 %v3755, 2.0
          %v3900 = vmul.f32 %v3756, 2.0
          %v3901 = vmul.f32 %v3757, 2.0
          %v3902 = vmul.f32 %v3758, 2.0
          %v3903 = vmul.f32 %v3759, 2.0
          %v3904 = vmul.f32 %v3760, 2.0
          %v3905 = vmul.f32 %v3761, 2.0
          %v3906 = vmul.f32 %v3762, 2.0
          %v3907 = vmul.f32 %v3763, 2.0
          %v3908 = vmul.f32 %v3764, 2.0
          %v3909 = vmul.f32 %v3765, 2.0
          %v3910 = vmul.f32 %v3766, 2.0
          %v3911 = vmul.f32 %v3767, 2.0
          %v3912 = vmul.f32 %v3768, 2.0
          %v3913 = vmul.f32 %v3769, 2.0
          %v3914 = vmul.f32 %v3770, 2.0
          %v3915 = vmul.f32 %v3771, 2.0
          %v3916 = vmul.f32 %v3772, 2.0
          %v3917 = vmul.f32 %v3773, 2.0
          %v3918 = vmul.f32 %v3774, 2.0
          %v3919 = vmul.f32 %v3775, 2.0
          %v3920 = vmul.f32 %v3776, 2.0
          %v3921 = vmul.f32 %v3777, 2.0
          %v3922 = vmul.f32 %v3778, 2.0
          %v3923 = vmul.f32 %v3779, 2.0
          %v3924 = vmul.f32 %v3780, 2.0
          %v3925 = vmul.f32 %v3781, 2.0
          %v3926 = vmul.f32 %v3782, 2.0
          %v3927 = vmul.f32 %v3783, 2.0
          %v3928 = vmul.f32 %v3784, 2.0
          %v3929 = vmul.f32 %v3785, 2.0
          %v3930 = vmul.f32 %v3786, 2.0
          %v3931 = vmul.f32 %v3787, 2.0
          %v3932 = vmul.f32 %v3788, 2.0
          %v3933 = vmul.f32 %v3789, 2.0
          %v3934 = vmul.f32 %v3790, 2.0
          %v3935 = vmul.f32 %v3791, 2.0
          %v3936 = vmul.f32 %v3792, 2.0
          %v3937 = vmul.f32 %v3793, 2.0
          %v3938 = vmul.f32 %v3794, 2.0
          %v3939 = vmul.f32 %v3795, 2.0
          %v3940 = vmul.f32 %v3796, 2.0
          %v3941 = vmul.f32 %v3797, 2.0
          %v3942 = vmul.f32 %v3798, 2.0
          %v3943 = vmul.f32 %v3799, 2.0
          %v3944 = vmul.f32 %v3800, 2.0
          %v3945 = vmul.f32 %v3801, 2.0
          %v3946 = vmul.f32 %v3802, 2.0
          %v3947 = vmul.f32 %v3803, 2.0
          %v3948 = vmul.f32 %v3804, 2.0
          %v3949 = vmul.f32 %v3805, 2.0
          %v3950 = vmul.f32 %v3806, 2.0
          %v3951 = vmul.f32 %v3807, 2.0
          %v3952 = vmul.f32 %v3808, 2.0
          %v3953 = vmul.f32 %v3809, 2.0
          %v3954 = vmul.f32 %v3810, 2.0
          %v3955 = vmul.f32 %v3811, 2.0
          %v3956 = vmul.f32 %v3812, 2.0
          %v3957 = vmul.f32 %v3813, 2.0
          %v3958 = vmul.f32 %v3814, 2.0
          %v3959 = vmul.f32 %v3815, 2.0
          %v3960 = vmul.f32 %v3816, 2.0
          %v3961 = vmul.f32 %v3817, 2.0
          %v3962 = vmul.f32 %v3818, 2.0
          %v3963 = vmul.f32 %v3819, 2.0
          %v3964 = vmul.f32 %v3820, 2.0
          %v3965 = vmul.f32 %v3821, 2.0
          %v3966 = vmul.f32 %v3822, 2.0
          %v3967 = vmul.f32 %v3823, 2.0
          %v3968 = vmul.f32 %v3824, 2.0
          %v3969 = vmul.f32 %v3825, 2.0
          %v3970 = vmul.f32 %v3826, 2.0
          %v3971 = vmul.f32 %v3827, 2.0
          %v3972 = vmul.f32 %v3828, 2.0
          %v3973 = vmul.f32 %v3829, 2.0
          %v3974 = vmul.f32 %v3830, 2.0
          %v3975 = vmul.f32 %v3831, 2.0
          %v3976 = vmul.f32 %v3832, 2.0
          %v3977 = vmul.f32 %v3833, 2.0
          %v3978 = vmul.f32 %v3834, 2.0
          %v3979 = vmul.f32 %v3835, 2.0
          %v3980 = vmul.f32 %v3836, 2.0
          %v3981 = vmul.f32 %v3837, 2.0
          %v3982 = vmul.f32 %v3838, 2.0
          %v3983 = vmul.f32 %v3839, 2.0
          %v3984 = vmul.f32 %v3840, 2.0
          %v3985 = vmul.f32 %v3841, 2.0
          %v3986 = vmul.f32 %v3842, 2.0
          %v3987 = vmul.f32 %v3843, 2.0
          %v3988 = vmul.f32 %v3844, 2.0
          %v3989 = vmul.f32 %v3845, 2.0
          %v3990 = vmul.f32 %v3846, 2.0
          %v3991 = vmul.f32 %v3847, 2.0
          %v3992 = vmul.f32 %v3848, 2.0
          %v3993 = vmul.f32 %v3849, 2.0
          %v3994 = vmul.f32 %v3850, 2.0
          %v3995 = vmul.f32 %v3851, 2.0
          %v3996 = vmul.f32 %v3852, 2.0
          %v3997 = vmul.f32 %v3853, 2.0
          %v3998 = vmul.f32 %v3854, 2.0
          %v3999 = vmul.f32 %v3855, 2.0
          %v4000 = vmul.f32 %v3856, 2.0
          %v4001 = vmul.f32 %v3857, 2.0
          %v4002 = vmul.f32 %v3858, 2.0
          %v4003 = vmul.f32 %v3859, 2.0
          %v4004 = vmul.f32 %v3860, 2.0
          %v4005 = vmul.f32 %v3861, 2.0
          %v4006 = vmul.f32 %v3862, 2.0
          %v4007 = vmul.f32 %v3863, 2.0
          %v4008 = vmul.f32 %v3864, 2.0
          %v4009 = vmul.f32 %v3865, 2.0
          %v4010 = vmul.f32 %v3866, 2.0
          %v4011 = vmul.f32 %v3867, 2.0
          %v4012 = vmul.f32 %v3868, 2.0
          %v4013 = vmul.f32 %v3869, 2.0
          %v4014 = vmul.f32 %v3870, 2.0
          %v4015 = vmul.f32 %v3871, 2.0
          %v4016 = vmul.f32 %v3872, 2.0
          %v4017 = vmul.f32 %v3873, 2.0
          %v4018 = vmul.f32 %v3874, 2.0
          %v4019 = vadd.f32 %v3587, %v3875
          %v4020 = vadd.f32 %v3588, %v3876
          %v4021 = vadd.f32 %v3589, %v3877
          %v4022 = vadd.f32 %v3590, %v3878
          %v4023 = vadd.f32 %v3591, %v3879
          %v4024 = vadd.f32 %v3592, %v3880
          %v4025 = vadd.f32 %v3593, %v3881
          %v4026 = vadd.f32 %v3594, %v3882
          %v4027 = vadd.f32 %v3595, %v3883
          %v4028 = vadd.f32 %v3596, %v3884
          %v4029 = vadd.f32 %v3597, %v3885
          %v4030 = vadd.f32 %v3598, %v3886
          %v4031 = vadd.f32 %v3599, %v3887
          %v4032 = vadd.f32 %v3600, %v3888
          %v4033 = vadd.f32 %v3601, %v3889
          %v4034 = vadd.f32 %v3602, %v3890
          %v4035 = vadd.f32 %v3603, %v3891
          %v4036 = vadd.f32 %v3604, %v3892
          %v4037 = vadd.f32 %v3605, %v3893
          %v4038 = vadd.f32 %v3606, %v3894
          %v4039 = vadd.f32 %v3607, %v3895
          %v4040 = vadd.f32 %v3608, %v3896
          %v4041 = vadd.f32 %v3609, %v3897
          %v4042 = vadd.f32 %v3610, %v3898
          %v4043 = vadd.f32 %v3611, %v3899
          %v4044 = vadd.f32 %v3612, %v3900
          %v4045 = vadd.f32 %v3613, %v3901
          %v4046 = vadd.f32 %v3614, %v3902
          %v4047 = vadd.f32 %v3615, %v3903
          %v4048 = vadd.f32 %v3616, %v3904
          %v4049 = vadd.f32 %v3617, %v3905
          %v4050 = vadd.f32 %v3618, %v3906
          %v4051 = vadd.f32 %v3619, %v3907
          %v4052 = vadd.f32 %v3620, %v3908
          %v4053 = vadd.f32 %v3621, %v3909
          %v4054 = vadd.f32 %v3622, %v3910
          %v4055 = vadd.f32 %v3623, %v3911
          %v4056 = vadd.f32 %v3624, %v3912
          %v4057 = vadd.f32 %v3625, %v3913
          %v4058 = vadd.f32 %v3626, %v3914
          %v4059 = vadd.f32 %v3627, %v3915
          %v4060 = vadd.f32 %v3628, %v3916
          %v4061 = vadd.f32 %v3629, %v3917
          %v4062 = vadd.f32 %v3630, %v3918
          %v4063 = vadd.f32 %v3631, %v3919
          %v4064 = vadd.f32 %v3632, %v3920
          %v4065 = vadd.f32 %v3633, %v3921
          %v4066 = vadd.f32 %v3634, %v3922
          %v4067 = vadd.f32 %v3635, %v3923
          %v4068 = vadd.f32 %v3636, %v3924
          %v4069 = vadd.f32 %v3637, %v3925
          %v4070 = vadd.f32 %v3638, %v3926
          %v4071 = vadd.f32 %v3639, %v3927
          %v4072 = vadd.f32 %v3640, %v3928
          %v4073 = vadd.f32 %v3641, %v3929
          %v4074 = vadd.f32 %v3642, %v3930
          %v4075 = vadd.f32 %v3643, %v3931
          %v4076 = vadd.f32 %v3644, %v3932
          %v4077 = vadd.f32 %v3645, %v3933
          %v4078 = vadd.f32 %v3646, %v3934
          %v4079 = vadd.f32 %v3647, %v3935
          %v4080 = vadd.f32 %v3648, %v3936
          %v4081 = vadd.f32 %v3649, %v3937
          %v4082 = vadd.f32 %v3650, %v3938
          %v4083 = vadd.f32 %v3651, %v3939
          %v4084 = vadd.f32 %v3652, %v3940
          %v4085 = vadd.f32 %v3653, %v3941
          %v4086 = vadd.f32 %v3654, %v3942
          %v4087 = vadd.f32 %v3655, %v3943
          %v4088 = vadd.f32 %v3656, %v3944
          %v4089 = vadd.f32 %v3657, %v3945
          %v4090 = vadd.f32 %v3658, %v3946
          %v4091 = vadd.f32 %v3659, %v3947
          %v4092 = vadd.f32 %v3660, %v3948
          %v4093 = vadd.f32 %v3661, %v3949
          %v4094 = vadd.f32 %v3662, %v3950
          %v4095 = vadd.f32 %v3663, %v3951
          %v4096 = vadd.f32 %v3664, %v3952
          %v4097 = vadd.f32 %v3665, %v3953
          %v4098 = vadd.f32 %v3666, %v3954
          %v4099 = vadd.f32 %v3667, %v3955
          %v4100 = vadd.f32 %v3668, %v3956
          %v4101 = vadd.f32 %v3669, %v3957
          %v4102 = vadd.f32 %v3670, %v3958
          %v4103 = vadd.f32 %v3671, %v3959
          %v4104 = vadd.f32 %v3672, %v3960
          %v4105 = vadd.f32 %v3673, %v3961
          %v4106 = vadd.f32 %v3674, %v3962
          %v4107 = vadd.f32 %v3675, %v3963
          %v4108 = vadd.f32 %v3676, %v3964
          %v4109 = vadd.f32 %v3677, %v3965
          %v4110 = vadd.f32 %v3678, %v3966
          %v4111 = vadd.f32 %v3679, %v3967
          %v4112 = vadd.f32 %v3680, %v3968
          %v4113 = vadd.f32 %v3681, %v3969
          %v4114 = vadd.f32 %v3682, %v3970
          %v4115 = vadd.f32 %v3683, %v3971
          %v4116 = vadd.f32 %v3684, %v3972
          %v4117 = vadd.f32 %v3685, %v3973
          %v4118 = vadd.f32 %v3686, %v3974
          %v4119 = vadd.f32 %v3687, %v3975
          %v4120 = vadd.f32 %v3688, %v3976
          %v4121 = vadd.f32 %v3689, %v3977
          %v4122 = vadd.f32 %v3690, %v3978
          %v4123 = vadd.f32 %v3691, %v3979
          %v4124 = vadd.f32 %v3692, %v3980
          %v4125 = vadd.f32 %v3693, %v3981
          %v4126 = vadd.f32 %v3694, %v3982
          %v4127 = vadd.f32 %v3695, %v3983
          %v4128 = vadd.f32 %v3696, %v3984
          %v4129 = vadd.f32 %v3697, %v3985
          %v4130 = vadd.f32 %v3698, %v3986
          %v4131 = vadd.f32 %v3699, %v3987
          %v4132 = vadd.f32 %v3700, %v3988
          %v4133 = vadd.f32 %v3701, %v3989
          %v4134 = vadd.f32 %v3702, %v3990
          %v4135 = vadd.f32 %v3703, %v3991
          %v4136 = vadd.f32 %v3704, %v3992
          %v4137 = vadd.f32 %v3705, %v3993
          %v4138 = vadd.f32 %v3706, %v3994
          %v4139 = vadd.f32 %v3707, %v3995
          %v4140 = vadd.f32 %v3708, %v3996
          %v4141 = vadd.f32 %v3709, %v3997
          %v4142 = vadd.f32 %v3710, %v3998
          %v4143 = vadd.f32 %v3711, %v3999
          %v4144 = vadd.f32 %v3712, %v4000
          %v4145 = vadd.f32 %v3713, %v4001
          %v4146 = vadd.f32 %v3714, %v4002
          %v4147 = vadd.f32 %v3715, %v4003
          %v4148 = vadd.f32 %v3716, %v4004
          %v4149 = vadd.f32 %v3717, %v4005
          %v4150 = vadd.f32 %v3718, %v4006
          %v4151 = vadd.f32 %v3719, %v4007
          %v4152 = vadd.f32 %v3720, %v4008
          %v4153 = vadd.f32 %v3721, %v4009
          %v4154 = vadd.f32 %v3722, %v4010
          %v4155 = vadd.f32 %v3723, %v4011
          %v4156 = vadd.f32 %v3724, %v4012
          %v4157 = vadd.f32 %v3725, %v4013
          %v4158 = vadd.f32 %v3726, %v4014
          %v4159 = vadd.f32 %v3727, %v4015
          %v4160 = vadd.f32 %v3728, %v4016
          %v4161 = vadd.f32 %v3729, %v4017
          %v4162 = vadd.f32 %v3730, %v4018
          %4163 = vst [vmem:[%s301] sm:$0xff] %v4019
          %4164 = vst [vmem:[%s301 + $0x8] sm:$0xff] %v4020
          %4165 = vst [vmem:[%s301 + $0x10] sm:$0xff] %v4021
          %4166 = vst [vmem:[%s301 + $0x18] sm:$0xff] %v4022
          %4167 = vst [vmem:[%s301 + $0x20] sm:$0xff] %v4023
          %4168 = vst [vmem:[%s301 + $0x28] sm:$0xff] %v4024
          %4169 = vst [vmem:[%s301 + $0x30] sm:$0xff] %v4025
          %4170 = vst [vmem:[%s301 + $0x38] sm:$0xff] %v4026
          %4171 = vst [vmem:[%s301 + $0x40] sm:$0xff] %v4027
          %4172 = vst [vmem:[%s301 + $0x48] sm:$0xff] %v4028
          %4173 = vst [vmem:[%s301 + $0x50] sm:$0xff] %v4029
          %4174 = vst [vmem:[%s301 + $0x58] sm:$0xff] %v4030
          %4175 = vst [vmem:[%s301 + $0x60] sm:$0xff] %v4031
          %4176 = vst [vmem:[%s301 + $0x68] sm:$0xff] %v4032
          %4177 = vst [vmem:[%s301 + $0x70] sm:$0xff] %v4033
          %4178 = vst [vmem:[%s301 + $0x78] sm:$0xff] %v4034
          %4179 = vst [vmem:[%s301 + $0x80] sm:$0xff] %v4035
          %4180 = vst [vmem:[%s301 + $0x88] sm:$0xff] %v4036
          %4181 = vst [vmem:[%s301 + $0x90] sm:$0xff] %v4037
          %4182 = vst [vmem:[%s301 + $0x98] sm:$0xff] %v4038
          %4183 = vst [vmem:[%s301 + $0xa0] sm:$0xff] %v4039
          %4184 = vst [vmem:[%s301 + $0xa8] sm:$0xff] %v4040
          %4185 = vst [vmem:[%s301 + $0xb0] sm:$0xff] %v4041
          %4186 = vst [vmem:[%s301 + $0xb8] sm:$0xff] %v4042
          %4187 = vst [vmem:[%s301 + $0xc0] sm:$0xff] %v4043
          %4188 = vst [vmem:[%s301 + $0xc8] sm:$0xff] %v4044
          %4189 = vst [vmem:[%s301 + $0xd0] sm:$0xff] %v4045
          %4190 = vst [vmem:[%s301 + $0xd8] sm:$0xff] %v4046
          %4191 = vst [vmem:[%s301 + $0xe0] sm:$0xff] %v4047
          %4192 = vst [vmem:[%s301 + $0xe8] sm:$0xff] %v4048
          %4193 = vst [vmem:[%s301 + $0xf0] sm:$0xff] %v4049
          %4194 = vst [vmem:[%s301 + $0xf8] sm:$0xff] %v4050
          %4195 = vst [vmem:[%s301 + $0x100] sm:$0xff] %v4051
          %4196 = vst [vmem:[%s301 + $0x108] sm:$0xff] %v4052
          %4197 = vst [vmem:[%s301 + $0x110] sm:$0xff] %v4053
          %4198 = vst [vmem:[%s301 + $0x118] sm:$0xff] %v4054
          %4199 = vst [vmem:[%s301 + $0x120] sm:$0xff] %v4055
          %4200 = vst [vmem:[%s301 + $0x128] sm:$0xff] %v4056
          %4201 = vst [vmem:[%s301 + $0x130] sm:$0xff] %v4057
          %4202 = vst [vmem:[%s301 + $0x138] sm:$0xff] %v4058
          %4203 = vst [vmem:[%s301 + $0x140] sm:$0xff] %v4059
          %4204 = vst [vmem:[%s301 + $0x148] sm:$0xff] %v4060
          %4205 = vst [vmem:[%s301 + $0x150] sm:$0xff] %v4061
          %4206 = vst [vmem:[%s301 + $0x158] sm:$0xff] %v4062
          %4207 = vst [vmem:[%s301 + $0x160] sm:$0xff] %v4063
          %4208 = vst [vmem:[%s301 + $0x168] sm:$0xff] %v4064
          %4209 = vst [vmem:[%s301 + $0x170] sm:$0xff] %v4065
          %4210 = vst [vmem:[%s301 + $0x178] sm:$0xff] %v4066
          %4211 = vst [vmem:[%s301 + $0x180] sm:$0xff] %v4067
          %4212 = vst [vmem:[%s301 + $0x188] sm:$0xff] %v4068
          %4213 = vst [vmem:[%s301 + $0x190] sm:$0xff] %v4069
          %4214 = vst [vmem:[%s301 + $0x198] sm:$0xff] %v4070
          %4215 = vst [vmem:[%s301 + $0x1a0] sm:$0xff] %v4071
          %4216 = vst [vmem:[%s301 + $0x1a8] sm:$0xff] %v4072
          %4217 = vst [vmem:[%s301 + $0x1b0] sm:$0xff] %v4073
          %4218 = vst [vmem:[%s301 + $0x1b8] sm:$0xff] %v4074
          %4219 = vst [vmem:[%s301 + $0x1c0] sm:$0xff] %v4075
          %4220 = vst [vmem:[%s301 + $0x1c8] sm:$0xff] %v4076
          %4221 = vst [vmem:[%s301 + $0x1d0] sm:$0xff] %v4077
          %4222 = vst [vmem:[%s301 + $0x1d8] sm:$0xff] %v4078
          %4223 = vst [vmem:[%s301 + $0x1e0] sm:$0xff] %v4079
          %4224 = vst [vmem:[%s301 + $0x1e8] sm:$0xff] %v4080
          %4225 = vst [vmem:[%s301 + $0x1f0] sm:$0xff] %v4081
          %4226 = vst [vmem:[%s301 + $0x1f8] sm:$0xff] %v4082
          %4227 = vst [vmem:[%s301 + $0x200] sm:$0xff] %v4083
          %4228 = vst [vmem:[%s301 + $0x208] sm:$0xff] %v4084
          %4229 = vst [vmem:[%s301 + $0x210] sm:$0xff] %v4085
          %4230 = vst [vmem:[%s301 + $0x218] sm:$0xff] %v4086
          %4231 = vst [vmem:[%s301 + $0x220] sm:$0xff] %v4087
          %4232 = vst [vmem:[%s301 + $0x228] sm:$0xff] %v4088
          %4233 = vst [vmem:[%s301 + $0x230] sm:$0xff] %v4089
          %4234 = vst [vmem:[%s301 + $0x238] sm:$0xff] %v4090
          %4235 = vst [vmem:[%s301 + $0x240] sm:$0xff] %v4091
          %4236 = vst [vmem:[%s301 + $0x248] sm:$0xff] %v4092
          %4237 = vst [vmem:[%s301 + $0x250] sm:$0xff] %v4093
          %4238 = vst [vmem:[%s301 + $0x258] sm:$0xff] %v4094
          %4239 = vst [vmem:[%s301 + $0x260] sm:$0xff] %v4095
          %4240 = vst [vmem:[%s301 + $0x268] sm:$0xff] %v4096
          %4241 = vst [vmem:[%s301 + $0x270] sm:$0xff] %v4097
          %4242 = vst [vmem:[%s301 + $0x278] sm:$0xff] %v4098
          %4243 = vst [vmem:[%s301 + $0x280] sm:$0xff] %v4099
          %4244 = vst [vmem:[%s301 + $0x288] sm:$0xff] %v4100
          %4245 = vst [vmem:[%s301 + $0x290] sm:$0xff] %v4101
          %4246 = vst [vmem:[%s301 + $0x298] sm:$0xff] %v4102
          %4247 = vst [vmem:[%s301 + $0x2a0] sm:$0xff] %v4103
          %4248 = vst [vmem:[%s301 + $0x2a8] sm:$0xff] %v4104
          %4249 = vst [vmem:[%s301 + $0x2b0] sm:$0xff] %v4105
          %4250 = vst [vmem:[%s301 + $0x2b8] sm:$0xff] %v4106
          %4251 = vst [vmem:[%s301 + $0x2c0] sm:$0xff] %v4107
          %4252 = vst [vmem:[%s301 + $0x2c8] sm:$0xff] %v4108
          %4253 = vst [vmem:[%s301 + $0x2d0] sm:$0xff] %v4109
          %4254 = vst [vmem:[%s301 + $0x2d8] sm:$0xff] %v4110
          %4255 = vst [vmem:[%s301 + $0x2e0] sm:$0xff] %v4111
          %4256 = vst [vmem:[%s301 + $0x2e8] sm:$0xff] %v4112
          %4257 = vst [vmem:[%s301 + $0x2f0] sm:$0xff] %v4113
          %4258 = vst [vmem:[%s301 + $0x2f8] sm:$0xff] %v4114
          %4259 = vst [vmem:[%s301 + $0x300] sm:$0xff] %v4115
          %4260 = vst [vmem:[%s301 + $0x308] sm:$0xff] %v4116
          %4261 = vst [vmem:[%s301 + $0x310] sm:$0xff] %v4117
          %4262 = vst [vmem:[%s301 + $0x318] sm:$0xff] %v4118
          %4263 = vst [vmem:[%s301 + $0x320] sm:$0xff] %v4119
          %4264 = vst [vmem:[%s301 + $0x328] sm:$0xff] %v4120
          %4265 = vst [vmem:[%s301 + $0x330] sm:$0xff] %v4121
          %4266 = vst [vmem:[%s301 + $0x338] sm:$0xff] %v4122
          %4267 = vst [vmem:[%s301 + $0x340] sm:$0xff] %v4123
          %4268 = vst [vmem:[%s301 + $0x348] sm:$0xff] %v4124
          %4269 = vst [vmem:[%s301 + $0x350] sm:$0xff] %v4125
          %4270 = vst [vmem:[%s301 + $0x358] sm:$0xff] %v4126
          %4271 = vst [vmem:[%s301 + $0x360] sm:$0xff] %v4127
          %4272 = vst [vmem:[%s301 + $0x368] sm:$0xff] %v4128
          %4273 = vst [vmem:[%s301 + $0x370] sm:$0xff] %v4129
          %4274 = vst [vmem:[%s301 + $0x378] sm:$0xff] %v4130
          %4275 = vst [vmem:[%s301 + $0x380] sm:$0xff] %v4131
          %4276 = vst [vmem:[%s301 + $0x388] sm:$0xff] %v4132
          %4277 = vst [vmem:[%s301 + $0x390] sm:$0xff] %v4133
          %4278 = vst [vmem:[%s301 + $0x398] sm:$0xff] %v4134
          %4279 = vst [vmem:[%s301 + $0x3a0] sm:$0xff] %v4135
          %4280 = vst [vmem:[%s301 + $0x3a8] sm:$0xff] %v4136
          %4281 = vst [vmem:[%s301 + $0x3b0] sm:$0xff] %v4137
          %4282 = vst [vmem:[%s301 + $0x3b8] sm:$0xff] %v4138
          %4283 = vst [vmem:[%s301 + $0x3c0] sm:$0xff] %v4139
          %4284 = vst [vmem:[%s301 + $0x3c8] sm:$0xff] %v4140
          %4285 = vst [vmem:[%s301 + $0x3d0] sm:$0xff] %v4141
          %4286 = vst [vmem:[%s301 + $0x3d8] sm:$0xff] %v4142
          %4287 = vst [vmem:[%s301 + $0x3e0] sm:$0xff] %v4143
          %4288 = vst [vmem:[%s301 + $0x3e8] sm:$0xff] %v4144
          %4289 = vst [vmem:[%s301 + $0x3f0] sm:$0xff] %v4145
          %4290 = vst [vmem:[%s301 + $0x3f8] sm:$0xff] %v4146
          %4291 = vst [vmem:[%s301 + $0x400] sm:$0xff] %v4147
          %4292 = vst [vmem:[%s301 + $0x408] sm:$0xff] %v4148
          %4293 = vst [vmem:[%s301 + $0x410] sm:$0xff] %v4149
          %4294 = vst [vmem:[%s301 + $0x418] sm:$0xff] %v4150
          %4295 = vst [vmem:[%s301 + $0x420] sm:$0xff] %v4151
          %4296 = vst [vmem:[%s301 + $0x428] sm:$0xff] %v4152
          %4297 = vst [vmem:[%s301 + $0x430] sm:$0xff] %v4153
          %4298 = vst [vmem:[%s301 + $0x438] sm:$0xff] %v4154
          %4299 = vst [vmem:[%s301 + $0x440] sm:$0xff] %v4155
          %4300 = vst [vmem:[%s301 + $0x448] sm:$0xff] %v4156
          %4301 = vst [vmem:[%s301 + $0x450] sm:$0xff] %v4157
          %4302 = vst [vmem:[%s301 + $0x458] sm:$0xff] %v4158
          %4303 = vst [vmem:[%s301 + $0x460] sm:$0xff] %v4159
          %4304 = vst [vmem:[%s301 + $0x468] sm:$0xff] %v4160
          %4305 = vst [vmem:[%s301 + $0x470] sm:$0xff] %v4161
          %4306 = vst [vmem:[%s301 + $0x478] sm:$0xff] %v4162
        $region52: #{tpu_custom_call.1} parent=31 // pred_fallthru
          _
        %s4307 = sand.u32 %s136, 1
        %s4308 = scalar_lea.sflag [#allocation4], %s4307
        %s4309 = sand.u32 %s136, 1
        %s4310 = smul.addr %s4309, 1152
        %s4311 = scalar_lea.vmem [#allocation8], %s4310
        // Predicated region
        $region53: #{tpu_custom_call.1} parent=31 // pred_check
          %p4312 = pneg %p146
        $region54: #{tpu_custom_call.1} parent=31 // pred_check_branch
          %4314 = sbr.rel (%p4312) target = $region56
        $region55: #{tpu_custom_call.1} parent=31 // pred_region
          %s4315 = smul.u32 48, %s28
          %s4316 = smul.u32 3, %s29
          %s4318 = ssub.s32 18432, 18432
          %4319 = vsyncadd %s4308, %s4318
          %s4320 = smul.addr %s4315, 6
          %s4321 = sadd.s32 %s4316, %s4320
          %s4322 = smul.addr %s4321, 128
          %s4323 = scalar_lea.hbm %s3, %s4322
          %s4324 = sshll.u32 %s4311, 4
          %s4325 = int_to_ptr.vmem [resolvable:$true] %s4324
          %4330 = dma.vmem_to_hbm [thread:$0]  %s4325, 18432, %s4323, %s4308, 384, 768, 24
        $region56: #{tpu_custom_call.1} parent=31 // pred_fallthru
          _
      $region32: #{tpu_custom_call.1} parent=5 // pred_fallthru
        _
      %p4331 = scmp.le.s32.totalorder 2, %s18
      // Predicated region
      $region57: #{tpu_custom_call.1} parent=5 // pred_check
        %p4332 = pneg %p4331
      $region58: #{tpu_custom_call.1} parent=5 // pred_check_branch
        %4334 = sbr.rel (%p4332) target = $region60
      $region59: #{tpu_custom_call.1} parent=5 // pred_region
        %s4335 = ssub.s32 %s18, 2
        // Predicated region
        $region61: #{tpu_custom_call.1} parent=59 // pred_check
          %p4336 = pneg %p152
        $region62: #{tpu_custom_call.1} parent=59 // pred_check_branch
          %4338 = sbr.rel (%p4336) target = $region64
        $region63: #{tpu_custom_call.1} parent=59 // pred_region
          %s4339 = sand.u32 %s137, 1
          %s4340 = scalar_lea.sflag [#allocation4], %s4339
          %s4341 = sand.u32 %s137, 1
          %s4342 = smul.addr %s4341, 1152
          %s4343 = scalar_lea.vmem [#allocation8], %s4342
          %4344 = dma.done %s4340, 18432
        $region64: #{tpu_custom_call.1} parent=59 // pred_fallthru
          _
      $region60: #{tpu_custom_call.1} parent=5 // pred_fallthru
        _
    $region6: #{tpu_custom_call.1} parent=1 // loop_footer
      %s22 = sadd.s32 1, %s18
    $region7: #{tpu_custom_call.1} parent=1 // loop_footer_branch
      %17 = sbr.rel target = $region3
    $region8: #{tpu_custom_call.1} parent=1 // loop_exit
      _
    %4345 = vsyncpa [#allocation3], 1
    %s4346 = scalar_lea.sflag [#allocation3], 1
    %4347 = vsyncpa %s4346, 1
    %4348 = vsyncpa [#allocation6], 1
    %s4349 = scalar_lea.sflag [#allocation6], 1
    %4350 = vsyncpa %s4349, 1
    %4351 = vsyncpa [#allocation4], 1
    %s4352 = scalar_lea.sflag [#allocation4], 1
    %4353 = vsyncpa %s4352, 1

</llo_original>
